<compile_context>
chip_gen: v7x
topology: tpu7x:2x2x1
jax: 0.10.0
libtpu: 0.0.40
codegen_flags: <defaults>
</compile_context>

<pallas_src>
import math
from typing import NamedTuple

import jax
import jax.numpy as jnp
from jax.experimental import pallas as pl
from jax.experimental.pallas import tpu as pltpu


def _compute_hidden_dim(dim, hidden_dim, multiple_of, ffn_dim_multiplier):
    hidden_dim = int(2 * hidden_dim / 3)
    if ffn_dim_multiplier is not None:
        hidden_dim = int(ffn_dim_multiplier * hidden_dim)
    return multiple_of * ((hidden_dim + multiple_of - 1) // multiple_of)


def _round_up(x, m):
    return ((x + m - 1) // m) * m


def _cdiv(a, b):
    return (a + b - 1) // b


def _tpu_defaults():
    """(default token tile, VMEM limit bytes, #TensorCores) by TPU generation."""
    kind = ""
    try:
        kind = jax.devices()[0].device_kind.lower()
    except Exception:
        pass
    if "v7" in kind or "tpu7" in kind:
        # 64 MiB physical VMEM per TC -> never request all of it.
        # Roofline knee ~310 flops/byte -> tm ~512 is already MXU-bound.
        return 512, 48 * 1024 * 1024, 2
    if "v6" in kind:
        # 128 MiB VMEM, knee ~650 flops/byte -> big token tiles, big limit.
        return 1024, 100 * 1024 * 1024, 1
    if "v5p" in kind or "v4" in kind:
        return 512, 100 * 1024 * 1024, 2
    if "v5" in kind:  # v5e / v5 lite
        return 512, 100 * 1024 * 1024, 1
    # Unknown backend: conservative.
    return 512, 48 * 1024 * 1024, 1


class FFNWeights(NamedTuple):
    w13: jax.Array      # (nk, dim, 2*tk): block k = [w1[:, k*tk:(k+1)*tk] | w3[:, ...]]
    w2: jax.Array       # (nk, tk, dim)
    dim: int
    hidden: int
    hidden_pad: int
    tk: int
    nk: int


def prepare_ffn_weights(w1_t, w3_t, w2_t, *, tk=256,
                        compute_dtype=jnp.bfloat16,
                        resident_budget_bytes=16 * 1024 * 1024):
    """Cast / pad / fuse the FFN weights ONCE (amortized across forward calls)."""
    dim, hidden = w1_t.shape
    assert w3_t.shape == (dim, hidden) and w2_t.shape == (hidden, dim)
    wbytes = jnp.dtype(compute_dtype).itemsize

    if 3 * dim * hidden * wbytes <= resident_budget_bytes:
        # Small-model fast path: whole weight set stays VMEM-resident.
        tk_eff = _round_up(hidden, 128)
    else:
        tk_eff = _round_up(max(128, min(tk, hidden)), 128)
    hidden_pad = _round_up(hidden, tk_eff)
    nk = hidden_pad // tk_eff
    ph = hidden_pad - hidden

    # Zero padding is exact: padded hidden columns give h1=h3=0 -> gated=0,
    # and the matching (zero) w2 rows contribute nothing.
    w1p = jnp.pad(w1_t, ((0, 0), (0, ph))).astype(compute_dtype)
    w3p = jnp.pad(w3_t, ((0, 0), (0, ph))).astype(compute_dtype)
    w2p = jnp.pad(w2_t, ((0, ph), (0, 0))).astype(compute_dtype)

    # Fuse w1/w3 so each hidden slice needs one (tm,dim)x(dim,2*tk) matmul.
    w1b = w1p.reshape(dim, nk, tk_eff).transpose(1, 0, 2)   # (nk, dim, tk)
    w3b = w3p.reshape(dim, nk, tk_eff).transpose(1, 0, 2)   # (nk, dim, tk)
    w13 = jnp.concatenate([w1b, w3b], axis=-1)              # (nk, dim, 2*tk)
    w2b = w2p.reshape(nk, tk_eff, dim)                      # (nk, tk, dim)
    return FFNWeights(w13=w13, w2=w2b, dim=dim, hidden=hidden,
                      hidden_pad=hidden_pad, tk=tk_eff, nk=nk)


def _ffn_kernel_resident(x_ref, w13_ref, w2_ref, o_ref):
    # x_ref: (tm, dim) bf16; w13_ref: (dim, 2*hid) bf16; w2_ref: (hid, dim) bf16.
    tk = w2_ref.shape[0]
    x = x_ref[...]
    h = jnp.dot(x, w13_ref[...], preferred_element_type=jnp.float32)  # (tm, 2*hid)
    h1 = h[:, :tk]
    h3 = h[:, tk:]
    # SiLU + gating in f32 on VPU/EUP (v5e has no bf16 VPU/EUP).
    gated = (h1 * jax.nn.sigmoid(h1)) * h3
    o_ref[...] = jnp.dot(gated.astype(w2_ref.dtype), w2_ref[...],
                         preferred_element_type=jnp.float32).astype(o_ref.dtype)


def _ffn_kernel_stream(x_ref, w13_ref, w2_ref, o_ref, acc_ref):
    # Grid = (token tiles, hidden slices). acc_ref is a resident f32 (tm, dim).
    k = pl.program_id(1)
    nk = pl.num_programs(1)
    tk = w2_ref.shape[0]

    x = x_ref[...]
    h = jnp.dot(x, w13_ref[...], preferred_element_type=jnp.float32)  # (tm, 2*tk)
    h1 = h[:, :tk]
    h3 = h[:, tk:]
    gated = (h1 * jax.nn.sigmoid(h1)) * h3
    partial = jnp.dot(gated.astype(w2_ref.dtype), w2_ref[...],
                      preferred_element_type=jnp.float32)

    @pl.when(k == 0)
    def _():
        acc_ref[...] = partial          # direct store: no zero-init round trip

    @pl.when(k > 0)
    def _():
        acc_ref[...] += partial

    @pl.when(k == nk - 1)
    def _():
        o_ref[...] = acc_ref[...].astype(o_ref.dtype)


def feed_forward(x, weights: FFNWeights, *, tm=None, vmem_limit_bytes=None,
                 compute_dtype=jnp.bfloat16, out_dtype=None):
    """x: [..., dim] -> [..., dim] (same semantics as the PyTorch module)."""
    *lead, dim = x.shape
    assert dim == weights.dim
    out_dtype = out_dtype or x.dtype
    nk, tk = weights.nk, weights.tk

    tm_def, vmem_cap, num_cores = _tpu_defaults()
    tm = tm_def if tm is None else tm
    vmem_cap = vmem_cap if vmem_limit_bytes is None else vmem_limit_bytes

    M = int(math.prod(lead)) if lead else 1
    M8 = _round_up(M, 8)
    tm_eff = max(8, min(_round_up(tm, 8), M8))
    # Make sure the "parallel" token axis has >= num_cores tiles (v7x: 2 TCs).
    if num_cores > 1 and _cdiv(M8, tm_eff) < num_cores and M8 >= 8 * num_cores:
        tm_eff = _round_up(_cdiv(M8, num_cores), 8)

    out_bytes = jnp.dtype(out_dtype).itemsize
    cbytes = jnp.dtype(compute_dtype).itemsize

    def vmem_estimate(tm_):
        b = 2 * tm_ * dim * cbytes                      # x tiles (double-buffered)
        b += 2 * (dim * 2 * tk + tk * dim) * cbytes     # w13 + w2 tiles
        b += 2 * tm_ * dim * out_bytes                  # output tiles
        if nk > 1:
            b += tm_ * dim * 4                          # f32 accumulator
        return b

    # Shrink the token tile if it would not fit the per-chip VMEM budget.
    while vmem_estimate(tm_eff) > int(0.9 * vmem_cap) and tm_eff > 64:
        tm_eff = max(64, _round_up(tm_eff // 2, 8))

    M_pad = _round_up(M8, tm_eff)
    grid_m = M_pad // tm_eff

    x2d = x.reshape(M, dim)
    if M_pad != M:
        x2d = jnp.pad(x2d, ((0, M_pad - M), (0, 0)))
    xc = x2d.astype(compute_dtype)

    vmem_limit = int(min(vmem_cap,
                         max(32 * 1024 * 1024, int(1.5 * vmem_estimate(tm_eff)))))

    w_bytes = (weights.w13.size + weights.w2.size) * cbytes
    weight_reads = grid_m if nk > 1 else 1   # weights re-streamed per token tile
    cost = pl.CostEstimate(
        flops=6 * M_pad * dim * weights.hidden_pad,
        transcendentals=M_pad * weights.hidden_pad,
        bytes_accessed=(xc.size * cbytes + weight_reads * w_bytes
                        + M_pad * dim * out_bytes),
    )

    if nk == 1:
        # Fast path: weights resident in VMEM, no reduction axis, no scratch.
        out2d = pl.pallas_call(
            _ffn_kernel_resident,
            out_shape=jax.ShapeDtypeStruct((M_pad, dim), out_dtype),
            grid_spec=pltpu.PrefetchScalarGridSpec(
                num_scalar_prefetch=0,
                grid=(grid_m,),
                in_specs=[
                    pl.BlockSpec((tm_eff, dim), lambda i: (i, 0)),
                    pl.BlockSpec((None, dim, 2 * tk), lambda i: (0, 0, 0)),
                    pl.BlockSpec((None, tk, dim), lambda i: (0, 0, 0)),
                ],
                out_specs=pl.BlockSpec((tm_eff, dim), lambda i: (i, 0)),
            ),
            compiler_params=pltpu.CompilerParams(
                dimension_semantics=("parallel",),
                vmem_limit_bytes=vmem_limit),
            cost_estimate=cost,
        )(xc, weights.w13, weights.w2)
    else:
        # Streaming path: hidden slices streamed, f32 accumulator resident.
        out2d = pl.pallas_call(
            _ffn_kernel_stream,
            out_shape=jax.ShapeDtypeStruct((M_pad, dim), out_dtype),
            grid_spec=pltpu.PrefetchScalarGridSpec(
                num_scalar_prefetch=0,
                grid=(grid_m, nk),
                in_specs=[
                    pl.BlockSpec((tm_eff, dim), lambda i, k: (i, 0)),
                    pl.BlockSpec((None, dim, 2 * tk), lambda i, k: (k, 0, 0)),
                    pl.BlockSpec((None, tk, dim), lambda i, k: (k, 0, 0)),
                ],
                out_specs=pl.BlockSpec((tm_eff, dim), lambda i, k: (i, 0)),
                scratch_shapes=[pltpu.VMEM((tm_eff, dim), jnp.float32)],
            ),
            compiler_params=pltpu.CompilerParams(
                dimension_semantics=("parallel", "arbitrary"),
                vmem_limit_bytes=vmem_limit),
            cost_estimate=cost,
        )(xc, weights.w13, weights.w2)

    return out2d[:M].reshape(*lead, dim)


if __name__ == "__main__":
    # FeedForward(dim=256, hidden_dim=1024, multiple_of=256) -> hidden = 768.
    dim = 256
    hidden = _compute_hidden_dim(dim, 1024, 256, None)   # 768
    batch, seq = 2, 128

    key = jax.random.PRNGKey(0)
    kx, k1, k2, k3 = jax.random.split(key, 4)
    x = jax.random.normal(kx, (batch, seq, dim), dtype=jnp.float32)

    in_std = dim ** -0.5
    out_std = hidden ** -0.5
    w1_t = jax.random.normal(k1, (dim, hidden), dtype=jnp.float32) * in_std
    w3_t = jax.random.normal(k3, (dim, hidden), dtype=jnp.float32) * in_std
    w2_t = jax.random.normal(k2, (hidden, dim), dtype=jnp.float32) * out_std

    # Pure-JAX reference mirroring the kernel numerics (bf16 operands, f32 acc).
    bf16 = jnp.bfloat16
    xb = x.reshape(batch * seq, dim).astype(bf16)
    h1 = jnp.dot(xb, w1_t.astype(bf16), preferred_element_type=jnp.float32)
    h3 = jnp.dot(xb, w3_t.astype(bf16), preferred_element_type=jnp.float32)
    gated = (h1 * jax.nn.sigmoid(h1)) * h3
    ref = jnp.dot(gated.astype(bf16), w2_t.astype(bf16),
                  preferred_element_type=jnp.float32)
    ref = ref.reshape(batch, seq, dim).astype(x.dtype)

    # 1) Resident fast path (default for this small model).
    weights = prepare_ffn_weights(w1_t, w3_t, w2_t)
    out = jax.block_until_ready(feed_forward(x, weights))
    assert out.shape == (batch, seq, dim)
    assert jnp.allclose(out, ref, atol=2e-2, rtol=2e-2), (
        float(jnp.max(jnp.abs(out - ref))))

    # 2) Streaming path (forced), exercising the hidden-reduction kernel.
    weights_stream = prepare_ffn_weights(w1_t, w3_t, w2_t, tk=256,
                                         resident_budget_bytes=0)
    out_s = jax.block_until_ready(feed_forward(x, weights_stream))
    assert out_s.shape == (batch, seq, dim)
    assert jnp.allclose(out_s, ref, atol=2e-2, rtol=2e-2), (
        float(jnp.max(jnp.abs(out_s - ref))))

    print("KERNEL_OK")
</pallas_src>

<mosaic_0001>
module attributes {stable_mosaic.version = 11 : i64} {
  func.func @_ffn_kernel_resident(%arg0: i32, %arg1: memref<256x256xbf16, #tpu.memory_space<vmem>>, %arg2: memref<1x256x1536xbf16, #tpu.memory_space<vmem>>, %arg3: memref<1x768x256xbf16, #tpu.memory_space<vmem>>, %arg4: memref<256x256xf32, #tpu.memory_space<vmem>>) attributes {dimension_semantics = [#tpu.dimension_semantics<parallel>], iteration_bounds = array<i64: 1>, scalar_prefetch = 0 : i64, scratch_operands = 0 : i64, tpu.core_type = #tpu.core_type<tc>, window_params = [{transform_indices = @transform_0, window_bounds = array<i64: 256, 256>}, {pipeline_mode = #tpu.pipeline_mode<synchronous>, transform_indices = @transform_1, window_bounds = array<i64: 1, 256, 1536>}, {pipeline_mode = #tpu.pipeline_mode<synchronous>, transform_indices = @transform_2, window_bounds = array<i64: 1, 768, 256>}, {transform_indices = @transform_3, window_bounds = array<i64: 256, 256>}]} {
    %c0 = arith.constant 0 : index
    %c0_0 = arith.constant 0 : index
    %0 = vector.load %arg1[%c0, %c0_0] : memref<256x256xbf16, #tpu.memory_space<vmem>>, vector<256x256xbf16>
    %c0_1 = arith.constant 0 : index
    %c0_2 = arith.constant 0 : index
    %c0_3 = arith.constant 0 : index
    %1 = vector.load %arg2[%c0_1, %c0_2, %c0_3] : memref<1x256x1536xbf16, #tpu.memory_space<vmem>>, vector<1x256x1536xbf16>
    %2 = vector.shape_cast %1 : vector<1x256x1536xbf16> to vector<256x1536xbf16>
    %cst = arith.constant dense<0.000000e+00> : vector<256x1536xf32>
    %3 = tpu.matmul %0, %2, %cst {dimension_numbers = #tpu.dot_dimension_numbers<[1], [0], [0], [1], [0, 0, 1, 1], [], []>} : vector<256x256xbf16>, vector<256x1536xbf16>, vector<256x1536xf32> -> vector<256x1536xf32>
    %4 = vector.extract_strided_slice %3 {offsets = [0, 0], sizes = [256, 768], strides = [1, 1]} : vector<256x1536xf32> to vector<256x768xf32>
    %5 = vector.extract_strided_slice %3 {offsets = [0, 768], sizes = [256, 768], strides = [1, 1]} : vector<256x1536xf32> to vector<256x768xf32>
    %6 = arith.negf %4 : vector<256x768xf32>
    %7 = math.exp %6 : vector<256x768xf32>
    %cst_4 = arith.constant 1.000000e+00 : f32
    %8 = vector.broadcast %cst_4 : f32 to vector<256x768xf32>
    %9 = arith.addf %8, %7 : vector<256x768xf32>
    %10 = arith.divf %8, %9 : vector<256x768xf32>
    %11 = arith.mulf %4, %10 : vector<256x768xf32>
    %12 = arith.mulf %11, %5 : vector<256x768xf32>
    %13 = arith.truncf %12 : vector<256x768xf32> to vector<256x768xbf16>
    %c0_5 = arith.constant 0 : index
    %c0_6 = arith.constant 0 : index
    %c0_7 = arith.constant 0 : index
    %14 = vector.load %arg3[%c0_5, %c0_6, %c0_7] : memref<1x768x256xbf16, #tpu.memory_space<vmem>>, vector<1x768x256xbf16>
    %15 = vector.shape_cast %14 : vector<1x768x256xbf16> to vector<768x256xbf16>
    %cst_8 = arith.constant dense<0.000000e+00> : vector<256x256xf32>
    %16 = tpu.matmul %13, %15, %cst_8 {dimension_numbers = #tpu.dot_dimension_numbers<[1], [0], [0], [1], [0, 0, 1, 1], [], []>} : vector<256x768xbf16>, vector<768x256xbf16>, vector<256x256xf32> -> vector<256x256xf32>
    %c0_9 = arith.constant 0 : index
    %c0_10 = arith.constant 0 : index
    %17 = vector.load %arg4[%c0_9, %c0_10] : memref<256x256xf32, #tpu.memory_space<vmem>>, vector<256x256xf32>
    tpu.vector_store %arg4[%c0_9, %c0_10], %16 {strides = array<i32>} : memref<256x256xf32, #tpu.memory_space<vmem>>, vector<256x256xf32>,
    return
  }
  func.func @transform_0(%arg0: i32) -> (i32, i32) {
    %c0_i32 = arith.constant 0 : i32
    %c0_i32_0 = arith.constant 0 : i32
    return %arg0, %c0_i32 : i32, i32
  }
  func.func @transform_1(%arg0: i32) -> (i32, i32, i32) {
    %c0_i32 = arith.constant 0 : i32
    %c0_i32_0 = arith.constant 0 : i32
    %c0_i32_1 = arith.constant 0 : i32
    %c0_i32_2 = arith.constant 0 : i32
    return %c0_i32, %c0_i32_0, %c0_i32_1 : i32, i32, i32
  }
  func.func @transform_2(%arg0: i32) -> (i32, i32, i32) {
    %c0_i32 = arith.constant 0 : i32
    %c0_i32_0 = arith.constant 0 : i32
    %c0_i32_1 = arith.constant 0 : i32
    %c0_i32_2 = arith.constant 0 : i32
    return %c0_i32, %c0_i32_0, %c0_i32_1 : i32, i32, i32
  }
  func.func @transform_3(%arg0: i32) -> (i32, i32) {
    %c0_i32 = arith.constant 0 : i32
    %c0_i32_0 = arith.constant 0 : i32
    return %arg0, %c0_i32 : i32, i32
  }
}

</mosaic_0001>

<llo_original>
// kernel: tpu_custom_call.1
$region0: #{tpu_custom_call.1}
  #allocation0 [shape = 'u32[]', space=smem, size = 0x4, offset = 0x4, fixed_abs, tag = 'smem constant byte address 0x4 - core index']
  #allocation1 [shape = 'u32[144,128]{1,0:T(1,128)}', space=vmem, size = 0x12000, scoped, tag = 'internal scratch']
  %s0 = inlined_call_operand.hbm [shape: bf16[256,256], index: 0, kind: input, shape index: {}]
  %s1 = inlined_call_operand.hbm [shape: bf16[1,256,1536], index: 1, kind: input, shape index: {}]
  %s2 = inlined_call_operand.hbm [shape: bf16[1,768,256], index: 2, kind: input, shape index: {}]
  %s3 = inlined_call_operand.hbm [shape: f32[256,256], index: 3, kind: output, shape index: {}]
  %s4 = sld [smem:[#allocation0]]
  $region34: #{tpu_custom_call.1} parent=0
    _
  %s6 = ssub.s32 1, %s4
  %s7 = scalar_select 0, %s6, %s4
  $region1: #{tpu_custom_call.1} parent=0
    #allocation2 [shape = 'u8[131072]{0}', space=vmem, size = 0x20000, scoped, tag = 'input window, operand 0, single buffered']
    #allocation3 [shape = 's32[1]{0}', space=sflag, size = 0x4, scoped, tag = 'scoped memory for tpu_custom_call.1']
    #allocation4 [shape = 's32[1]{0}', space=sflag, size = 0x4, scoped, tag = 'scoped memory for tpu_custom_call.1']
    #allocation5 [shape = 'u8[786432]{0}', space=vmem, size = 0xc0000, scoped, tag = 'input window, operand 1, single buffered']
    #allocation6 [shape = 's32[1]{0}', space=sflag, size = 0x4, scoped, tag = 'scoped memory for tpu_custom_call.1']
    #allocation7 [shape = 'u8[393216]{0}', space=vmem, size = 0x60000, scoped, tag = 'input window, operand 2, single buffered']
    #allocation8 [shape = 'u8[262144]{0}', space=vmem, size = 0x40000, scoped, tag = 'output window, operand 0, single buffered']
    %8 = vsyncpa [#allocation3], 0
    %9 = vsyncpa [#allocation6], 0
    %10 = vsyncpa [#allocation4], 0
    // Predicated region
    $region2: #{tpu_custom_call.1} parent=1 // pred_check
      _
    $region3: #{tpu_custom_call.1} parent=1 // pred_check_branch
      %12 = sbr.rel (0) target = $region5
    $region4: #{tpu_custom_call.1} parent=1 // pred_region
      %s14 = ssub.s32 4096, 4096
      %15 = vsyncadd [#allocation3], %s14
      %s16 = sshll.u32 [#allocation2], 4
      %s17 = int_to_ptr.vmem [resolvable:$true] %s16
      %22 = dma.hbm_to_vmem [thread:$0]  %s0, 4096, %s17, [#allocation3], 128, 128, 8
    $region5: #{tpu_custom_call.1} parent=1 // pred_fallthru
      _
    // Predicated region
    $region6: #{tpu_custom_call.1} parent=1 // pred_check
      _
    $region7: #{tpu_custom_call.1} parent=1 // pred_check_branch
      %24 = sbr.rel (0) target = $region9
    $region8: #{tpu_custom_call.1} parent=1 // pred_region
      %s26 = ssub.s32 24576, 24576
      %27 = vsyncadd [#allocation6], %s26
      %s28 = sshll.u32 [#allocation5], 4
      %s29 = int_to_ptr.vmem [resolvable:$true] %s28
      %34 = dma.hbm_to_vmem [thread:$0]  %s1, 24576, %s29, [#allocation6], 768, 768, 48
    $region9: #{tpu_custom_call.1} parent=1 // pred_fallthru
      _
    // Predicated region
    $region10: #{tpu_custom_call.1} parent=1 // pred_check
      _
    $region11: #{tpu_custom_call.1} parent=1 // pred_check_branch
      %36 = sbr.rel (0) target = $region13
    $region12: #{tpu_custom_call.1} parent=1 // pred_region
      %s38 = ssub.s32 12288, 12288
      %39 = vsyncadd [#allocation6], %s38
      %s40 = sshll.u32 [#allocation7], 4
      %s41 = int_to_ptr.vmem [resolvable:$true] %s40
      %46 = dma.hbm_to_vmem [thread:$0]  %s2, 12288, %s41, [#allocation6], 128, 128, 8
    $region13: #{tpu_custom_call.1} parent=1 // pred_fallthru
      _
    // Predicated region
    $region14: #{tpu_custom_call.1} parent=1 // pred_check
      _
    $region15: #{tpu_custom_call.1} parent=1 // pred_check_branch
      %48 = sbr.rel (0) target = $region17
    $region16: #{tpu_custom_call.1} parent=1 // pred_region
      %49 = dma.done [#allocation3], 4096
    $region17: #{tpu_custom_call.1} parent=1 // pred_fallthru
      _
    // Predicated region
    $region18: #{tpu_custom_call.1} parent=1 // pred_check
      _
    $region19: #{tpu_custom_call.1} parent=1 // pred_check_branch
      %51 = sbr.rel (0) target = $region21
    $region20: #{tpu_custom_call.1} parent=1 // pred_region
      %52 = dma.done [#allocation6], 24576
    $region21: #{tpu_custom_call.1} parent=1 // pred_fallthru
      _
    // Predicated region
    $region22: #{tpu_custom_call.1} parent=1 // pred_check
      _
    $region23: #{tpu_custom_call.1} parent=1 // pred_check_branch
      %54 = sbr.rel (0) target = $region25
    $region24: #{tpu_custom_call.1} parent=1 // pred_region
      %55 = dma.done [#allocation6], 12288
    $region25: #{tpu_custom_call.1} parent=1 // pred_fallthru
      _
    %v56 = vld [vmem:[#allocation2] sm:$0xff]
    %v57 = vld [vmem:[#allocation2 + $0x8] sm:$0xff]
    %v58 = vld [vmem:[#allocation2 + $0x10] sm:$0xff]
    %v59 = vld [vmem:[#allocation2 + $0x18] sm:$0xff]
    %v60 = vld [vmem:[#allocation2 + $0x20] sm:$0xff]
    %v61 = vld [vmem:[#allocation2 + $0x28] sm:$0xff]
    %v62 = vld [vmem:[#allocation2 + $0x30] sm:$0xff]
    %v63 = vld [vmem:[#allocation2 + $0x38] sm:$0xff]
    %v64 = vld [vmem:[#allocation2 + $0x40] sm:$0xff]
    %v65 = vld [vmem:[#allocation2 + $0x48] sm:$0xff]
    %v66 = vld [vmem:[#allocation2 + $0x50] sm:$0xff]
    %v67 = vld [vmem:[#allocation2 + $0x58] sm:$0xff]
    %v68 = vld [vmem:[#allocation2 + $0x60] sm:$0xff]
    %v69 = vld [vmem:[#allocation2 + $0x68] sm:$0xff]
    %v70 = vld [vmem:[#allocation2 + $0x70] sm:$0xff]
    %v71 = vld [vmem:[#allocation2 + $0x78] sm:$0xff]
    %v72 = vld [vmem:[#allocation2 + $0x80] sm:$0xff]
    %v73 = vld [vmem:[#allocation2 + $0x88] sm:$0xff]
    %v74 = vld [vmem:[#allocation2 + $0x90] sm:$0xff]
    %v75 = vld [vmem:[#allocation2 + $0x98] sm:$0xff]
    %v76 = vld [vmem:[#allocation2 + $0xa0] sm:$0xff]
    %v77 = vld [vmem:[#allocation2 + $0xa8] sm:$0xff]
    %v78 = vld [vmem:[#allocation2 + $0xb0] sm:$0xff]
    %v79 = vld [vmem:[#allocation2 + $0xb8] sm:$0xff]
    %v80 = vld [vmem:[#allocation2 + $0xc0] sm:$0xff]
    %v81 = vld [vmem:[#allocation2 + $0xc8] sm:$0xff]
    %v82 = vld [vmem:[#allocation2 + $0xd0] sm:$0xff]
    %v83 = vld [vmem:[#allocation2 + $0xd8] sm:$0xff]
    %v84 = vld [vmem:[#allocation2 + $0xe0] sm:$0xff]
    %v85 = vld [vmem:[#allocation2 + $0xe8] sm:$0xff]
    %v86 = vld [vmem:[#allocation2 + $0xf0] sm:$0xff]
    %v87 = vld [vmem:[#allocation2 + $0xf8] sm:$0xff]
    %v88 = vld [vmem:[#allocation5] sm:$0xff]
    %v89 = vld [vmem:[#allocation5 + $0x8] sm:$0xff]
    %v90 = vld [vmem:[#allocation5 + $0x10] sm:$0xff]
    %v91 = vld [vmem:[#allocation5 + $0x18] sm:$0xff]
    %v92 = vld [vmem:[#allocation5 + $0x20] sm:$0xff]
    %v93 = vld [vmem:[#allocation5 + $0x28] sm:$0xff]
    %v94 = vld [vmem:[#allocation5 + $0x30] sm:$0xff]
    %v95 = vld [vmem:[#allocation5 + $0x38] sm:$0xff]
    %v96 = vld [vmem:[#allocation5 + $0x40] sm:$0xff]
    %v97 = vld [vmem:[#allocation5 + $0x48] sm:$0xff]
    %v98 = vld [vmem:[#allocation5 + $0x50] sm:$0xff]
    %v99 = vld [vmem:[#allocation5 + $0x58] sm:$0xff]
    %v100 = vld [vmem:[#allocation5 + $0x60] sm:$0xff]
    %v101 = vld [vmem:[#allocation5 + $0x68] sm:$0xff]
    %v102 = vld [vmem:[#allocation5 + $0x70] sm:$0xff]
    %v103 = vld [vmem:[#allocation5 + $0x78] sm:$0xff]
    %v104 = vld [vmem:[#allocation5 + $0x80] sm:$0xff]
    %v105 = vld [vmem:[#allocation5 + $0x88] sm:$0xff]
    %v106 = vld [vmem:[#allocation5 + $0x90] sm:$0xff]
    %v107 = vld [vmem:[#allocation5 + $0x98] sm:$0xff]
    %v108 = vld [vmem:[#allocation5 + $0xa0] sm:$0xff]
    %v109 = vld [vmem:[#allocation5 + $0xa8] sm:$0xff]
    %v110 = vld [vmem:[#allocation5 + $0xb0] sm:$0xff]
    %v111 = vld [vmem:[#allocation5 + $0xb8] sm:$0xff]
    %v112 = vld [vmem:[#allocation5 + $0xc0] sm:$0xff]
    %v113 = vld [vmem:[#allocation5 + $0xc8] sm:$0xff]
    %v114 = vld [vmem:[#allocation5 + $0xd0] sm:$0xff]
    %v115 = vld [vmem:[#allocation5 + $0xd8] sm:$0xff]
    %v116 = vld [vmem:[#allocation5 + $0xe0] sm:$0xff]
    %v117 = vld [vmem:[#allocation5 + $0xe8] sm:$0xff]
    %v118 = vld [vmem:[#allocation5 + $0xf0] sm:$0xff]
    %v119 = vld [vmem:[#allocation5 + $0xf8] sm:$0xff]
    %v120 = vld [vmem:[#allocation5 + $0x100] sm:$0xff]
    %v121 = vld [vmem:[#allocation5 + $0x108] sm:$0xff]
    %v122 = vld [vmem:[#allocation5 + $0x110] sm:$0xff]
    %v123 = vld [vmem:[#allocation5 + $0x118] sm:$0xff]
    %v124 = vld [vmem:[#allocation5 + $0x120] sm:$0xff]
    %v125 = vld [vmem:[#allocation5 + $0x128] sm:$0xff]
    %v126 = vld [vmem:[#allocation5 + $0x130] sm:$0xff]
    %v127 = vld [vmem:[#allocation5 + $0x138] sm:$0xff]
    %v128 = vld [vmem:[#allocation5 + $0x140] sm:$0xff]
    %v129 = vld [vmem:[#allocation5 + $0x148] sm:$0xff]
    %v130 = vld [vmem:[#allocation5 + $0x150] sm:$0xff]
    %v131 = vld [vmem:[#allocation5 + $0x158] sm:$0xff]
    %v132 = vld [vmem:[#allocation5 + $0x160] sm:$0xff]
    %v133 = vld [vmem:[#allocation5 + $0x168] sm:$0xff]
    %v134 = vld [vmem:[#allocation5 + $0x170] sm:$0xff]
    %v135 = vld [vmem:[#allocation5 + $0x178] sm:$0xff]
    %v136 = vld [vmem:[#allocation5 + $0x180] sm:$0xff]
    %v137 = vld [vmem:[#allocation5 + $0x188] sm:$0xff]
    %v138 = vld [vmem:[#allocation5 + $0x190] sm:$0xff]
    %v139 = vld [vmem:[#allocation5 + $0x198] sm:$0xff]
    %v140 = vld [vmem:[#allocation5 + $0x1a0] sm:$0xff]
    %v141 = vld [vmem:[#allocation5 + $0x1a8] sm:$0xff]
    %v142 = vld [vmem:[#allocation5 + $0x1b0] sm:$0xff]
    %v143 = vld [vmem:[#allocation5 + $0x1b8] sm:$0xff]
    %v144 = vld [vmem:[#allocation5 + $0x1c0] sm:$0xff]
    %v145 = vld [vmem:[#allocation5 + $0x1c8] sm:$0xff]
    %v146 = vld [vmem:[#allocation5 + $0x1d0] sm:$0xff]
    %v147 = vld [vmem:[#allocation5 + $0x1d8] sm:$0xff]
    %v148 = vld [vmem:[#allocation5 + $0x1e0] sm:$0xff]
    %v149 = vld [vmem:[#allocation5 + $0x1e8] sm:$0xff]
    %v150 = vld [vmem:[#allocation5 + $0x1f0] sm:$0xff]
    %v151 = vld [vmem:[#allocation5 + $0x1f8] sm:$0xff]
    %v152 = vld [vmem:[#allocation5 + $0x200] sm:$0xff]
    %v153 = vld [vmem:[#allocation5 + $0x208] sm:$0xff]
    %v154 = vld [vmem:[#allocation5 + $0x210] sm:$0xff]
    %v155 = vld [vmem:[#allocation5 + $0x218] sm:$0xff]
    %v156 = vld [vmem:[#allocation5 + $0x220] sm:$0xff]
    %v157 = vld [vmem:[#allocation5 + $0x228] sm:$0xff]
    %v158 = vld [vmem:[#allocation5 + $0x230] sm:$0xff]
    %v159 = vld [vmem:[#allocation5 + $0x238] sm:$0xff]
    %v160 = vld [vmem:[#allocation5 + $0x240] sm:$0xff]
    %v161 = vld [vmem:[#allocation5 + $0x248] sm:$0xff]
    %v162 = vld [vmem:[#allocation5 + $0x250] sm:$0xff]
    %v163 = vld [vmem:[#allocation5 + $0x258] sm:$0xff]
    %v164 = vld [vmem:[#allocation5 + $0x260] sm:$0xff]
    %v165 = vld [vmem:[#allocation5 + $0x268] sm:$0xff]
    %v166 = vld [vmem:[#allocation5 + $0x270] sm:$0xff]
    %v167 = vld [vmem:[#allocation5 + $0x278] sm:$0xff]
    %v168 = vld [vmem:[#allocation5 + $0x280] sm:$0xff]
    %v169 = vld [vmem:[#allocation5 + $0x288] sm:$0xff]
    %v170 = vld [vmem:[#allocation5 + $0x290] sm:$0xff]
    %v171 = vld [vmem:[#allocation5 + $0x298] sm:$0xff]
    %v172 = vld [vmem:[#allocation5 + $0x2a0] sm:$0xff]
    %v173 = vld [vmem:[#allocation5 + $0x2a8] sm:$0xff]
    %v174 = vld [vmem:[#allocation5 + $0x2b0] sm:$0xff]
    %v175 = vld [vmem:[#allocation5 + $0x2b8] sm:$0xff]
    %v176 = vld [vmem:[#allocation5 + $0x2c0] sm:$0xff]
    %v177 = vld [vmem:[#allocation5 + $0x2c8] sm:$0xff]
    %v178 = vld [vmem:[#allocation5 + $0x2d0] sm:$0xff]
    %v179 = vld [vmem:[#allocation5 + $0x2d8] sm:$0xff]
    %v180 = vld [vmem:[#allocation5 + $0x2e0] sm:$0xff]
    %v181 = vld [vmem:[#allocation5 + $0x2e8] sm:$0xff]
    %v182 = vld [vmem:[#allocation5 + $0x2f0] sm:$0xff]
    %v183 = vld [vmem:[#allocation5 + $0x2f8] sm:$0xff]
    %v184 = vld [vmem:[#allocation5 + $0x300] sm:$0xff]
    %v185 = vld [vmem:[#allocation5 + $0x308] sm:$0xff]
    %v186 = vld [vmem:[#allocation5 + $0x310] sm:$0xff]
    %v187 = vld [vmem:[#allocation5 + $0x318] sm:$0xff]
    %v188 = vld [vmem:[#allocation5 + $0x320] sm:$0xff]
    %v189 = vld [vmem:[#allocation5 + $0x328] sm:$0xff]
    %v190 = vld [vmem:[#allocation5 + $0x330] sm:$0xff]
    %v191 = vld [vmem:[#allocation5 + $0x338] sm:$0xff]
    %v192 = vld [vmem:[#allocation5 + $0x340] sm:$0xff]
    %v193 = vld [vmem:[#allocation5 + $0x348] sm:$0xff]
    %v194 = vld [vmem:[#allocation5 + $0x350] sm:$0xff]
    %v195 = vld [vmem:[#allocation5 + $0x358] sm:$0xff]
    %v196 = vld [vmem:[#allocation5 + $0x360] sm:$0xff]
    %v197 = vld [vmem:[#allocation5 + $0x368] sm:$0xff]
    %v198 = vld [vmem:[#allocation5 + $0x370] sm:$0xff]
    %v199 = vld [vmem:[#allocation5 + $0x378] sm:$0xff]
    %v200 = vld [vmem:[#allocation5 + $0x380] sm:$0xff]
    %v201 = vld [vmem:[#allocation5 + $0x388] sm:$0xff]
    %v202 = vld [vmem:[#allocation5 + $0x390] sm:$0xff]
    %v203 = vld [vmem:[#allocation5 + $0x398] sm:$0xff]
    %v204 = vld [vmem:[#allocation5 + $0x3a0] sm:$0xff]
    %v205 = vld [vmem:[#allocation5 + $0x3a8] sm:$0xff]
    %v206 = vld [vmem:[#allocation5 + $0x3b0] sm:$0xff]
    %v207 = vld [vmem:[#allocation5 + $0x3b8] sm:$0xff]
    %v208 = vld [vmem:[#allocation5 + $0x3c0] sm:$0xff]
    %v209 = vld [vmem:[#allocation5 + $0x3c8] sm:$0xff]
    %v210 = vld [vmem:[#allocation5 + $0x3d0] sm:$0xff]
    %v211 = vld [vmem:[#allocation5 + $0x3d8] sm:$0xff]
    %v212 = vld [vmem:[#allocation5 + $0x3e0] sm:$0xff]
    %v213 = vld [vmem:[#allocation5 + $0x3e8] sm:$0xff]
    %v214 = vld [vmem:[#allocation5 + $0x3f0] sm:$0xff]
    %v215 = vld [vmem:[#allocation5 + $0x3f8] sm:$0xff]
    %v216 = vld [vmem:[#allocation5 + $0x400] sm:$0xff]
    %v217 = vld [vmem:[#allocation5 + $0x408] sm:$0xff]
    %v218 = vld [vmem:[#allocation5 + $0x410] sm:$0xff]
    %v219 = vld [vmem:[#allocation5 + $0x418] sm:$0xff]
    %v220 = vld [vmem:[#allocation5 + $0x420] sm:$0xff]
    %v221 = vld [vmem:[#allocation5 + $0x428] sm:$0xff]
    %v222 = vld [vmem:[#allocation5 + $0x430] sm:$0xff]
    %v223 = vld [vmem:[#allocation5 + $0x438] sm:$0xff]
    %v224 = vld [vmem:[#allocation5 + $0x440] sm:$0xff]
    %v225 = vld [vmem:[#allocation5 + $0x448] sm:$0xff]
    %v226 = vld [vmem:[#allocation5 + $0x450] sm:$0xff]
    %v227 = vld [vmem:[#allocation5 + $0x458] sm:$0xff]
    %v228 = vld [vmem:[#allocation5 + $0x460] sm:$0xff]
    %v229 = vld [vmem:[#allocation5 + $0x468] sm:$0xff]
    %v230 = vld [vmem:[#allocation5 + $0x470] sm:$0xff]
    %v231 = vld [vmem:[#allocation5 + $0x478] sm:$0xff]
    %v232 = vld [vmem:[#allocation5 + $0x480] sm:$0xff]
    %v233 = vld [vmem:[#allocation5 + $0x488] sm:$0xff]
    %v234 = vld [vmem:[#allocation5 + $0x490] sm:$0xff]
    %v235 = vld [vmem:[#allocation5 + $0x498] sm:$0xff]
    %v236 = vld [vmem:[#allocation5 + $0x4a0] sm:$0xff]
    %v237 = vld [vmem:[#allocation5 + $0x4a8] sm:$0xff]
    %v238 = vld [vmem:[#allocation5 + $0x4b0] sm:$0xff]
    %v239 = vld [vmem:[#allocation5 + $0x4b8] sm:$0xff]
    %v240 = vld [vmem:[#allocation5 + $0x4c0] sm:$0xff]
    %v241 = vld [vmem:[#allocation5 + $0x4c8] sm:$0xff]
    %v242 = vld [vmem:[#allocation5 + $0x4d0] sm:$0xff]
    %v243 = vld [vmem:[#allocation5 + $0x4d8] sm:$0xff]
    %v244 = vld [vmem:[#allocation5 + $0x4e0] sm:$0xff]
    %v245 = vld [vmem:[#allocation5 + $0x4e8] sm:$0xff]
    %v246 = vld [vmem:[#allocation5 + $0x4f0] sm:$0xff]
    %v247 = vld [vmem:[#allocation5 + $0x4f8] sm:$0xff]
    %v248 = vld [vmem:[#allocation5 + $0x500] sm:$0xff]
    %v249 = vld [vmem:[#allocation5 + $0x508] sm:$0xff]
    %v250 = vld [vmem:[#allocation5 + $0x510] sm:$0xff]
    %v251 = vld [vmem:[#allocation5 + $0x518] sm:$0xff]
    %v252 = vld [vmem:[#allocation5 + $0x520] sm:$0xff]
    %v253 = vld [vmem:[#allocation5 + $0x528] sm:$0xff]
    %v254 = vld [vmem:[#allocation5 + $0x530] sm:$0xff]
    %v255 = vld [vmem:[#allocation5 + $0x538] sm:$0xff]
    %v256 = vld [vmem:[#allocation5 + $0x540] sm:$0xff]
    %v257 = vld [vmem:[#allocation5 + $0x548] sm:$0xff]
    %v258 = vld [vmem:[#allocation5 + $0x550] sm:$0xff]
    %v259 = vld [vmem:[#allocation5 + $0x558] sm:$0xff]
    %v260 = vld [vmem:[#allocation5 + $0x560] sm:$0xff]
    %v261 = vld [vmem:[#allocation5 + $0x568] sm:$0xff]
    %v262 = vld [vmem:[#allocation5 + $0x570] sm:$0xff]
    %v263 = vld [vmem:[#allocation5 + $0x578] sm:$0xff]
    %v264 = vld [vmem:[#allocation5 + $0x580] sm:$0xff]
    %v265 = vld [vmem:[#allocation5 + $0x588] sm:$0xff]
    %v266 = vld [vmem:[#allocation5 + $0x590] sm:$0xff]
    %v267 = vld [vmem:[#allocation5 + $0x598] sm:$0xff]
    %v268 = vld [vmem:[#allocation5 + $0x5a0] sm:$0xff]
    %v269 = vld [vmem:[#allocation5 + $0x5a8] sm:$0xff]
    %v270 = vld [vmem:[#allocation5 + $0x5b0] sm:$0xff]
    %v271 = vld [vmem:[#allocation5 + $0x5b8] sm:$0xff]
    %v272 = vld [vmem:[#allocation5 + $0x5c0] sm:$0xff]
    %v273 = vld [vmem:[#allocation5 + $0x5c8] sm:$0xff]
    %v274 = vld [vmem:[#allocation5 + $0x5d0] sm:$0xff]
    %v275 = vld [vmem:[#allocation5 + $0x5d8] sm:$0xff]
    %v276 = vld [vmem:[#allocation5 + $0x5e0] sm:$0xff]
    %v277 = vld [vmem:[#allocation5 + $0x5e8] sm:$0xff]
    %v278 = vld [vmem:[#allocation5 + $0x5f0] sm:$0xff]
    %v279 = vld [vmem:[#allocation5 + $0x5f8] sm:$0xff]
    %v312 = vunpack.c.l.b16 %v56
    %v313 = vunpack.c.h.b16 %v56
    %v314 = vunpack.c.l.b16 %v57
    %v315 = vunpack.c.h.b16 %v57
    %v316 = vunpack.c.l.b16 %v58
    %v317 = vunpack.c.h.b16 %v58
    %v318 = vunpack.c.l.b16 %v59
    %v319 = vunpack.c.h.b16 %v59
    %v320 = vunpack.c.l.b16 %v60
    %v321 = vunpack.c.h.b16 %v60
    %v322 = vunpack.c.l.b16 %v61
    %v323 = vunpack.c.h.b16 %v61
    %v324 = vunpack.c.l.b16 %v62
    %v325 = vunpack.c.h.b16 %v62
    %v326 = vunpack.c.l.b16 %v63
    %v327 = vunpack.c.h.b16 %v63
    %v328 = vunpack.c.l.b16 %v64
    %v329 = vunpack.c.h.b16 %v64
    %v330 = vunpack.c.l.b16 %v65
    %v331 = vunpack.c.h.b16 %v65
    %v332 = vunpack.c.l.b16 %v66
    %v333 = vunpack.c.h.b16 %v66
    %v334 = vunpack.c.l.b16 %v67
    %v335 = vunpack.c.h.b16 %v67
    %v336 = vunpack.c.l.b16 %v68
    %v337 = vunpack.c.h.b16 %v68
    %v338 = vunpack.c.l.b16 %v69
    %v339 = vunpack.c.h.b16 %v69
    %v340 = vunpack.c.l.b16 %v70
    %v341 = vunpack.c.h.b16 %v70
    %v342 = vunpack.c.l.b16 %v71
    %v343 = vunpack.c.h.b16 %v71
    %v344 = vunpack.c.l.b16 %v72
    %v345 = vunpack.c.h.b16 %v72
    %v346 = vunpack.c.l.b16 %v73
    %v347 = vunpack.c.h.b16 %v73
    %v348 = vunpack.c.l.b16 %v74
    %v349 = vunpack.c.h.b16 %v74
    %v350 = vunpack.c.l.b16 %v75
    %v351 = vunpack.c.h.b16 %v75
    %v352 = vunpack.c.l.b16 %v76
    %v353 = vunpack.c.h.b16 %v76
    %v354 = vunpack.c.l.b16 %v77
    %v355 = vunpack.c.h.b16 %v77
    %v356 = vunpack.c.l.b16 %v78
    %v357 = vunpack.c.h.b16 %v78
    %v358 = vunpack.c.l.b16 %v79
    %v359 = vunpack.c.h.b16 %v79
    %v360 = vunpack.c.l.b16 %v80
    %v361 = vunpack.c.h.b16 %v80
    %v362 = vunpack.c.l.b16 %v81
    %v363 = vunpack.c.h.b16 %v81
    %v364 = vunpack.c.l.b16 %v82
    %v365 = vunpack.c.h.b16 %v82
    %v366 = vunpack.c.l.b16 %v83
    %v367 = vunpack.c.h.b16 %v83
    %v368 = vunpack.c.l.b16 %v84
    %v369 = vunpack.c.h.b16 %v84
    %v370 = vunpack.c.l.b16 %v85
    %v371 = vunpack.c.h.b16 %v85
    %v372 = vunpack.c.l.b16 %v86
    %v373 = vunpack.c.h.b16 %v86
    %v374 = vunpack.c.l.b16 %v87
    %v375 = vunpack.c.h.b16 %v87
    %v376 = vpack.c.b16 %v314, %v312
    %v377 = vpack.c.b16 %v315, %v313
    %v378 = vpack.c.b16 %v318, %v316
    %v379 = vpack.c.b16 %v319, %v317
    %v380 = vpack.c.b16 %v322, %v320
    %v381 = vpack.c.b16 %v323, %v321
    %v382 = vpack.c.b16 %v326, %v324
    %v383 = vpack.c.b16 %v327, %v325
    %v384 = vpack.c.b16 %v330, %v328
    %v385 = vpack.c.b16 %v331, %v329
    %v386 = vpack.c.b16 %v334, %v332
    %v387 = vpack.c.b16 %v335, %v333
    %v388 = vpack.c.b16 %v338, %v336
    %v389 = vpack.c.b16 %v339, %v337
    %v390 = vpack.c.b16 %v342, %v340
    %v391 = vpack.c.b16 %v343, %v341
    %v392 = vpack.c.b16 %v346, %v344
    %v393 = vpack.c.b16 %v347, %v345
    %v394 = vpack.c.b16 %v350, %v348
    %v395 = vpack.c.b16 %v351, %v349
    %v396 = vpack.c.b16 %v354, %v352
    %v397 = vpack.c.b16 %v355, %v353
    %v398 = vpack.c.b16 %v358, %v356
    %v399 = vpack.c.b16 %v359, %v357
    %v400 = vpack.c.b16 %v362, %v360
    %v401 = vpack.c.b16 %v363, %v361
    %v402 = vpack.c.b16 %v366, %v364
    %v403 = vpack.c.b16 %v367, %v365
    %v404 = vpack.c.b16 %v370, %v368
    %v405 = vpack.c.b16 %v371, %v369
    %v406 = vpack.c.b16 %v374, %v372
    %v407 = vpack.c.b16 %v375, %v373
    %v632 = vunpack.c.l.b16 %v88
    %v633 = vunpack.c.h.b16 %v88
    %v634 = vunpack.c.l.b16 %v89
    %v635 = vunpack.c.h.b16 %v89
    %v636 = vunpack.c.l.b16 %v90
    %v637 = vunpack.c.h.b16 %v90
    %v638 = vunpack.c.l.b16 %v91
    %v639 = vunpack.c.h.b16 %v91
    %v640 = vunpack.c.l.b16 %v92
    %v641 = vunpack.c.h.b16 %v92
    %v642 = vunpack.c.l.b16 %v93
    %v643 = vunpack.c.h.b16 %v93
    %v644 = vunpack.c.l.b16 %v94
    %v645 = vunpack.c.h.b16 %v94
    %v646 = vunpack.c.l.b16 %v95
    %v647 = vunpack.c.h.b16 %v95
    %v648 = vunpack.c.l.b16 %v96
    %v649 = vunpack.c.h.b16 %v96
    %v650 = vunpack.c.l.b16 %v97
    %v651 = vunpack.c.h.b16 %v97
    %v652 = vunpack.c.l.b16 %v98
    %v653 = vunpack.c.h.b16 %v98
    %v654 = vunpack.c.l.b16 %v99
    %v655 = vunpack.c.h.b16 %v99
    %v656 = vunpack.c.l.b16 %v100
    %v657 = vunpack.c.h.b16 %v100
    %v658 = vunpack.c.l.b16 %v101
    %v659 = vunpack.c.h.b16 %v101
    %v660 = vunpack.c.l.b16 %v102
    %v661 = vunpack.c.h.b16 %v102
    %v662 = vunpack.c.l.b16 %v103
    %v663 = vunpack.c.h.b16 %v103
    %v664 = vunpack.c.l.b16 %v104
    %v665 = vunpack.c.h.b16 %v104
    %v666 = vunpack.c.l.b16 %v105
    %v667 = vunpack.c.h.b16 %v105
    %v668 = vunpack.c.l.b16 %v106
    %v669 = vunpack.c.h.b16 %v106
    %v670 = vunpack.c.l.b16 %v107
    %v671 = vunpack.c.h.b16 %v107
    %v672 = vunpack.c.l.b16 %v108
    %v673 = vunpack.c.h.b16 %v108
    %v674 = vunpack.c.l.b16 %v109
    %v675 = vunpack.c.h.b16 %v109
    %v676 = vunpack.c.l.b16 %v110
    %v677 = vunpack.c.h.b16 %v110
    %v678 = vunpack.c.l.b16 %v111
    %v679 = vunpack.c.h.b16 %v111
    %v680 = vunpack.c.l.b16 %v112
    %v681 = vunpack.c.h.b16 %v112
    %v682 = vunpack.c.l.b16 %v113
    %v683 = vunpack.c.h.b16 %v113
    %v684 = vunpack.c.l.b16 %v114
    %v685 = vunpack.c.h.b16 %v114
    %v686 = vunpack.c.l.b16 %v115
    %v687 = vunpack.c.h.b16 %v115
    %v688 = vunpack.c.l.b16 %v116
    %v689 = vunpack.c.h.b16 %v116
    %v690 = vunpack.c.l.b16 %v117
    %v691 = vunpack.c.h.b16 %v117
    %v692 = vunpack.c.l.b16 %v118
    %v693 = vunpack.c.h.b16 %v118
    %v694 = vunpack.c.l.b16 %v119
    %v695 = vunpack.c.h.b16 %v119
    %v696 = vunpack.c.l.b16 %v120
    %v697 = vunpack.c.h.b16 %v120
    %v698 = vunpack.c.l.b16 %v121
    %v699 = vunpack.c.h.b16 %v121
    %v700 = vunpack.c.l.b16 %v122
    %v701 = vunpack.c.h.b16 %v122
    %v702 = vunpack.c.l.b16 %v123
    %v703 = vunpack.c.h.b16 %v123
    %v704 = vunpack.c.l.b16 %v124
    %v705 = vunpack.c.h.b16 %v124
    %v706 = vunpack.c.l.b16 %v125
    %v707 = vunpack.c.h.b16 %v125
    %v708 = vunpack.c.l.b16 %v126
    %v709 = vunpack.c.h.b16 %v126
    %v710 = vunpack.c.l.b16 %v127
    %v711 = vunpack.c.h.b16 %v127
    %v712 = vunpack.c.l.b16 %v128
    %v713 = vunpack.c.h.b16 %v128
    %v714 = vunpack.c.l.b16 %v129
    %v715 = vunpack.c.h.b16 %v129
    %v716 = vunpack.c.l.b16 %v130
    %v717 = vunpack.c.h.b16 %v130
    %v718 = vunpack.c.l.b16 %v131
    %v719 = vunpack.c.h.b16 %v131
    %v720 = vunpack.c.l.b16 %v132
    %v721 = vunpack.c.h.b16 %v132
    %v722 = vunpack.c.l.b16 %v133
    %v723 = vunpack.c.h.b16 %v133
    %v724 = vunpack.c.l.b16 %v134
    %v725 = vunpack.c.h.b16 %v134
    %v726 = vunpack.c.l.b16 %v135
    %v727 = vunpack.c.h.b16 %v135
    %v728 = vunpack.c.l.b16 %v136
    %v729 = vunpack.c.h.b16 %v136
    %v730 = vunpack.c.l.b16 %v137
    %v731 = vunpack.c.h.b16 %v137
    %v732 = vunpack.c.l.b16 %v138
    %v733 = vunpack.c.h.b16 %v138
    %v734 = vunpack.c.l.b16 %v139
    %v735 = vunpack.c.h.b16 %v139
    %v736 = vunpack.c.l.b16 %v140
    %v737 = vunpack.c.h.b16 %v140
    %v738 = vunpack.c.l.b16 %v141
    %v739 = vunpack.c.h.b16 %v141
    %v740 = vunpack.c.l.b16 %v142
    %v741 = vunpack.c.h.b16 %v142
    %v742 = vunpack.c.l.b16 %v143
    %v743 = vunpack.c.h.b16 %v143
    %v744 = vunpack.c.l.b16 %v144
    %v745 = vunpack.c.h.b16 %v144
    %v746 = vunpack.c.l.b16 %v145
    %v747 = vunpack.c.h.b16 %v145
    %v748 = vunpack.c.l.b16 %v146
    %v749 = vunpack.c.h.b16 %v146
    %v750 = vunpack.c.l.b16 %v147
    %v751 = vunpack.c.h.b16 %v147
    %v752 = vunpack.c.l.b16 %v148
    %v753 = vunpack.c.h.b16 %v148
    %v754 = vunpack.c.l.b16 %v149
    %v755 = vunpack.c.h.b16 %v149
    %v756 = vunpack.c.l.b16 %v150
    %v757 = vunpack.c.h.b16 %v150
    %v758 = vunpack.c.l.b16 %v151
    %v759 = vunpack.c.h.b16 %v151
    %v760 = vunpack.c.l.b16 %v152
    %v761 = vunpack.c.h.b16 %v152
    %v762 = vunpack.c.l.b16 %v153
    %v763 = vunpack.c.h.b16 %v153
    %v764 = vunpack.c.l.b16 %v154
    %v765 = vunpack.c.h.b16 %v154
    %v766 = vunpack.c.l.b16 %v155
    %v767 = vunpack.c.h.b16 %v155
    %v768 = vunpack.c.l.b16 %v156
    %v769 = vunpack.c.h.b16 %v156
    %v770 = vunpack.c.l.b16 %v157
    %v771 = vunpack.c.h.b16 %v157
    %v772 = vunpack.c.l.b16 %v158
    %v773 = vunpack.c.h.b16 %v158
    %v774 = vunpack.c.l.b16 %v159
    %v775 = vunpack.c.h.b16 %v159
    %v776 = vunpack.c.l.b16 %v160
    %v777 = vunpack.c.h.b16 %v160
    %v778 = vunpack.c.l.b16 %v161
    %v779 = vunpack.c.h.b16 %v161
    %v780 = vunpack.c.l.b16 %v162
    %v781 = vunpack.c.h.b16 %v162
    %v782 = vunpack.c.l.b16 %v163
    %v783 = vunpack.c.h.b16 %v163
    %v784 = vunpack.c.l.b16 %v164
    %v785 = vunpack.c.h.b16 %v164
    %v786 = vunpack.c.l.b16 %v165
    %v787 = vunpack.c.h.b16 %v165
    %v788 = vunpack.c.l.b16 %v166
    %v789 = vunpack.c.h.b16 %v166
    %v790 = vunpack.c.l.b16 %v167
    %v791 = vunpack.c.h.b16 %v167
    %v792 = vunpack.c.l.b16 %v168
    %v793 = vunpack.c.h.b16 %v168
    %v794 = vunpack.c.l.b16 %v169
    %v795 = vunpack.c.h.b16 %v169
    %v796 = vunpack.c.l.b16 %v170
    %v797 = vunpack.c.h.b16 %v170
    %v798 = vunpack.c.l.b16 %v171
    %v799 = vunpack.c.h.b16 %v171
    %v800 = vunpack.c.l.b16 %v172
    %v801 = vunpack.c.h.b16 %v172
    %v802 = vunpack.c.l.b16 %v173
    %v803 = vunpack.c.h.b16 %v173
    %v804 = vunpack.c.l.b16 %v174
    %v805 = vunpack.c.h.b16 %v174
    %v806 = vunpack.c.l.b16 %v175
    %v807 = vunpack.c.h.b16 %v175
    %v808 = vunpack.c.l.b16 %v176
    %v809 = vunpack.c.h.b16 %v176
    %v810 = vunpack.c.l.b16 %v177
    %v811 = vunpack.c.h.b16 %v177
    %v812 = vunpack.c.l.b16 %v178
    %v813 = vunpack.c.h.b16 %v178
    %v814 = vunpack.c.l.b16 %v179
    %v815 = vunpack.c.h.b16 %v179
    %v816 = vunpack.c.l.b16 %v180
    %v817 = vunpack.c.h.b16 %v180
    %v818 = vunpack.c.l.b16 %v181
    %v819 = vunpack.c.h.b16 %v181
    %v820 = vunpack.c.l.b16 %v182
    %v821 = vunpack.c.h.b16 %v182
    %v822 = vunpack.c.l.b16 %v183
    %v823 = vunpack.c.h.b16 %v183
    %v824 = vunpack.c.l.b16 %v184
    %v825 = vunpack.c.h.b16 %v184
    %v826 = vunpack.c.l.b16 %v185
    %v827 = vunpack.c.h.b16 %v185
    %v828 = vunpack.c.l.b16 %v186
    %v829 = vunpack.c.h.b16 %v186
    %v830 = vunpack.c.l.b16 %v187
    %v831 = vunpack.c.h.b16 %v187
    %v832 = vunpack.c.l.b16 %v188
    %v833 = vunpack.c.h.b16 %v188
    %v834 = vunpack.c.l.b16 %v189
    %v835 = vunpack.c.h.b16 %v189
    %v836 = vunpack.c.l.b16 %v190
    %v837 = vunpack.c.h.b16 %v190
    %v838 = vunpack.c.l.b16 %v191
    %v839 = vunpack.c.h.b16 %v191
    %v840 = vunpack.c.l.b16 %v192
    %v841 = vunpack.c.h.b16 %v192
    %v842 = vunpack.c.l.b16 %v193
    %v843 = vunpack.c.h.b16 %v193
    %v844 = vunpack.c.l.b16 %v194
    %v845 = vunpack.c.h.b16 %v194
    %v846 = vunpack.c.l.b16 %v195
    %v847 = vunpack.c.h.b16 %v195
    %v848 = vunpack.c.l.b16 %v196
    %v849 = vunpack.c.h.b16 %v196
    %v850 = vunpack.c.l.b16 %v197
    %v851 = vunpack.c.h.b16 %v197
    %v852 = vunpack.c.l.b16 %v198
    %v853 = vunpack.c.h.b16 %v198
    %v854 = vunpack.c.l.b16 %v199
    %v855 = vunpack.c.h.b16 %v199
    %v856 = vunpack.c.l.b16 %v200
    %v857 = vunpack.c.h.b16 %v200
    %v858 = vunpack.c.l.b16 %v201
    %v859 = vunpack.c.h.b16 %v201
    %v860 = vunpack.c.l.b16 %v202
    %v861 = vunpack.c.h.b16 %v202
    %v862 = vunpack.c.l.b16 %v203
    %v863 = vunpack.c.h.b16 %v203
    %v864 = vunpack.c.l.b16 %v204
    %v865 = vunpack.c.h.b16 %v204
    %v866 = vunpack.c.l.b16 %v205
    %v867 = vunpack.c.h.b16 %v205
    %v868 = vunpack.c.l.b16 %v206
    %v869 = vunpack.c.h.b16 %v206
    %v870 = vunpack.c.l.b16 %v207
    %v871 = vunpack.c.h.b16 %v207
    %v872 = vunpack.c.l.b16 %v208
    %v873 = vunpack.c.h.b16 %v208
    %v874 = vunpack.c.l.b16 %v209
    %v875 = vunpack.c.h.b16 %v209
    %v876 = vunpack.c.l.b16 %v210
    %v877 = vunpack.c.h.b16 %v210
    %v878 = vunpack.c.l.b16 %v211
    %v879 = vunpack.c.h.b16 %v211
    %v880 = vunpack.c.l.b16 %v212
    %v881 = vunpack.c.h.b16 %v212
    %v882 = vunpack.c.l.b16 %v213
    %v883 = vunpack.c.h.b16 %v213
    %v884 = vunpack.c.l.b16 %v214
    %v885 = vunpack.c.h.b16 %v214
    %v886 = vunpack.c.l.b16 %v215
    %v887 = vunpack.c.h.b16 %v215
    %v888 = vunpack.c.l.b16 %v216
    %v889 = vunpack.c.h.b16 %v216
    %v890 = vunpack.c.l.b16 %v217
    %v891 = vunpack.c.h.b16 %v217
    %v892 = vunpack.c.l.b16 %v218
    %v893 = vunpack.c.h.b16 %v218
    %v894 = vunpack.c.l.b16 %v219
    %v895 = vunpack.c.h.b16 %v219
    %v896 = vunpack.c.l.b16 %v220
    %v897 = vunpack.c.h.b16 %v220
    %v898 = vunpack.c.l.b16 %v221
    %v899 = vunpack.c.h.b16 %v221
    %v900 = vunpack.c.l.b16 %v222
    %v901 = vunpack.c.h.b16 %v222
    %v902 = vunpack.c.l.b16 %v223
    %v903 = vunpack.c.h.b16 %v223
    %v904 = vunpack.c.l.b16 %v224
    %v905 = vunpack.c.h.b16 %v224
    %v906 = vunpack.c.l.b16 %v225
    %v907 = vunpack.c.h.b16 %v225
    %v908 = vunpack.c.l.b16 %v226
    %v909 = vunpack.c.h.b16 %v226
    %v910 = vunpack.c.l.b16 %v227
    %v911 = vunpack.c.h.b16 %v227
    %v912 = vunpack.c.l.b16 %v228
    %v913 = vunpack.c.h.b16 %v228
    %v914 = vunpack.c.l.b16 %v229
    %v915 = vunpack.c.h.b16 %v229
    %v916 = vunpack.c.l.b16 %v230
    %v917 = vunpack.c.h.b16 %v230
    %v918 = vunpack.c.l.b16 %v231
    %v919 = vunpack.c.h.b16 %v231
    %v920 = vunpack.c.l.b16 %v232
    %v921 = vunpack.c.h.b16 %v232
    %v922 = vunpack.c.l.b16 %v233
    %v923 = vunpack.c.h.b16 %v233
    %v924 = vunpack.c.l.b16 %v234
    %v925 = vunpack.c.h.b16 %v234
    %v926 = vunpack.c.l.b16 %v235
    %v927 = vunpack.c.h.b16 %v235
    %v928 = vunpack.c.l.b16 %v236
    %v929 = vunpack.c.h.b16 %v236
    %v930 = vunpack.c.l.b16 %v237
    %v931 = vunpack.c.h.b16 %v237
    %v932 = vunpack.c.l.b16 %v238
    %v933 = vunpack.c.h.b16 %v238
    %v934 = vunpack.c.l.b16 %v239
    %v935 = vunpack.c.h.b16 %v239
    %v936 = vunpack.c.l.b16 %v240
    %v937 = vunpack.c.h.b16 %v240
    %v938 = vunpack.c.l.b16 %v241
    %v939 = vunpack.c.h.b16 %v241
    %v940 = vunpack.c.l.b16 %v242
    %v941 = vunpack.c.h.b16 %v242
    %v942 = vunpack.c.l.b16 %v243
    %v943 = vunpack.c.h.b16 %v243
    %v944 = vunpack.c.l.b16 %v244
    %v945 = vunpack.c.h.b16 %v244
    %v946 = vunpack.c.l.b16 %v245
    %v947 = vunpack.c.h.b16 %v245
    %v948 = vunpack.c.l.b16 %v246
    %v949 = vunpack.c.h.b16 %v246
    %v950 = vunpack.c.l.b16 %v247
    %v951 = vunpack.c.h.b16 %v247
    %v952 = vunpack.c.l.b16 %v248
    %v953 = vunpack.c.h.b16 %v248
    %v954 = vunpack.c.l.b16 %v249
    %v955 = vunpack.c.h.b16 %v249
    %v956 = vunpack.c.l.b16 %v250
    %v957 = vunpack.c.h.b16 %v250
    %v958 = vunpack.c.l.b16 %v251
    %v959 = vunpack.c.h.b16 %v251
    %v960 = vunpack.c.l.b16 %v252
    %v961 = vunpack.c.h.b16 %v252
    %v962 = vunpack.c.l.b16 %v253
    %v963 = vunpack.c.h.b16 %v253
    %v964 = vunpack.c.l.b16 %v254
    %v965 = vunpack.c.h.b16 %v254
    %v966 = vunpack.c.l.b16 %v255
    %v967 = vunpack.c.h.b16 %v255
    %v968 = vunpack.c.l.b16 %v256
    %v969 = vunpack.c.h.b16 %v256
    %v970 = vunpack.c.l.b16 %v257
    %v971 = vunpack.c.h.b16 %v257
    %v972 = vunpack.c.l.b16 %v258
    %v973 = vunpack.c.h.b16 %v258
    %v974 = vunpack.c.l.b16 %v259
    %v975 = vunpack.c.h.b16 %v259
    %v976 = vunpack.c.l.b16 %v260
    %v977 = vunpack.c.h.b16 %v260
    %v978 = vunpack.c.l.b16 %v261
    %v979 = vunpack.c.h.b16 %v261
    %v980 = vunpack.c.l.b16 %v262
    %v981 = vunpack.c.h.b16 %v262
    %v982 = vunpack.c.l.b16 %v263
    %v983 = vunpack.c.h.b16 %v263
    %v984 = vunpack.c.l.b16 %v264
    %v985 = vunpack.c.h.b16 %v264
    %v986 = vunpack.c.l.b16 %v265
    %v987 = vunpack.c.h.b16 %v265
    %v988 = vunpack.c.l.b16 %v266
    %v989 = vunpack.c.h.b16 %v266
    %v990 = vunpack.c.l.b16 %v267
    %v991 = vunpack.c.h.b16 %v267
    %v992 = vunpack.c.l.b16 %v268
    %v993 = vunpack.c.h.b16 %v268
    %v994 = vunpack.c.l.b16 %v269
    %v995 = vunpack.c.h.b16 %v269
    %v996 = vunpack.c.l.b16 %v270
    %v997 = vunpack.c.h.b16 %v270
    %v998 = vunpack.c.l.b16 %v271
    %v999 = vunpack.c.h.b16 %v271
    %v1000 = vunpack.c.l.b16 %v272
    %v1001 = vunpack.c.h.b16 %v272
    %v1002 = vunpack.c.l.b16 %v273
    %v1003 = vunpack.c.h.b16 %v273
    %v1004 = vunpack.c.l.b16 %v274
    %v1005 = vunpack.c.h.b16 %v274
    %v1006 = vunpack.c.l.b16 %v275
    %v1007 = vunpack.c.h.b16 %v275
    %v1008 = vunpack.c.l.b16 %v276
    %v1009 = vunpack.c.h.b16 %v276
    %v1010 = vunpack.c.l.b16 %v277
    %v1011 = vunpack.c.h.b16 %v277
    %v1012 = vunpack.c.l.b16 %v278
    %v1013 = vunpack.c.h.b16 %v278
    %v1014 = vunpack.c.l.b16 %v279
    %v1015 = vunpack.c.h.b16 %v279
    %v1016 = vpack.c.b16 %v644, %v632
    %v1017 = vpack.c.b16 %v645, %v633
    %v1018 = vpack.c.b16 %v646, %v634
    %v1019 = vpack.c.b16 %v647, %v635
    %v1020 = vpack.c.b16 %v648, %v636
    %v1021 = vpack.c.b16 %v649, %v637
    %v1022 = vpack.c.b16 %v650, %v638
    %v1023 = vpack.c.b16 %v651, %v639
    %v1024 = vpack.c.b16 %v652, %v640
    %v1025 = vpack.c.b16 %v653, %v641
    %v1026 = vpack.c.b16 %v654, %v642
    %v1027 = vpack.c.b16 %v655, %v643
    %v1028 = vpack.c.b16 %v668, %v656
    %v1029 = vpack.c.b16 %v669, %v657
    %v1030 = vpack.c.b16 %v670, %v658
    %v1031 = vpack.c.b16 %v671, %v659
    %v1032 = vpack.c.b16 %v672, %v660
    %v1033 = vpack.c.b16 %v673, %v661
    %v1034 = vpack.c.b16 %v674, %v662
    %v1035 = vpack.c.b16 %v675, %v663
    %v1036 = vpack.c.b16 %v676, %v664
    %v1037 = vpack.c.b16 %v677, %v665
    %v1038 = vpack.c.b16 %v678, %v666
    %v1039 = vpack.c.b16 %v679, %v667
    %v1040 = vpack.c.b16 %v692, %v680
    %v1041 = vpack.c.b16 %v693, %v681
    %v1042 = vpack.c.b16 %v694, %v682
    %v1043 = vpack.c.b16 %v695, %v683
    %v1044 = vpack.c.b16 %v696, %v684
    %v1045 = vpack.c.b16 %v697, %v685
    %v1046 = vpack.c.b16 %v698, %v686
    %v1047 = vpack.c.b16 %v699, %v687
    %v1048 = vpack.c.b16 %v700, %v688
    %v1049 = vpack.c.b16 %v701, %v689
    %v1050 = vpack.c.b16 %v702, %v690
    %v1051 = vpack.c.b16 %v703, %v691
    %v1052 = vpack.c.b16 %v716, %v704
    %v1053 = vpack.c.b16 %v717, %v705
    %v1054 = vpack.c.b16 %v718, %v706
    %v1055 = vpack.c.b16 %v719, %v707
    %v1056 = vpack.c.b16 %v720, %v708
    %v1057 = vpack.c.b16 %v721, %v709
    %v1058 = vpack.c.b16 %v722, %v710
    %v1059 = vpack.c.b16 %v723, %v711
    %v1060 = vpack.c.b16 %v724, %v712
    %v1061 = vpack.c.b16 %v725, %v713
    %v1062 = vpack.c.b16 %v726, %v714
    %v1063 = vpack.c.b16 %v727, %v715
    %v1064 = vpack.c.b16 %v740, %v728
    %v1065 = vpack.c.b16 %v741, %v729
    %v1066 = vpack.c.b16 %v742, %v730
    %v1067 = vpack.c.b16 %v743, %v731
    %v1068 = vpack.c.b16 %v744, %v732
    %v1069 = vpack.c.b16 %v745, %v733
    %v1070 = vpack.c.b16 %v746, %v734
    %v1071 = vpack.c.b16 %v747, %v735
    %v1072 = vpack.c.b16 %v748, %v736
    %v1073 = vpack.c.b16 %v749, %v737
    %v1074 = vpack.c.b16 %v750, %v738
    %v1075 = vpack.c.b16 %v751, %v739
    %v1076 = vpack.c.b16 %v764, %v752
    %v1077 = vpack.c.b16 %v765, %v753
    %v1078 = vpack.c.b16 %v766, %v754
    %v1079 = vpack.c.b16 %v767, %v755
    %v1080 = vpack.c.b16 %v768, %v756
    %v1081 = vpack.c.b16 %v769, %v757
    %v1082 = vpack.c.b16 %v770, %v758
    %v1083 = vpack.c.b16 %v771, %v759
    %v1084 = vpack.c.b16 %v772, %v760
    %v1085 = vpack.c.b16 %v773, %v761
    %v1086 = vpack.c.b16 %v774, %v762
    %v1087 = vpack.c.b16 %v775, %v763
    %v1088 = vpack.c.b16 %v788, %v776
    %v1089 = vpack.c.b16 %v789, %v777
    %v1090 = vpack.c.b16 %v790, %v778
    %v1091 = vpack.c.b16 %v791, %v779
    %v1092 = vpack.c.b16 %v792, %v780
    %v1093 = vpack.c.b16 %v793, %v781
    %v1094 = vpack.c.b16 %v794, %v782
    %v1095 = vpack.c.b16 %v795, %v783
    %v1096 = vpack.c.b16 %v796, %v784
    %v1097 = vpack.c.b16 %v797, %v785
    %v1098 = vpack.c.b16 %v798, %v786
    %v1099 = vpack.c.b16 %v799, %v787
    %v1100 = vpack.c.b16 %v812, %v800
    %v1101 = vpack.c.b16 %v813, %v801
    %v1102 = vpack.c.b16 %v814, %v802
    %v1103 = vpack.c.b16 %v815, %v803
    %v1104 = vpack.c.b16 %v816, %v804
    %v1105 = vpack.c.b16 %v817, %v805
    %v1106 = vpack.c.b16 %v818, %v806
    %v1107 = vpack.c.b16 %v819, %v807
    %v1108 = vpack.c.b16 %v820, %v808
    %v1109 = vpack.c.b16 %v821, %v809
    %v1110 = vpack.c.b16 %v822, %v810
    %v1111 = vpack.c.b16 %v823, %v811
    %v1112 = vpack.c.b16 %v836, %v824
    %v1113 = vpack.c.b16 %v837, %v825
    %v1114 = vpack.c.b16 %v838, %v826
    %v1115 = vpack.c.b16 %v839, %v827
    %v1116 = vpack.c.b16 %v840, %v828
    %v1117 = vpack.c.b16 %v841, %v829
    %v1118 = vpack.c.b16 %v842, %v830
    %v1119 = vpack.c.b16 %v843, %v831
    %v1120 = vpack.c.b16 %v844, %v832
    %v1121 = vpack.c.b16 %v845, %v833
    %v1122 = vpack.c.b16 %v846, %v834
    %v1123 = vpack.c.b16 %v847, %v835
    %v1124 = vpack.c.b16 %v860, %v848
    %v1125 = vpack.c.b16 %v861, %v849
    %v1126 = vpack.c.b16 %v862, %v850
    %v1127 = vpack.c.b16 %v863, %v851
    %v1128 = vpack.c.b16 %v864, %v852
    %v1129 = vpack.c.b16 %v865, %v853
    %v1130 = vpack.c.b16 %v866, %v854
    %v1131 = vpack.c.b16 %v867, %v855
    %v1132 = vpack.c.b16 %v868, %v856
    %v1133 = vpack.c.b16 %v869, %v857
    %v1134 = vpack.c.b16 %v870, %v858
    %v1135 = vpack.c.b16 %v871, %v859
    %v1136 = vpack.c.b16 %v884, %v872
    %v1137 = vpack.c.b16 %v885, %v873
    %v1138 = vpack.c.b16 %v886, %v874
    %v1139 = vpack.c.b16 %v887, %v875
    %v1140 = vpack.c.b16 %v888, %v876
    %v1141 = vpack.c.b16 %v889, %v877
    %v1142 = vpack.c.b16 %v890, %v878
    %v1143 = vpack.c.b16 %v891, %v879
    %v1144 = vpack.c.b16 %v892, %v880
    %v1145 = vpack.c.b16 %v893, %v881
    %v1146 = vpack.c.b16 %v894, %v882
    %v1147 = vpack.c.b16 %v895, %v883
    %v1148 = vpack.c.b16 %v908, %v896
    %v1149 = vpack.c.b16 %v909, %v897
    %v1150 = vpack.c.b16 %v910, %v898
    %v1151 = vpack.c.b16 %v911, %v899
    %v1152 = vpack.c.b16 %v912, %v900
    %v1153 = vpack.c.b16 %v913, %v901
    %v1154 = vpack.c.b16 %v914, %v902
    %v1155 = vpack.c.b16 %v915, %v903
    %v1156 = vpack.c.b16 %v916, %v904
    %v1157 = vpack.c.b16 %v917, %v905
    %v1158 = vpack.c.b16 %v918, %v906
    %v1159 = vpack.c.b16 %v919, %v907
    %v1160 = vpack.c.b16 %v932, %v920
    %v1161 = vpack.c.b16 %v933, %v921
    %v1162 = vpack.c.b16 %v934, %v922
    %v1163 = vpack.c.b16 %v935, %v923
    %v1164 = vpack.c.b16 %v936, %v924
    %v1165 = vpack.c.b16 %v937, %v925
    %v1166 = vpack.c.b16 %v938, %v926
    %v1167 = vpack.c.b16 %v939, %v927
    %v1168 = vpack.c.b16 %v940, %v928
    %v1169 = vpack.c.b16 %v941, %v929
    %v1170 = vpack.c.b16 %v942, %v930
    %v1171 = vpack.c.b16 %v943, %v931
    %v1172 = vpack.c.b16 %v956, %v944
    %v1173 = vpack.c.b16 %v957, %v945
    %v1174 = vpack.c.b16 %v958, %v946
    %v1175 = vpack.c.b16 %v959, %v947
    %v1176 = vpack.c.b16 %v960, %v948
    %v1177 = vpack.c.b16 %v961, %v949
    %v1178 = vpack.c.b16 %v962, %v950
    %v1179 = vpack.c.b16 %v963, %v951
    %v1180 = vpack.c.b16 %v964, %v952
    %v1181 = vpack.c.b16 %v965, %v953
    %v1182 = vpack.c.b16 %v966, %v954
    %v1183 = vpack.c.b16 %v967, %v955
    %v1184 = vpack.c.b16 %v980, %v968
    %v1185 = vpack.c.b16 %v981, %v969
    %v1186 = vpack.c.b16 %v982, %v970
    %v1187 = vpack.c.b16 %v983, %v971
    %v1188 = vpack.c.b16 %v984, %v972
    %v1189 = vpack.c.b16 %v985, %v973
    %v1190 = vpack.c.b16 %v986, %v974
    %v1191 = vpack.c.b16 %v987, %v975
    %v1192 = vpack.c.b16 %v988, %v976
    %v1193 = vpack.c.b16 %v989, %v977
    %v1194 = vpack.c.b16 %v990, %v978
    %v1195 = vpack.c.b16 %v991, %v979
    %v1196 = vpack.c.b16 %v1004, %v992
    %v1197 = vpack.c.b16 %v1005, %v993
    %v1198 = vpack.c.b16 %v1006, %v994
    %v1199 = vpack.c.b16 %v1007, %v995
    %v1200 = vpack.c.b16 %v1008, %v996
    %v1201 = vpack.c.b16 %v1009, %v997
    %v1202 = vpack.c.b16 %v1010, %v998
    %v1203 = vpack.c.b16 %v1011, %v999
    %v1204 = vpack.c.b16 %v1012, %v1000
    %v1205 = vpack.c.b16 %v1013, %v1001
    %v1206 = vpack.c.b16 %v1014, %v1002
    %v1207 = vpack.c.b16 %v1015, %v1003
    %1400 = vmatprep.subr.bf16.mxu0 %v1017
    %1401 = vmatpush1.bf16.msra.mxu0 %v1016
    %1402 = vmatprep.subr.bf16.mxu0 %v1029
    %1403 = vmatpush1.bf16.msra.mxu0 %v1028
    %1404 = vmatprep.subr.bf16.mxu0 %v1041
    %1405 = vmatpush1.bf16.msra.mxu0 %v1040
    %1406 = vmatprep.subr.bf16.mxu0 %v1053
    %1407 = vmatpush1.bf16.msra.mxu0 %v1052
    %1408 = vmatprep.subr.bf16.mxu0 %v1065
    %1409 = vmatpush1.bf16.msra.mxu0 %v1064
    %1410 = vmatprep.subr.bf16.mxu0 %v1077
    %1411 = vmatpush1.bf16.msra.mxu0 %v1076
    %1412 = vmatprep.subr.bf16.mxu0 %v1089
    %1413 = vmatpush1.bf16.msra.mxu0 %v1088
    %1414 = vmatprep.subr.bf16.mxu0 %v1101
    %1415 = vmatpush1.bf16.msra.mxu0 %v1100
    %1416 = vmatprep.subr.bf16.mxu0 %v1113
    %1417 = vmatpush1.bf16.msra.mxu0 %v1112
    %1418 = vmatprep.subr.bf16.mxu0 %v1125
    %1419 = vmatpush1.bf16.msra.mxu0 %v1124
    %1420 = vmatprep.subr.bf16.mxu0 %v1137
    %1421 = vmatpush1.bf16.msra.mxu0 %v1136
    %1422 = vmatprep.subr.bf16.mxu0 %v1149
    %1423 = vmatpush1.bf16.msra.mxu0 %v1148
    %1424 = vmatprep.subr.bf16.mxu0 %v1161
    %1425 = vmatpush1.bf16.msra.mxu0 %v1160
    %1426 = vmatprep.subr.bf16.mxu0 %v1173
    %1427 = vmatpush1.bf16.msra.mxu0 %v1172
    %1428 = vmatprep.subr.bf16.mxu0 %v1185
    %1429 = vmatpush1.bf16.msra.mxu0 %v1184
    %1430 = vmatprep.subr.bf16.mxu0 %v1197
    %1431 = vmatpush1.bf16.msra.mxu0 %v1196
    %1432 = vmatprep.mubr.bf16.mxu0 %v377
    %1433 = vmatmul.mubr.bf16.gmra.mrb[0].mxu0 %v376
    %v1434 = vpop.f32.mrb[0].mxu0
    %v1435 = vadd.f32 0.0, %v1434
    %v1436 = vpop.f32.mrb[0].mxu0
    %v1437 = vadd.f32 0.0, %v1436
    %v1438 = vpop.f32.mrb[0].mxu0
    %v1439 = vadd.f32 0.0, %v1438
    %v1440 = vpop.f32.mrb[0].mxu0
    %v1441 = vadd.f32 0.0, %v1440
    %1442 = vmatprep.mubr.bf16.mxu0 %v379
    %1443 = vmatmul.mubr.bf16.gmra.mrb[0].mxu0 %v378
    %v1444 = vpop.f32.mrb[0].mxu0
    %v1445 = vadd.f32 0.0, %v1444
    %v1446 = vpop.f32.mrb[0].mxu0
    %v1447 = vadd.f32 0.0, %v1446
    %v1448 = vpop.f32.mrb[0].mxu0
    %v1449 = vadd.f32 0.0, %v1448
    %v1450 = vpop.f32.mrb[0].mxu0
    %v1451 = vadd.f32 0.0, %v1450
    %1452 = vmatprep.mubr.bf16.mxu0 %v381
    %1453 = vmatmul.mubr.bf16.gmra.mrb[0].mxu0 %v380
    %v1454 = vpop.f32.mrb[0].mxu0
    %v1455 = vadd.f32 0.0, %v1454
    %v1456 = vpop.f32.mrb[0].mxu0
    %v1457 = vadd.f32 0.0, %v1456
    %v1458 = vpop.f32.mrb[0].mxu0
    %v1459 = vadd.f32 0.0, %v1458
    %v1460 = vpop.f32.mrb[0].mxu0
    %v1461 = vadd.f32 0.0, %v1460
    %1462 = vmatprep.mubr.bf16.mxu0 %v383
    %1463 = vmatmul.mubr.bf16.gmra.mrb[0].mxu0 %v382
    %v1464 = vpop.f32.mrb[0].mxu0
    %v1465 = vadd.f32 0.0, %v1464
    %v1466 = vpop.f32.mrb[0].mxu0
    %v1467 = vadd.f32 0.0, %v1466
    %v1468 = vpop.f32.mrb[0].mxu0
    %v1469 = vadd.f32 0.0, %v1468
    %v1470 = vpop.f32.mrb[0].mxu0
    %v1471 = vadd.f32 0.0, %v1470
    %1472 = vmatprep.mubr.bf16.mxu0 %v385
    %1473 = vmatmul.mubr.bf16.gmra.mrb[0].mxu0 %v384
    %v1474 = vpop.f32.mrb[0].mxu0
    %v1475 = vadd.f32 0.0, %v1474
    %v1476 = vpop.f32.mrb[0].mxu0
    %v1477 = vadd.f32 0.0, %v1476
    %v1478 = vpop.f32.mrb[0].mxu0
    %v1479 = vadd.f32 0.0, %v1478
    %v1480 = vpop.f32.mrb[0].mxu0
    %v1481 = vadd.f32 0.0, %v1480
    %1482 = vmatprep.mubr.bf16.mxu0 %v387
    %1483 = vmatmul.mubr.bf16.gmra.mrb[0].mxu0 %v386
    %v1484 = vpop.f32.mrb[0].mxu0
    %v1485 = vadd.f32 0.0, %v1484
    %v1486 = vpop.f32.mrb[0].mxu0
    %v1487 = vadd.f32 0.0, %v1486
    %v1488 = vpop.f32.mrb[0].mxu0
    %v1489 = vadd.f32 0.0, %v1488
    %v1490 = vpop.f32.mrb[0].mxu0
    %v1491 = vadd.f32 0.0, %v1490
    %1492 = vmatprep.mubr.bf16.mxu0 %v389
    %1493 = vmatmul.mubr.bf16.gmra.mrb[0].mxu0 %v388
    %v1494 = vpop.f32.mrb[0].mxu0
    %v1495 = vadd.f32 0.0, %v1494
    %v1496 = vpop.f32.mrb[0].mxu0
    %v1497 = vadd.f32 0.0, %v1496
    %v1498 = vpop.f32.mrb[0].mxu0
    %v1499 = vadd.f32 0.0, %v1498
    %v1500 = vpop.f32.mrb[0].mxu0
    %v1501 = vadd.f32 0.0, %v1500
    %1502 = vmatprep.mubr.bf16.mxu0 %v391
    %1503 = vmatmul.mubr.bf16.gmra.mrb[0].mxu0 %v390
    %v1504 = vpop.f32.mrb[0].mxu0
    %v1505 = vadd.f32 0.0, %v1504
    %v1506 = vpop.f32.mrb[0].mxu0
    %v1507 = vadd.f32 0.0, %v1506
    %v1508 = vpop.f32.mrb[0].mxu0
    %v1509 = vadd.f32 0.0, %v1508
    %v1510 = vpop.f32.mrb[0].mxu0
    %v1511 = vadd.f32 0.0, %v1510
    %1512 = vmatprep.mubr.bf16.mxu0 %v393
    %1513 = vmatmul.mubr.bf16.gmra.mrb[0].mxu0 %v392
    %v1514 = vpop.f32.mrb[0].mxu0
    %v1515 = vadd.f32 0.0, %v1514
    %v1516 = vpop.f32.mrb[0].mxu0
    %v1517 = vadd.f32 0.0, %v1516
    %v1518 = vpop.f32.mrb[0].mxu0
    %v1519 = vadd.f32 0.0, %v1518
    %v1520 = vpop.f32.mrb[0].mxu0
    %v1521 = vadd.f32 0.0, %v1520
    %1522 = vmatprep.mubr.bf16.mxu0 %v395
    %1523 = vmatmul.mubr.bf16.gmra.mrb[0].mxu0 %v394
    %v1524 = vpop.f32.mrb[0].mxu0
    %v1525 = vadd.f32 0.0, %v1524
    %v1526 = vpop.f32.mrb[0].mxu0
    %v1527 = vadd.f32 0.0, %v1526
    %v1528 = vpop.f32.mrb[0].mxu0
    %v1529 = vadd.f32 0.0, %v1528
    %v1530 = vpop.f32.mrb[0].mxu0
    %v1531 = vadd.f32 0.0, %v1530
    %1532 = vmatprep.mubr.bf16.mxu0 %v397
    %1533 = vmatmul.mubr.bf16.gmra.mrb[0].mxu0 %v396
    %v1534 = vpop.f32.mrb[0].mxu0
    %v1535 = vadd.f32 0.0, %v1534
    %v1536 = vpop.f32.mrb[0].mxu0
    %v1537 = vadd.f32 0.0, %v1536
    %v1538 = vpop.f32.mrb[0].mxu0
    %v1539 = vadd.f32 0.0, %v1538
    %v1540 = vpop.f32.mrb[0].mxu0
    %v1541 = vadd.f32 0.0, %v1540
    %1542 = vmatprep.mubr.bf16.mxu0 %v399
    %1543 = vmatmul.mubr.bf16.gmra.mrb[0].mxu0 %v398
    %v1544 = vpop.f32.mrb[0].mxu0
    %v1545 = vadd.f32 0.0, %v1544
    %v1546 = vpop.f32.mrb[0].mxu0
    %v1547 = vadd.f32 0.0, %v1546
    %v1548 = vpop.f32.mrb[0].mxu0
    %v1549 = vadd.f32 0.0, %v1548
    %v1550 = vpop.f32.mrb[0].mxu0
    %v1551 = vadd.f32 0.0, %v1550
    %1552 = vmatprep.mubr.bf16.mxu0 %v401
    %1553 = vmatmul.mubr.bf16.gmra.mrb[0].mxu0 %v400
    %v1554 = vpop.f32.mrb[0].mxu0
    %v1555 = vadd.f32 0.0, %v1554
    %v1556 = vpop.f32.mrb[0].mxu0
    %v1557 = vadd.f32 0.0, %v1556
    %v1558 = vpop.f32.mrb[0].mxu0
    %v1559 = vadd.f32 0.0, %v1558
    %v1560 = vpop.f32.mrb[0].mxu0
    %v1561 = vadd.f32 0.0, %v1560
    %1562 = vmatprep.mubr.bf16.mxu0 %v403
    %1563 = vmatmul.mubr.bf16.gmra.mrb[0].mxu0 %v402
    %v1564 = vpop.f32.mrb[0].mxu0
    %v1565 = vadd.f32 0.0, %v1564
    %v1566 = vpop.f32.mrb[0].mxu0
    %v1567 = vadd.f32 0.0, %v1566
    %v1568 = vpop.f32.mrb[0].mxu0
    %v1569 = vadd.f32 0.0, %v1568
    %v1570 = vpop.f32.mrb[0].mxu0
    %v1571 = vadd.f32 0.0, %v1570
    %1572 = vmatprep.mubr.bf16.mxu0 %v405
    %1573 = vmatmul.mubr.bf16.gmra.mrb[0].mxu0 %v404
    %v1574 = vpop.f32.mrb[0].mxu0
    %v1575 = vadd.f32 0.0, %v1574
    %v1576 = vpop.f32.mrb[0].mxu0
    %v1577 = vadd.f32 0.0, %v1576
    %v1578 = vpop.f32.mrb[0].mxu0
    %v1579 = vadd.f32 0.0, %v1578
    %v1580 = vpop.f32.mrb[0].mxu0
    %v1581 = vadd.f32 0.0, %v1580
    %1582 = vmatprep.mubr.bf16.mxu0 %v407
    %1583 = vmatmul.mubr.bf16.gmra.mrb[0].mxu0 %v406
    %v1584 = vpop.f32.mrb[0].mxu0
    %v1585 = vadd.f32 0.0, %v1584
    %v1586 = vpop.f32.mrb[0].mxu0
    %v1587 = vadd.f32 0.0, %v1586
    %v1588 = vpop.f32.mrb[0].mxu0
    %v1589 = vadd.f32 0.0, %v1588
    %v1590 = vpop.f32.mrb[0].mxu0
    %v1591 = vadd.f32 0.0, %v1590
    %1592 = vdwg.mxu0
    %1593 = vmatprep.subr.bf16.mxu0 %v1019
    %1594 = vmatpush1.bf16.msra.mxu0 %v1018
    %1595 = vmatprep.subr.bf16.mxu0 %v1031
    %1596 = vmatpush1.bf16.msra.mxu0 %v1030
    %1597 = vmatprep.subr.bf16.mxu0 %v1043
    %1598 = vmatpush1.bf16.msra.mxu0 %v1042
    %1599 = vmatprep.subr.bf16.mxu0 %v1055
    %1600 = vmatpush1.bf16.msra.mxu0 %v1054
    %1601 = vmatprep.subr.bf16.mxu0 %v1067
    %1602 = vmatpush1.bf16.msra.mxu0 %v1066
    %1603 = vmatprep.subr.bf16.mxu0 %v1079
    %1604 = vmatpush1.bf16.msra.mxu0 %v1078
    %1605 = vmatprep.subr.bf16.mxu0 %v1091
    %1606 = vmatpush1.bf16.msra.mxu0 %v1090
    %1607 = vmatprep.subr.bf16.mxu0 %v1103
    %1608 = vmatpush1.bf16.msra.mxu0 %v1102
    %1609 = vmatprep.subr.bf16.mxu0 %v1115
    %1610 = vmatpush1.bf16.msra.mxu0 %v1114
    %1611 = vmatprep.subr.bf16.mxu0 %v1127
    %1612 = vmatpush1.bf16.msra.mxu0 %v1126
    %1613 = vmatprep.subr.bf16.mxu0 %v1139
    %1614 = vmatpush1.bf16.msra.mxu0 %v1138
    %1615 = vmatprep.subr.bf16.mxu0 %v1151
    %1616 = vmatpush1.bf16.msra.mxu0 %v1150
    %1617 = vmatprep.subr.bf16.mxu0 %v1163
    %1618 = vmatpush1.bf16.msra.mxu0 %v1162
    %1619 = vmatprep.subr.bf16.mxu0 %v1175
    %1620 = vmatpush1.bf16.msra.mxu0 %v1174
    %1621 = vmatprep.subr.bf16.mxu0 %v1187
    %1622 = vmatpush1.bf16.msra.mxu0 %v1186
    %1623 = vmatprep.subr.bf16.mxu0 %v1199
    %1624 = vmatpush1.bf16.msra.mxu0 %v1198
    %1625 = vmatprep.mubr.bf16.mxu0 %v377
    %1626 = vmatmul.mubr.bf16.gmra.mrb[0].mxu0 %v376
    %v1627 = vpop.f32.mrb[0].mxu0
    %v1628 = vadd.f32 0.0, %v1627
    %v1629 = vpop.f32.mrb[0].mxu0
    %v1630 = vadd.f32 0.0, %v1629
    %v1631 = vpop.f32.mrb[0].mxu0
    %v1632 = vadd.f32 0.0, %v1631
    %v1633 = vpop.f32.mrb[0].mxu0
    %v1634 = vadd.f32 0.0, %v1633
    %1635 = vmatprep.mubr.bf16.mxu0 %v379
    %1636 = vmatmul.mubr.bf16.gmra.mrb[0].mxu0 %v378
    %v1637 = vpop.f32.mrb[0].mxu0
    %v1638 = vadd.f32 0.0, %v1637
    %v1639 = vpop.f32.mrb[0].mxu0
    %v1640 = vadd.f32 0.0, %v1639
    %v1641 = vpop.f32.mrb[0].mxu0
    %v1642 = vadd.f32 0.0, %v1641
    %v1643 = vpop.f32.mrb[0].mxu0
    %v1644 = vadd.f32 0.0, %v1643
    %1645 = vmatprep.mubr.bf16.mxu0 %v381
    %1646 = vmatmul.mubr.bf16.gmra.mrb[0].mxu0 %v380
    %v1647 = vpop.f32.mrb[0].mxu0
    %v1648 = vadd.f32 0.0, %v1647
    %v1649 = vpop.f32.mrb[0].mxu0
    %v1650 = vadd.f32 0.0, %v1649
    %v1651 = vpop.f32.mrb[0].mxu0
    %v1652 = vadd.f32 0.0, %v1651
    %v1653 = vpop.f32.mrb[0].mxu0
    %v1654 = vadd.f32 0.0, %v1653
    %1655 = vmatprep.mubr.bf16.mxu0 %v383
    %1656 = vmatmul.mubr.bf16.gmra.mrb[0].mxu0 %v382
    %v1657 = vpop.f32.mrb[0].mxu0
    %v1658 = vadd.f32 0.0, %v1657
    %v1659 = vpop.f32.mrb[0].mxu0
    %v1660 = vadd.f32 0.0, %v1659
    %v1661 = vpop.f32.mrb[0].mxu0
    %v1662 = vadd.f32 0.0, %v1661
    %v1663 = vpop.f32.mrb[0].mxu0
    %v1664 = vadd.f32 0.0, %v1663
    %1665 = vmatprep.mubr.bf16.mxu0 %v385
    %1666 = vmatmul.mubr.bf16.gmra.mrb[0].mxu0 %v384
    %v1667 = vpop.f32.mrb[0].mxu0
    %v1668 = vadd.f32 0.0, %v1667
    %v1669 = vpop.f32.mrb[0].mxu0
    %v1670 = vadd.f32 0.0, %v1669
    %v1671 = vpop.f32.mrb[0].mxu0
    %v1672 = vadd.f32 0.0, %v1671
    %v1673 = vpop.f32.mrb[0].mxu0
    %v1674 = vadd.f32 0.0, %v1673
    %1675 = vmatprep.mubr.bf16.mxu0 %v387
    %1676 = vmatmul.mubr.bf16.gmra.mrb[0].mxu0 %v386
    %v1677 = vpop.f32.mrb[0].mxu0
    %v1678 = vadd.f32 0.0, %v1677
    %v1679 = vpop.f32.mrb[0].mxu0
    %v1680 = vadd.f32 0.0, %v1679
    %v1681 = vpop.f32.mrb[0].mxu0
    %v1682 = vadd.f32 0.0, %v1681
    %v1683 = vpop.f32.mrb[0].mxu0
    %v1684 = vadd.f32 0.0, %v1683
    %1685 = vmatprep.mubr.bf16.mxu0 %v389
    %1686 = vmatmul.mubr.bf16.gmra.mrb[0].mxu0 %v388
    %v1687 = vpop.f32.mrb[0].mxu0
    %v1688 = vadd.f32 0.0, %v1687
    %v1689 = vpop.f32.mrb[0].mxu0
    %v1690 = vadd.f32 0.0, %v1689
    %v1691 = vpop.f32.mrb[0].mxu0
    %v1692 = vadd.f32 0.0, %v1691
    %v1693 = vpop.f32.mrb[0].mxu0
    %v1694 = vadd.f32 0.0, %v1693
    %1695 = vmatprep.mubr.bf16.mxu0 %v391
    %1696 = vmatmul.mubr.bf16.gmra.mrb[0].mxu0 %v390
    %v1697 = vpop.f32.mrb[0].mxu0
    %v1698 = vadd.f32 0.0, %v1697
    %v1699 = vpop.f32.mrb[0].mxu0
    %v1700 = vadd.f32 0.0, %v1699
    %v1701 = vpop.f32.mrb[0].mxu0
    %v1702 = vadd.f32 0.0, %v1701
    %v1703 = vpop.f32.mrb[0].mxu0
    %v1704 = vadd.f32 0.0, %v1703
    %1705 = vmatprep.mubr.bf16.mxu0 %v393
    %1706 = vmatmul.mubr.bf16.gmra.mrb[0].mxu0 %v392
    %v1707 = vpop.f32.mrb[0].mxu0
    %v1708 = vadd.f32 0.0, %v1707
    %v1709 = vpop.f32.mrb[0].mxu0
    %v1710 = vadd.f32 0.0, %v1709
    %v1711 = vpop.f32.mrb[0].mxu0
    %v1712 = vadd.f32 0.0, %v1711
    %v1713 = vpop.f32.mrb[0].mxu0
    %v1714 = vadd.f32 0.0, %v1713
    %1715 = vmatprep.mubr.bf16.mxu0 %v395
    %1716 = vmatmul.mubr.bf16.gmra.mrb[0].mxu0 %v394
    %v1717 = vpop.f32.mrb[0].mxu0
    %v1718 = vadd.f32 0.0, %v1717
    %v1719 = vpop.f32.mrb[0].mxu0
    %v1720 = vadd.f32 0.0, %v1719
    %v1721 = vpop.f32.mrb[0].mxu0
    %v1722 = vadd.f32 0.0, %v1721
    %v1723 = vpop.f32.mrb[0].mxu0
    %v1724 = vadd.f32 0.0, %v1723
    %1725 = vmatprep.mubr.bf16.mxu0 %v397
    %1726 = vmatmul.mubr.bf16.gmra.mrb[0].mxu0 %v396
    %v1727 = vpop.f32.mrb[0].mxu0
    %v1728 = vadd.f32 0.0, %v1727
    %v1729 = vpop.f32.mrb[0].mxu0
    %v1730 = vadd.f32 0.0, %v1729
    %v1731 = vpop.f32.mrb[0].mxu0
    %v1732 = vadd.f32 0.0, %v1731
    %v1733 = vpop.f32.mrb[0].mxu0
    %v1734 = vadd.f32 0.0, %v1733
    %1735 = vmatprep.mubr.bf16.mxu0 %v399
    %1736 = vmatmul.mubr.bf16.gmra.mrb[0].mxu0 %v398
    %v1737 = vpop.f32.mrb[0].mxu0
    %v1738 = vadd.f32 0.0, %v1737
    %v1739 = vpop.f32.mrb[0].mxu0
    %v1740 = vadd.f32 0.0, %v1739
    %v1741 = vpop.f32.mrb[0].mxu0
    %v1742 = vadd.f32 0.0, %v1741
    %v1743 = vpop.f32.mrb[0].mxu0
    %v1744 = vadd.f32 0.0, %v1743
    %1745 = vmatprep.mubr.bf16.mxu0 %v401
    %1746 = vmatmul.mubr.bf16.gmra.mrb[0].mxu0 %v400
    %v1747 = vpop.f32.mrb[0].mxu0
    %v1748 = vadd.f32 0.0, %v1747
    %v1749 = vpop.f32.mrb[0].mxu0
    %v1750 = vadd.f32 0.0, %v1749
    %v1751 = vpop.f32.mrb[0].mxu0
    %v1752 = vadd.f32 0.0, %v1751
    %v1753 = vpop.f32.mrb[0].mxu0
    %v1754 = vadd.f32 0.0, %v1753
    %1755 = vmatprep.mubr.bf16.mxu0 %v403
    %1756 = vmatmul.mubr.bf16.gmra.mrb[0].mxu0 %v402
    %v1757 = vpop.f32.mrb[0].mxu0
    %v1758 = vadd.f32 0.0, %v1757
    %v1759 = vpop.f32.mrb[0].mxu0
    %v1760 = vadd.f32 0.0, %v1759
    %v1761 = vpop.f32.mrb[0].mxu0
    %v1762 = vadd.f32 0.0, %v1761
    %v1763 = vpop.f32.mrb[0].mxu0
    %v1764 = vadd.f32 0.0, %v1763
    %1765 = vmatprep.mubr.bf16.mxu0 %v405
    %1766 = vmatmul.mubr.bf16.gmra.mrb[0].mxu0 %v404
    %v1767 = vpop.f32.mrb[0].mxu0
    %v1768 = vadd.f32 0.0, %v1767
    %v1769 = vpop.f32.mrb[0].mxu0
    %v1770 = vadd.f32 0.0, %v1769
    %v1771 = vpop.f32.mrb[0].mxu0
    %v1772 = vadd.f32 0.0, %v1771
    %v1773 = vpop.f32.mrb[0].mxu0
    %v1774 = vadd.f32 0.0, %v1773
    %1775 = vmatprep.mubr.bf16.mxu0 %v407
    %1776 = vmatmul.mubr.bf16.gmra.mrb[0].mxu0 %v406
    %v1777 = vpop.f32.mrb[0].mxu0
    %v1778 = vadd.f32 0.0, %v1777
    %v1779 = vpop.f32.mrb[0].mxu0
    %v1780 = vadd.f32 0.0, %v1779
    %v1781 = vpop.f32.mrb[0].mxu0
    %v1782 = vadd.f32 0.0, %v1781
    %v1783 = vpop.f32.mrb[0].mxu0
    %v1784 = vadd.f32 0.0, %v1783
    %1785 = vdwg.mxu0
    %1786 = vmatprep.subr.bf16.mxu0 %v1021
    %1787 = vmatpush1.bf16.msra.mxu0 %v1020
    %1788 = vmatprep.subr.bf16.mxu0 %v1033
    %1789 = vmatpush1.bf16.msra.mxu0 %v1032
    %1790 = vmatprep.subr.bf16.mxu0 %v1045
    %1791 = vmatpush1.bf16.msra.mxu0 %v1044
    %1792 = vmatprep.subr.bf16.mxu0 %v1057
    %1793 = vmatpush1.bf16.msra.mxu0 %v1056
    %1794 = vmatprep.subr.bf16.mxu0 %v1069
    %1795 = vmatpush1.bf16.msra.mxu0 %v1068
    %1796 = vmatprep.subr.bf16.mxu0 %v1081
    %1797 = vmatpush1.bf16.msra.mxu0 %v1080
    %1798 = vmatprep.subr.bf16.mxu0 %v1093
    %1799 = vmatpush1.bf16.msra.mxu0 %v1092
    %1800 = vmatprep.subr.bf16.mxu0 %v1105
    %1801 = vmatpush1.bf16.msra.mxu0 %v1104
    %1802 = vmatprep.subr.bf16.mxu0 %v1117
    %1803 = vmatpush1.bf16.msra.mxu0 %v1116
    %1804 = vmatprep.subr.bf16.mxu0 %v1129
    %1805 = vmatpush1.bf16.msra.mxu0 %v1128
    %1806 = vmatprep.subr.bf16.mxu0 %v1141
    %1807 = vmatpush1.bf16.msra.mxu0 %v1140
    %1808 = vmatprep.subr.bf16.mxu0 %v1153
    %1809 = vmatpush1.bf16.msra.mxu0 %v1152
    %1810 = vmatprep.subr.bf16.mxu0 %v1165
    %1811 = vmatpush1.bf16.msra.mxu0 %v1164
    %1812 = vmatprep.subr.bf16.mxu0 %v1177
    %1813 = vmatpush1.bf16.msra.mxu0 %v1176
    %1814 = vmatprep.subr.bf16.mxu0 %v1189
    %1815 = vmatpush1.bf16.msra.mxu0 %v1188
    %1816 = vmatprep.subr.bf16.mxu0 %v1201
    %1817 = vmatpush1.bf16.msra.mxu0 %v1200
    %1818 = vmatprep.mubr.bf16.mxu0 %v377
    %1819 = vmatmul.mubr.bf16.gmra.mrb[0].mxu0 %v376
    %v1820 = vpop.f32.mrb[0].mxu0
    %v1821 = vadd.f32 0.0, %v1820
    %v1822 = vpop.f32.mrb[0].mxu0
    %v1823 = vadd.f32 0.0, %v1822
    %v1824 = vpop.f32.mrb[0].mxu0
    %v1825 = vadd.f32 0.0, %v1824
    %v1826 = vpop.f32.mrb[0].mxu0
    %v1827 = vadd.f32 0.0, %v1826
    %1828 = vmatprep.mubr.bf16.mxu0 %v379
    %1829 = vmatmul.mubr.bf16.gmra.mrb[0].mxu0 %v378
    %v1830 = vpop.f32.mrb[0].mxu0
    %v1831 = vadd.f32 0.0, %v1830
    %v1832 = vpop.f32.mrb[0].mxu0
    %v1833 = vadd.f32 0.0, %v1832
    %v1834 = vpop.f32.mrb[0].mxu0
    %v1835 = vadd.f32 0.0, %v1834
    %v1836 = vpop.f32.mrb[0].mxu0
    %v1837 = vadd.f32 0.0, %v1836
    %1838 = vmatprep.mubr.bf16.mxu0 %v381
    %1839 = vmatmul.mubr.bf16.gmra.mrb[0].mxu0 %v380
    %v1840 = vpop.f32.mrb[0].mxu0
    %v1841 = vadd.f32 0.0, %v1840
    %v1842 = vpop.f32.mrb[0].mxu0
    %v1843 = vadd.f32 0.0, %v1842
    %v1844 = vpop.f32.mrb[0].mxu0
    %v1845 = vadd.f32 0.0, %v1844
    %v1846 = vpop.f32.mrb[0].mxu0
    %v1847 = vadd.f32 0.0, %v1846
    %1848 = vmatprep.mubr.bf16.mxu0 %v383
    %1849 = vmatmul.mubr.bf16.gmra.mrb[0].mxu0 %v382
    %v1850 = vpop.f32.mrb[0].mxu0
    %v1851 = vadd.f32 0.0, %v1850
    %v1852 = vpop.f32.mrb[0].mxu0
    %v1853 = vadd.f32 0.0, %v1852
    %v1854 = vpop.f32.mrb[0].mxu0
    %v1855 = vadd.f32 0.0, %v1854
    %v1856 = vpop.f32.mrb[0].mxu0
    %v1857 = vadd.f32 0.0, %v1856
    %1858 = vmatprep.mubr.bf16.mxu0 %v385
    %1859 = vmatmul.mubr.bf16.gmra.mrb[0].mxu0 %v384
    %v1860 = vpop.f32.mrb[0].mxu0
    %v1861 = vadd.f32 0.0, %v1860
    %v1862 = vpop.f32.mrb[0].mxu0
    %v1863 = vadd.f32 0.0, %v1862
    %v1864 = vpop.f32.mrb[0].mxu0
    %v1865 = vadd.f32 0.0, %v1864
    %v1866 = vpop.f32.mrb[0].mxu0
    %v1867 = vadd.f32 0.0, %v1866
    %1868 = vmatprep.mubr.bf16.mxu0 %v387
    %1869 = vmatmul.mubr.bf16.gmra.mrb[0].mxu0 %v386
    %v1870 = vpop.f32.mrb[0].mxu0
    %v1871 = vadd.f32 0.0, %v1870
    %v1872 = vpop.f32.mrb[0].mxu0
    %v1873 = vadd.f32 0.0, %v1872
    %v1874 = vpop.f32.mrb[0].mxu0
    %v1875 = vadd.f32 0.0, %v1874
    %v1876 = vpop.f32.mrb[0].mxu0
    %v1877 = vadd.f32 0.0, %v1876
    %1878 = vmatprep.mubr.bf16.mxu0 %v389
    %1879 = vmatmul.mubr.bf16.gmra.mrb[0].mxu0 %v388
    %v1880 = vpop.f32.mrb[0].mxu0
    %v1881 = vadd.f32 0.0, %v1880
    %v1882 = vpop.f32.mrb[0].mxu0
    %v1883 = vadd.f32 0.0, %v1882
    %v1884 = vpop.f32.mrb[0].mxu0
    %v1885 = vadd.f32 0.0, %v1884
    %v1886 = vpop.f32.mrb[0].mxu0
    %v1887 = vadd.f32 0.0, %v1886
    %1888 = vmatprep.mubr.bf16.mxu0 %v391
    %1889 = vmatmul.mubr.bf16.gmra.mrb[0].mxu0 %v390
    %v1890 = vpop.f32.mrb[0].mxu0
    %v1891 = vadd.f32 0.0, %v1890
    %v1892 = vpop.f32.mrb[0].mxu0
    %v1893 = vadd.f32 0.0, %v1892
    %v1894 = vpop.f32.mrb[0].mxu0
    %v1895 = vadd.f32 0.0, %v1894
    %v1896 = vpop.f32.mrb[0].mxu0
    %v1897 = vadd.f32 0.0, %v1896
    %1898 = vmatprep.mubr.bf16.mxu0 %v393
    %1899 = vmatmul.mubr.bf16.gmra.mrb[0].mxu0 %v392
    %v1900 = vpop.f32.mrb[0].mxu0
    %v1901 = vadd.f32 0.0, %v1900
    %v1902 = vpop.f32.mrb[0].mxu0
    %v1903 = vadd.f32 0.0, %v1902
    %v1904 = vpop.f32.mrb[0].mxu0
    %v1905 = vadd.f32 0.0, %v1904
    %v1906 = vpop.f32.mrb[0].mxu0
    %v1907 = vadd.f32 0.0, %v1906
    %1908 = vmatprep.mubr.bf16.mxu0 %v395
    %1909 = vmatmul.mubr.bf16.gmra.mrb[0].mxu0 %v394
    %v1910 = vpop.f32.mrb[0].mxu0
    %v1911 = vadd.f32 0.0, %v1910
    %v1912 = vpop.f32.mrb[0].mxu0
    %v1913 = vadd.f32 0.0, %v1912
    %v1914 = vpop.f32.mrb[0].mxu0
    %v1915 = vadd.f32 0.0, %v1914
    %v1916 = vpop.f32.mrb[0].mxu0
    %v1917 = vadd.f32 0.0, %v1916
    %1918 = vmatprep.mubr.bf16.mxu0 %v397
    %1919 = vmatmul.mubr.bf16.gmra.mrb[0].mxu0 %v396
    %v1920 = vpop.f32.mrb[0].mxu0
    %v1921 = vadd.f32 0.0, %v1920
    %v1922 = vpop.f32.mrb[0].mxu0
    %v1923 = vadd.f32 0.0, %v1922
    %v1924 = vpop.f32.mrb[0].mxu0
    %v1925 = vadd.f32 0.0, %v1924
    %v1926 = vpop.f32.mrb[0].mxu0
    %v1927 = vadd.f32 0.0, %v1926
    %1928 = vmatprep.mubr.bf16.mxu0 %v399
    %1929 = vmatmul.mubr.bf16.gmra.mrb[0].mxu0 %v398
    %v1930 = vpop.f32.mrb[0].mxu0
    %v1931 = vadd.f32 0.0, %v1930
    %v1932 = vpop.f32.mrb[0].mxu0
    %v1933 = vadd.f32 0.0, %v1932
    %v1934 = vpop.f32.mrb[0].mxu0
    %v1935 = vadd.f32 0.0, %v1934
    %v1936 = vpop.f32.mrb[0].mxu0
    %v1937 = vadd.f32 0.0, %v1936
    %1938 = vmatprep.mubr.bf16.mxu0 %v401
    %1939 = vmatmul.mubr.bf16.gmra.mrb[0].mxu0 %v400
    %v1940 = vpop.f32.mrb[0].mxu0
    %v1941 = vadd.f32 0.0, %v1940
    %v1942 = vpop.f32.mrb[0].mxu0
    %v1943 = vadd.f32 0.0, %v1942
    %v1944 = vpop.f32.mrb[0].mxu0
    %v1945 = vadd.f32 0.0, %v1944
    %v1946 = vpop.f32.mrb[0].mxu0
    %v1947 = vadd.f32 0.0, %v1946
    %1948 = vmatprep.mubr.bf16.mxu0 %v403
    %1949 = vmatmul.mubr.bf16.gmra.mrb[0].mxu0 %v402
    %v1950 = vpop.f32.mrb[0].mxu0
    %v1951 = vadd.f32 0.0, %v1950
    %v1952 = vpop.f32.mrb[0].mxu0
    %v1953 = vadd.f32 0.0, %v1952
    %v1954 = vpop.f32.mrb[0].mxu0
    %v1955 = vadd.f32 0.0, %v1954
    %v1956 = vpop.f32.mrb[0].mxu0
    %v1957 = vadd.f32 0.0, %v1956
    %1958 = vmatprep.mubr.bf16.mxu0 %v405
    %1959 = vmatmul.mubr.bf16.gmra.mrb[0].mxu0 %v404
    %v1960 = vpop.f32.mrb[0].mxu0
    %v1961 = vadd.f32 0.0, %v1960
    %v1962 = vpop.f32.mrb[0].mxu0
    %v1963 = vadd.f32 0.0, %v1962
    %v1964 = vpop.f32.mrb[0].mxu0
    %v1965 = vadd.f32 0.0, %v1964
    %v1966 = vpop.f32.mrb[0].mxu0
    %v1967 = vadd.f32 0.0, %v1966
    %1968 = vmatprep.mubr.bf16.mxu0 %v407
    %1969 = vmatmul.mubr.bf16.gmra.mrb[0].mxu0 %v406
    %v1970 = vpop.f32.mrb[0].mxu0
    %v1971 = vadd.f32 0.0, %v1970
    %v1972 = vpop.f32.mrb[0].mxu0
    %v1973 = vadd.f32 0.0, %v1972
    %v1974 = vpop.f32.mrb[0].mxu0
    %v1975 = vadd.f32 0.0, %v1974
    %v1976 = vpop.f32.mrb[0].mxu0
    %v1977 = vadd.f32 0.0, %v1976
    %1978 = vdwg.mxu0
    %1979 = vmatprep.subr.bf16.mxu0 %v1023
    %1980 = vmatpush1.bf16.msra.mxu0 %v1022
    %1981 = vmatprep.subr.bf16.mxu0 %v1035
    %1982 = vmatpush1.bf16.msra.mxu0 %v1034
    %1983 = vmatprep.subr.bf16.mxu0 %v1047
    %1984 = vmatpush1.bf16.msra.mxu0 %v1046
    %1985 = vmatprep.subr.bf16.mxu0 %v1059
    %1986 = vmatpush1.bf16.msra.mxu0 %v1058
    %1987 = vmatprep.subr.bf16.mxu0 %v1071
    %1988 = vmatpush1.bf16.msra.mxu0 %v1070
    %1989 = vmatprep.subr.bf16.mxu0 %v1083
    %1990 = vmatpush1.bf16.msra.mxu0 %v1082
    %1991 = vmatprep.subr.bf16.mxu0 %v1095
    %1992 = vmatpush1.bf16.msra.mxu0 %v1094
    %1993 = vmatprep.subr.bf16.mxu0 %v1107
    %1994 = vmatpush1.bf16.msra.mxu0 %v1106
    %1995 = vmatprep.subr.bf16.mxu0 %v1119
    %1996 = vmatpush1.bf16.msra.mxu0 %v1118
    %1997 = vmatprep.subr.bf16.mxu0 %v1131
    %1998 = vmatpush1.bf16.msra.mxu0 %v1130
    %1999 = vmatprep.subr.bf16.mxu0 %v1143
    %2000 = vmatpush1.bf16.msra.mxu0 %v1142
    %2001 = vmatprep.subr.bf16.mxu0 %v1155
    %2002 = vmatpush1.bf16.msra.mxu0 %v1154
    %2003 = vmatprep.subr.bf16.mxu0 %v1167
    %2004 = vmatpush1.bf16.msra.mxu0 %v1166
    %2005 = vmatprep.subr.bf16.mxu0 %v1179
    %2006 = vmatpush1.bf16.msra.mxu0 %v1178
    %2007 = vmatprep.subr.bf16.mxu0 %v1191
    %2008 = vmatpush1.bf16.msra.mxu0 %v1190
    %2009 = vmatprep.subr.bf16.mxu0 %v1203
    %2010 = vmatpush1.bf16.msra.mxu0 %v1202
    %2011 = vmatprep.mubr.bf16.mxu0 %v377
    %2012 = vmatmul.mubr.bf16.gmra.mrb[0].mxu0 %v376
    %v2013 = vpop.f32.mrb[0].mxu0
    %v2014 = vadd.f32 0.0, %v2013
    %v2015 = vpop.f32.mrb[0].mxu0
    %v2016 = vadd.f32 0.0, %v2015
    %v2017 = vpop.f32.mrb[0].mxu0
    %v2018 = vadd.f32 0.0, %v2017
    %v2019 = vpop.f32.mrb[0].mxu0
    %v2020 = vadd.f32 0.0, %v2019
    %2021 = vmatprep.mubr.bf16.mxu0 %v379
    %2022 = vmatmul.mubr.bf16.gmra.mrb[0].mxu0 %v378
    %v2023 = vpop.f32.mrb[0].mxu0
    %v2024 = vadd.f32 0.0, %v2023
    %v2025 = vpop.f32.mrb[0].mxu0
    %v2026 = vadd.f32 0.0, %v2025
    %v2027 = vpop.f32.mrb[0].mxu0
    %v2028 = vadd.f32 0.0, %v2027
    %v2029 = vpop.f32.mrb[0].mxu0
    %v2030 = vadd.f32 0.0, %v2029
    %2031 = vmatprep.mubr.bf16.mxu0 %v381
    %2032 = vmatmul.mubr.bf16.gmra.mrb[0].mxu0 %v380
    %v2033 = vpop.f32.mrb[0].mxu0
    %v2034 = vadd.f32 0.0, %v2033
    %v2035 = vpop.f32.mrb[0].mxu0
    %v2036 = vadd.f32 0.0, %v2035
    %v2037 = vpop.f32.mrb[0].mxu0
    %v2038 = vadd.f32 0.0, %v2037
    %v2039 = vpop.f32.mrb[0].mxu0
    %v2040 = vadd.f32 0.0, %v2039
    %2041 = vmatprep.mubr.bf16.mxu0 %v383
    %2042 = vmatmul.mubr.bf16.gmra.mrb[0].mxu0 %v382
    %v2043 = vpop.f32.mrb[0].mxu0
    %v2044 = vadd.f32 0.0, %v2043
    %v2045 = vpop.f32.mrb[0].mxu0
    %v2046 = vadd.f32 0.0, %v2045
    %v2047 = vpop.f32.mrb[0].mxu0
    %v2048 = vadd.f32 0.0, %v2047
    %v2049 = vpop.f32.mrb[0].mxu0
    %v2050 = vadd.f32 0.0, %v2049
    %2051 = vmatprep.mubr.bf16.mxu0 %v385
    %2052 = vmatmul.mubr.bf16.gmra.mrb[0].mxu0 %v384
    %v2053 = vpop.f32.mrb[0].mxu0
    %v2054 = vadd.f32 0.0, %v2053
    %v2055 = vpop.f32.mrb[0].mxu0
    %v2056 = vadd.f32 0.0, %v2055
    %v2057 = vpop.f32.mrb[0].mxu0
    %v2058 = vadd.f32 0.0, %v2057
    %v2059 = vpop.f32.mrb[0].mxu0
    %v2060 = vadd.f32 0.0, %v2059
    %2061 = vmatprep.mubr.bf16.mxu0 %v387
    %2062 = vmatmul.mubr.bf16.gmra.mrb[0].mxu0 %v386
    %v2063 = vpop.f32.mrb[0].mxu0
    %v2064 = vadd.f32 0.0, %v2063
    %v2065 = vpop.f32.mrb[0].mxu0
    %v2066 = vadd.f32 0.0, %v2065
    %v2067 = vpop.f32.mrb[0].mxu0
    %v2068 = vadd.f32 0.0, %v2067
    %v2069 = vpop.f32.mrb[0].mxu0
    %v2070 = vadd.f32 0.0, %v2069
    %2071 = vmatprep.mubr.bf16.mxu0 %v389
    %2072 = vmatmul.mubr.bf16.gmra.mrb[0].mxu0 %v388
    %v2073 = vpop.f32.mrb[0].mxu0
    %v2074 = vadd.f32 0.0, %v2073
    %v2075 = vpop.f32.mrb[0].mxu0
    %v2076 = vadd.f32 0.0, %v2075
    %v2077 = vpop.f32.mrb[0].mxu0
    %v2078 = vadd.f32 0.0, %v2077
    %v2079 = vpop.f32.mrb[0].mxu0
    %v2080 = vadd.f32 0.0, %v2079
    %2081 = vmatprep.mubr.bf16.mxu0 %v391
    %2082 = vmatmul.mubr.bf16.gmra.mrb[0].mxu0 %v390
    %v2083 = vpop.f32.mrb[0].mxu0
    %v2084 = vadd.f32 0.0, %v2083
    %v2085 = vpop.f32.mrb[0].mxu0
    %v2086 = vadd.f32 0.0, %v2085
    %v2087 = vpop.f32.mrb[0].mxu0
    %v2088 = vadd.f32 0.0, %v2087
    %v2089 = vpop.f32.mrb[0].mxu0
    %v2090 = vadd.f32 0.0, %v2089
    %2091 = vmatprep.mubr.bf16.mxu0 %v393
    %2092 = vmatmul.mubr.bf16.gmra.mrb[0].mxu0 %v392
    %v2093 = vpop.f32.mrb[0].mxu0
    %v2094 = vadd.f32 0.0, %v2093
    %v2095 = vpop.f32.mrb[0].mxu0
    %v2096 = vadd.f32 0.0, %v2095
    %v2097 = vpop.f32.mrb[0].mxu0
    %v2098 = vadd.f32 0.0, %v2097
    %v2099 = vpop.f32.mrb[0].mxu0
    %v2100 = vadd.f32 0.0, %v2099
    %2101 = vmatprep.mubr.bf16.mxu0 %v395
    %2102 = vmatmul.mubr.bf16.gmra.mrb[0].mxu0 %v394
    %v2103 = vpop.f32.mrb[0].mxu0
    %v2104 = vadd.f32 0.0, %v2103
    %v2105 = vpop.f32.mrb[0].mxu0
    %v2106 = vadd.f32 0.0, %v2105
    %v2107 = vpop.f32.mrb[0].mxu0
    %v2108 = vadd.f32 0.0, %v2107
    %v2109 = vpop.f32.mrb[0].mxu0
    %v2110 = vadd.f32 0.0, %v2109
    %2111 = vmatprep.mubr.bf16.mxu0 %v397
    %2112 = vmatmul.mubr.bf16.gmra.mrb[0].mxu0 %v396
    %v2113 = vpop.f32.mrb[0].mxu0
    %v2114 = vadd.f32 0.0, %v2113
    %v2115 = vpop.f32.mrb[0].mxu0
    %v2116 = vadd.f32 0.0, %v2115
    %v2117 = vpop.f32.mrb[0].mxu0
    %v2118 = vadd.f32 0.0, %v2117
    %v2119 = vpop.f32.mrb[0].mxu0
    %v2120 = vadd.f32 0.0, %v2119
    %2121 = vmatprep.mubr.bf16.mxu0 %v399
    %2122 = vmatmul.mubr.bf16.gmra.mrb[0].mxu0 %v398
    %v2123 = vpop.f32.mrb[0].mxu0
    %v2124 = vadd.f32 0.0, %v2123
    %v2125 = vpop.f32.mrb[0].mxu0
    %v2126 = vadd.f32 0.0, %v2125
    %v2127 = vpop.f32.mrb[0].mxu0
    %v2128 = vadd.f32 0.0, %v2127
    %v2129 = vpop.f32.mrb[0].mxu0
    %v2130 = vadd.f32 0.0, %v2129
    %2131 = vmatprep.mubr.bf16.mxu0 %v401
    %2132 = vmatmul.mubr.bf16.gmra.mrb[0].mxu0 %v400
    %v2133 = vpop.f32.mrb[0].mxu0
    %v2134 = vadd.f32 0.0, %v2133
    %v2135 = vpop.f32.mrb[0].mxu0
    %v2136 = vadd.f32 0.0, %v2135
    %v2137 = vpop.f32.mrb[0].mxu0
    %v2138 = vadd.f32 0.0, %v2137
    %v2139 = vpop.f32.mrb[0].mxu0
    %v2140 = vadd.f32 0.0, %v2139
    %2141 = vmatprep.mubr.bf16.mxu0 %v403
    %2142 = vmatmul.mubr.bf16.gmra.mrb[0].mxu0 %v402
    %v2143 = vpop.f32.mrb[0].mxu0
    %v2144 = vadd.f32 0.0, %v2143
    %v2145 = vpop.f32.mrb[0].mxu0
    %v2146 = vadd.f32 0.0, %v2145
    %v2147 = vpop.f32.mrb[0].mxu0
    %v2148 = vadd.f32 0.0, %v2147
    %v2149 = vpop.f32.mrb[0].mxu0
    %v2150 = vadd.f32 0.0, %v2149
    %2151 = vmatprep.mubr.bf16.mxu0 %v405
    %2152 = vmatmul.mubr.bf16.gmra.mrb[0].mxu0 %v404
    %v2153 = vpop.f32.mrb[0].mxu0
    %v2154 = vadd.f32 0.0, %v2153
    %v2155 = vpop.f32.mrb[0].mxu0
    %v2156 = vadd.f32 0.0, %v2155
    %v2157 = vpop.f32.mrb[0].mxu0
    %v2158 = vadd.f32 0.0, %v2157
    %v2159 = vpop.f32.mrb[0].mxu0
    %v2160 = vadd.f32 0.0, %v2159
    %2161 = vmatprep.mubr.bf16.mxu0 %v407
    %2162 = vmatmul.mubr.bf16.gmra.mrb[0].mxu0 %v406
    %v2163 = vpop.f32.mrb[0].mxu0
    %v2164 = vadd.f32 0.0, %v2163
    %v2165 = vpop.f32.mrb[0].mxu0
    %v2166 = vadd.f32 0.0, %v2165
    %v2167 = vpop.f32.mrb[0].mxu0
    %v2168 = vadd.f32 0.0, %v2167
    %v2169 = vpop.f32.mrb[0].mxu0
    %v2170 = vadd.f32 0.0, %v2169
    %2171 = vdwg.mxu0
    %2172 = vmatprep.subr.bf16.mxu0 %v1025
    %2173 = vmatpush1.bf16.msra.mxu0 %v1024
    %2174 = vmatprep.subr.bf16.mxu0 %v1037
    %2175 = vmatpush1.bf16.msra.mxu0 %v1036
    %2176 = vmatprep.subr.bf16.mxu0 %v1049
    %2177 = vmatpush1.bf16.msra.mxu0 %v1048
    %2178 = vmatprep.subr.bf16.mxu0 %v1061
    %2179 = vmatpush1.bf16.msra.mxu0 %v1060
    %2180 = vmatprep.subr.bf16.mxu0 %v1073
    %2181 = vmatpush1.bf16.msra.mxu0 %v1072
    %2182 = vmatprep.subr.bf16.mxu0 %v1085
    %2183 = vmatpush1.bf16.msra.mxu0 %v1084
    %2184 = vmatprep.subr.bf16.mxu0 %v1097
    %2185 = vmatpush1.bf16.msra.mxu0 %v1096
    %2186 = vmatprep.subr.bf16.mxu0 %v1109
    %2187 = vmatpush1.bf16.msra.mxu0 %v1108
    %2188 = vmatprep.subr.bf16.mxu0 %v1121
    %2189 = vmatpush1.bf16.msra.mxu0 %v1120
    %2190 = vmatprep.subr.bf16.mxu0 %v1133
    %2191 = vmatpush1.bf16.msra.mxu0 %v1132
    %2192 = vmatprep.subr.bf16.mxu0 %v1145
    %2193 = vmatpush1.bf16.msra.mxu0 %v1144
    %2194 = vmatprep.subr.bf16.mxu0 %v1157
    %2195 = vmatpush1.bf16.msra.mxu0 %v1156
    %2196 = vmatprep.subr.bf16.mxu0 %v1169
    %2197 = vmatpush1.bf16.msra.mxu0 %v1168
    %2198 = vmatprep.subr.bf16.mxu0 %v1181
    %2199 = vmatpush1.bf16.msra.mxu0 %v1180
    %2200 = vmatprep.subr.bf16.mxu0 %v1193
    %2201 = vmatpush1.bf16.msra.mxu0 %v1192
    %2202 = vmatprep.subr.bf16.mxu0 %v1205
    %2203 = vmatpush1.bf16.msra.mxu0 %v1204
    %2204 = vmatprep.mubr.bf16.mxu0 %v377
    %2205 = vmatmul.mubr.bf16.gmra.mrb[0].mxu0 %v376
    %v2206 = vpop.f32.mrb[0].mxu0
    %v2207 = vadd.f32 0.0, %v2206
    %v2208 = vpop.f32.mrb[0].mxu0
    %v2209 = vadd.f32 0.0, %v2208
    %v2210 = vpop.f32.mrb[0].mxu0
    %v2211 = vadd.f32 0.0, %v2210
    %v2212 = vpop.f32.mrb[0].mxu0
    %v2213 = vadd.f32 0.0, %v2212
    %2214 = vmatprep.mubr.bf16.mxu0 %v379
    %2215 = vmatmul.mubr.bf16.gmra.mrb[0].mxu0 %v378
    %v2216 = vpop.f32.mrb[0].mxu0
    %v2217 = vadd.f32 0.0, %v2216
    %v2218 = vpop.f32.mrb[0].mxu0
    %v2219 = vadd.f32 0.0, %v2218
    %v2220 = vpop.f32.mrb[0].mxu0
    %v2221 = vadd.f32 0.0, %v2220
    %v2222 = vpop.f32.mrb[0].mxu0
    %v2223 = vadd.f32 0.0, %v2222
    %2224 = vmatprep.mubr.bf16.mxu0 %v381
    %2225 = vmatmul.mubr.bf16.gmra.mrb[0].mxu0 %v380
    %v2226 = vpop.f32.mrb[0].mxu0
    %v2227 = vadd.f32 0.0, %v2226
    %v2228 = vpop.f32.mrb[0].mxu0
    %v2229 = vadd.f32 0.0, %v2228
    %v2230 = vpop.f32.mrb[0].mxu0
    %v2231 = vadd.f32 0.0, %v2230
    %v2232 = vpop.f32.mrb[0].mxu0
    %v2233 = vadd.f32 0.0, %v2232
    %2234 = vmatprep.mubr.bf16.mxu0 %v383
    %2235 = vmatmul.mubr.bf16.gmra.mrb[0].mxu0 %v382
    %v2236 = vpop.f32.mrb[0].mxu0
    %v2237 = vadd.f32 0.0, %v2236
    %v2238 = vpop.f32.mrb[0].mxu0
    %v2239 = vadd.f32 0.0, %v2238
    %v2240 = vpop.f32.mrb[0].mxu0
    %v2241 = vadd.f32 0.0, %v2240
    %v2242 = vpop.f32.mrb[0].mxu0
    %v2243 = vadd.f32 0.0, %v2242
    %2244 = vmatprep.mubr.bf16.mxu0 %v385
    %2245 = vmatmul.mubr.bf16.gmra.mrb[0].mxu0 %v384
    %v2246 = vpop.f32.mrb[0].mxu0
    %v2247 = vadd.f32 0.0, %v2246
    %v2248 = vpop.f32.mrb[0].mxu0
    %v2249 = vadd.f32 0.0, %v2248
    %v2250 = vpop.f32.mrb[0].mxu0
    %v2251 = vadd.f32 0.0, %v2250
    %v2252 = vpop.f32.mrb[0].mxu0
    %v2253 = vadd.f32 0.0, %v2252
    %2254 = vmatprep.mubr.bf16.mxu0 %v387
    %2255 = vmatmul.mubr.bf16.gmra.mrb[0].mxu0 %v386
    %v2256 = vpop.f32.mrb[0].mxu0
    %v2257 = vadd.f32 0.0, %v2256
    %v2258 = vpop.f32.mrb[0].mxu0
    %v2259 = vadd.f32 0.0, %v2258
    %v2260 = vpop.f32.mrb[0].mxu0
    %v2261 = vadd.f32 0.0, %v2260
    %v2262 = vpop.f32.mrb[0].mxu0
    %v2263 = vadd.f32 0.0, %v2262
    %2264 = vmatprep.mubr.bf16.mxu0 %v389
    %2265 = vmatmul.mubr.bf16.gmra.mrb[0].mxu0 %v388
    %v2266 = vpop.f32.mrb[0].mxu0
    %v2267 = vadd.f32 0.0, %v2266
    %v2268 = vpop.f32.mrb[0].mxu0
    %v2269 = vadd.f32 0.0, %v2268
    %v2270 = vpop.f32.mrb[0].mxu0
    %v2271 = vadd.f32 0.0, %v2270
    %v2272 = vpop.f32.mrb[0].mxu0
    %v2273 = vadd.f32 0.0, %v2272
    %2274 = vmatprep.mubr.bf16.mxu0 %v391
    %2275 = vmatmul.mubr.bf16.gmra.mrb[0].mxu0 %v390
    %v2276 = vpop.f32.mrb[0].mxu0
    %v2277 = vadd.f32 0.0, %v2276
    %v2278 = vpop.f32.mrb[0].mxu0
    %v2279 = vadd.f32 0.0, %v2278
    %v2280 = vpop.f32.mrb[0].mxu0
    %v2281 = vadd.f32 0.0, %v2280
    %v2282 = vpop.f32.mrb[0].mxu0
    %v2283 = vadd.f32 0.0, %v2282
    %2284 = vmatprep.mubr.bf16.mxu0 %v393
    %2285 = vmatmul.mubr.bf16.gmra.mrb[0].mxu0 %v392
    %v2286 = vpop.f32.mrb[0].mxu0
    %v2287 = vadd.f32 0.0, %v2286
    %v2288 = vpop.f32.mrb[0].mxu0
    %v2289 = vadd.f32 0.0, %v2288
    %v2290 = vpop.f32.mrb[0].mxu0
    %v2291 = vadd.f32 0.0, %v2290
    %v2292 = vpop.f32.mrb[0].mxu0
    %v2293 = vadd.f32 0.0, %v2292
    %2294 = vmatprep.mubr.bf16.mxu0 %v395
    %2295 = vmatmul.mubr.bf16.gmra.mrb[0].mxu0 %v394
    %v2296 = vpop.f32.mrb[0].mxu0
    %v2297 = vadd.f32 0.0, %v2296
    %v2298 = vpop.f32.mrb[0].mxu0
    %v2299 = vadd.f32 0.0, %v2298
    %v2300 = vpop.f32.mrb[0].mxu0
    %v2301 = vadd.f32 0.0, %v2300
    %v2302 = vpop.f32.mrb[0].mxu0
    %v2303 = vadd.f32 0.0, %v2302
    %2304 = vmatprep.mubr.bf16.mxu0 %v397
    %2305 = vmatmul.mubr.bf16.gmra.mrb[0].mxu0 %v396
    %v2306 = vpop.f32.mrb[0].mxu0
    %v2307 = vadd.f32 0.0, %v2306
    %v2308 = vpop.f32.mrb[0].mxu0
    %v2309 = vadd.f32 0.0, %v2308
    %v2310 = vpop.f32.mrb[0].mxu0
    %v2311 = vadd.f32 0.0, %v2310
    %v2312 = vpop.f32.mrb[0].mxu0
    %v2313 = vadd.f32 0.0, %v2312
    %2314 = vmatprep.mubr.bf16.mxu0 %v399
    %2315 = vmatmul.mubr.bf16.gmra.mrb[0].mxu0 %v398
    %v2316 = vpop.f32.mrb[0].mxu0
    %v2317 = vadd.f32 0.0, %v2316
    %v2318 = vpop.f32.mrb[0].mxu0
    %v2319 = vadd.f32 0.0, %v2318
    %v2320 = vpop.f32.mrb[0].mxu0
    %v2321 = vadd.f32 0.0, %v2320
    %v2322 = vpop.f32.mrb[0].mxu0
    %v2323 = vadd.f32 0.0, %v2322
    %2324 = vmatprep.mubr.bf16.mxu0 %v401
    %2325 = vmatmul.mubr.bf16.gmra.mrb[0].mxu0 %v400
    %v2326 = vpop.f32.mrb[0].mxu0
    %v2327 = vadd.f32 0.0, %v2326
    %v2328 = vpop.f32.mrb[0].mxu0
    %v2329 = vadd.f32 0.0, %v2328
    %v2330 = vpop.f32.mrb[0].mxu0
    %v2331 = vadd.f32 0.0, %v2330
    %v2332 = vpop.f32.mrb[0].mxu0
    %v2333 = vadd.f32 0.0, %v2332
    %2334 = vmatprep.mubr.bf16.mxu0 %v403
    %2335 = vmatmul.mubr.bf16.gmra.mrb[0].mxu0 %v402
    %v2336 = vpop.f32.mrb[0].mxu0
    %v2337 = vadd.f32 0.0, %v2336
    %v2338 = vpop.f32.mrb[0].mxu0
    %v2339 = vadd.f32 0.0, %v2338
    %v2340 = vpop.f32.mrb[0].mxu0
    %v2341 = vadd.f32 0.0, %v2340
    %v2342 = vpop.f32.mrb[0].mxu0
    %v2343 = vadd.f32 0.0, %v2342
    %2344 = vmatprep.mubr.bf16.mxu0 %v405
    %2345 = vmatmul.mubr.bf16.gmra.mrb[0].mxu0 %v404
    %v2346 = vpop.f32.mrb[0].mxu0
    %v2347 = vadd.f32 0.0, %v2346
    %v2348 = vpop.f32.mrb[0].mxu0
    %v2349 = vadd.f32 0.0, %v2348
    %v2350 = vpop.f32.mrb[0].mxu0
    %v2351 = vadd.f32 0.0, %v2350
    %v2352 = vpop.f32.mrb[0].mxu0
    %v2353 = vadd.f32 0.0, %v2352
    %2354 = vmatprep.mubr.bf16.mxu0 %v407
    %2355 = vmatmul.mubr.bf16.gmra.mrb[0].mxu0 %v406
    %v2356 = vpop.f32.mrb[0].mxu0
    %v2357 = vadd.f32 0.0, %v2356
    %v2358 = vpop.f32.mrb[0].mxu0
    %v2359 = vadd.f32 0.0, %v2358
    %v2360 = vpop.f32.mrb[0].mxu0
    %v2361 = vadd.f32 0.0, %v2360
    %v2362 = vpop.f32.mrb[0].mxu0
    %v2363 = vadd.f32 0.0, %v2362
    %2364 = vdwg.mxu0
    %2365 = vmatprep.subr.bf16.mxu0 %v1027
    %2366 = vmatpush1.bf16.msra.mxu0 %v1026
    %2367 = vmatprep.subr.bf16.mxu0 %v1039
    %2368 = vmatpush1.bf16.msra.mxu0 %v1038
    %2369 = vmatprep.subr.bf16.mxu0 %v1051
    %2370 = vmatpush1.bf16.msra.mxu0 %v1050
    %2371 = vmatprep.subr.bf16.mxu0 %v1063
    %2372 = vmatpush1.bf16.msra.mxu0 %v1062
    %2373 = vmatprep.subr.bf16.mxu0 %v1075
    %2374 = vmatpush1.bf16.msra.mxu0 %v1074
    %2375 = vmatprep.subr.bf16.mxu0 %v1087
    %2376 = vmatpush1.bf16.msra.mxu0 %v1086
    %2377 = vmatprep.subr.bf16.mxu0 %v1099
    %2378 = vmatpush1.bf16.msra.mxu0 %v1098
    %2379 = vmatprep.subr.bf16.mxu0 %v1111
    %2380 = vmatpush1.bf16.msra.mxu0 %v1110
    %2381 = vmatprep.subr.bf16.mxu0 %v1123
    %2382 = vmatpush1.bf16.msra.mxu0 %v1122
    %2383 = vmatprep.subr.bf16.mxu0 %v1135
    %2384 = vmatpush1.bf16.msra.mxu0 %v1134
    %2385 = vmatprep.subr.bf16.mxu0 %v1147
    %2386 = vmatpush1.bf16.msra.mxu0 %v1146
    %2387 = vmatprep.subr.bf16.mxu0 %v1159
    %2388 = vmatpush1.bf16.msra.mxu0 %v1158
    %2389 = vmatprep.subr.bf16.mxu0 %v1171
    %2390 = vmatpush1.bf16.msra.mxu0 %v1170
    %2391 = vmatprep.subr.bf16.mxu0 %v1183
    %2392 = vmatpush1.bf16.msra.mxu0 %v1182
    %2393 = vmatprep.subr.bf16.mxu0 %v1195
    %2394 = vmatpush1.bf16.msra.mxu0 %v1194
    %2395 = vmatprep.subr.bf16.mxu0 %v1207
    %2396 = vmatpush1.bf16.msra.mxu0 %v1206
    %2397 = vmatprep.mubr.bf16.mxu0 %v377
    %2398 = vmatmul.mubr.bf16.gmra.mrb[0].mxu0 %v376
    %v2399 = vpop.f32.mrb[0].mxu0
    %v2400 = vadd.f32 0.0, %v2399
    %v2401 = vpop.f32.mrb[0].mxu0
    %v2402 = vadd.f32 0.0, %v2401
    %v2403 = vpop.f32.mrb[0].mxu0
    %v2404 = vadd.f32 0.0, %v2403
    %v2405 = vpop.f32.mrb[0].mxu0
    %v2406 = vadd.f32 0.0, %v2405
    %2407 = vmatprep.mubr.bf16.mxu0 %v379
    %2408 = vmatmul.mubr.bf16.gmra.mrb[0].mxu0 %v378
    %v2409 = vpop.f32.mrb[0].mxu0
    %v2410 = vadd.f32 0.0, %v2409
    %v2411 = vpop.f32.mrb[0].mxu0
    %v2412 = vadd.f32 0.0, %v2411
    %v2413 = vpop.f32.mrb[0].mxu0
    %v2414 = vadd.f32 0.0, %v2413
    %v2415 = vpop.f32.mrb[0].mxu0
    %v2416 = vadd.f32 0.0, %v2415
    %2417 = vmatprep.mubr.bf16.mxu0 %v381
    %2418 = vmatmul.mubr.bf16.gmra.mrb[0].mxu0 %v380
    %v2419 = vpop.f32.mrb[0].mxu0
    %v2420 = vadd.f32 0.0, %v2419
    %v2421 = vpop.f32.mrb[0].mxu0
    %v2422 = vadd.f32 0.0, %v2421
    %v2423 = vpop.f32.mrb[0].mxu0
    %v2424 = vadd.f32 0.0, %v2423
    %v2425 = vpop.f32.mrb[0].mxu0
    %v2426 = vadd.f32 0.0, %v2425
    %2427 = vmatprep.mubr.bf16.mxu0 %v383
    %2428 = vmatmul.mubr.bf16.gmra.mrb[0].mxu0 %v382
    %v2429 = vpop.f32.mrb[0].mxu0
    %v2430 = vadd.f32 0.0, %v2429
    %v2431 = vpop.f32.mrb[0].mxu0
    %v2432 = vadd.f32 0.0, %v2431
    %v2433 = vpop.f32.mrb[0].mxu0
    %v2434 = vadd.f32 0.0, %v2433
    %v2435 = vpop.f32.mrb[0].mxu0
    %v2436 = vadd.f32 0.0, %v2435
    %2437 = vmatprep.mubr.bf16.mxu0 %v385
    %2438 = vmatmul.mubr.bf16.gmra.mrb[0].mxu0 %v384
    %v2439 = vpop.f32.mrb[0].mxu0
    %v2440 = vadd.f32 0.0, %v2439
    %v2441 = vpop.f32.mrb[0].mxu0
    %v2442 = vadd.f32 0.0, %v2441
    %v2443 = vpop.f32.mrb[0].mxu0
    %v2444 = vadd.f32 0.0, %v2443
    %v2445 = vpop.f32.mrb[0].mxu0
    %v2446 = vadd.f32 0.0, %v2445
    %2447 = vmatprep.mubr.bf16.mxu0 %v387
    %2448 = vmatmul.mubr.bf16.gmra.mrb[0].mxu0 %v386
    %v2449 = vpop.f32.mrb[0].mxu0
    %v2450 = vadd.f32 0.0, %v2449
    %v2451 = vpop.f32.mrb[0].mxu0
    %v2452 = vadd.f32 0.0, %v2451
    %v2453 = vpop.f32.mrb[0].mxu0
    %v2454 = vadd.f32 0.0, %v2453
    %v2455 = vpop.f32.mrb[0].mxu0
    %v2456 = vadd.f32 0.0, %v2455
    %2457 = vmatprep.mubr.bf16.mxu0 %v389
    %2458 = vmatmul.mubr.bf16.gmra.mrb[0].mxu0 %v388
    %v2459 = vpop.f32.mrb[0].mxu0
    %v2460 = vadd.f32 0.0, %v2459
    %v2461 = vpop.f32.mrb[0].mxu0
    %v2462 = vadd.f32 0.0, %v2461
    %v2463 = vpop.f32.mrb[0].mxu0
    %v2464 = vadd.f32 0.0, %v2463
    %v2465 = vpop.f32.mrb[0].mxu0
    %v2466 = vadd.f32 0.0, %v2465
    %2467 = vmatprep.mubr.bf16.mxu0 %v391
    %2468 = vmatmul.mubr.bf16.gmra.mrb[0].mxu0 %v390
    %v2469 = vpop.f32.mrb[0].mxu0
    %v2470 = vadd.f32 0.0, %v2469
    %v2471 = vpop.f32.mrb[0].mxu0
    %v2472 = vadd.f32 0.0, %v2471
    %v2473 = vpop.f32.mrb[0].mxu0
    %v2474 = vadd.f32 0.0, %v2473
    %v2475 = vpop.f32.mrb[0].mxu0
    %v2476 = vadd.f32 0.0, %v2475
    %2477 = vmatprep.mubr.bf16.mxu0 %v393
    %2478 = vmatmul.mubr.bf16.gmra.mrb[0].mxu0 %v392
    %v2479 = vpop.f32.mrb[0].mxu0
    %v2480 = vadd.f32 0.0, %v2479
    %v2481 = vpop.f32.mrb[0].mxu0
    %v2482 = vadd.f32 0.0, %v2481
    %v2483 = vpop.f32.mrb[0].mxu0
    %v2484 = vadd.f32 0.0, %v2483
    %v2485 = vpop.f32.mrb[0].mxu0
    %v2486 = vadd.f32 0.0, %v2485
    %2487 = vmatprep.mubr.bf16.mxu0 %v395
    %2488 = vmatmul.mubr.bf16.gmra.mrb[0].mxu0 %v394
    %v2489 = vpop.f32.mrb[0].mxu0
    %v2490 = vadd.f32 0.0, %v2489
    %v2491 = vpop.f32.mrb[0].mxu0
    %v2492 = vadd.f32 0.0, %v2491
    %v2493 = vpop.f32.mrb[0].mxu0
    %v2494 = vadd.f32 0.0, %v2493
    %v2495 = vpop.f32.mrb[0].mxu0
    %v2496 = vadd.f32 0.0, %v2495
    %2497 = vmatprep.mubr.bf16.mxu0 %v397
    %2498 = vmatmul.mubr.bf16.gmra.mrb[0].mxu0 %v396
    %v2499 = vpop.f32.mrb[0].mxu0
    %v2500 = vadd.f32 0.0, %v2499
    %v2501 = vpop.f32.mrb[0].mxu0
    %v2502 = vadd.f32 0.0, %v2501
    %v2503 = vpop.f32.mrb[0].mxu0
    %v2504 = vadd.f32 0.0, %v2503
    %v2505 = vpop.f32.mrb[0].mxu0
    %v2506 = vadd.f32 0.0, %v2505
    %2507 = vmatprep.mubr.bf16.mxu0 %v399
    %2508 = vmatmul.mubr.bf16.gmra.mrb[0].mxu0 %v398
    %v2509 = vpop.f32.mrb[0].mxu0
    %v2510 = vadd.f32 0.0, %v2509
    %v2511 = vpop.f32.mrb[0].mxu0
    %v2512 = vadd.f32 0.0, %v2511
    %v2513 = vpop.f32.mrb[0].mxu0
    %v2514 = vadd.f32 0.0, %v2513
    %v2515 = vpop.f32.mrb[0].mxu0
    %v2516 = vadd.f32 0.0, %v2515
    %2517 = vmatprep.mubr.bf16.mxu0 %v401
    %2518 = vmatmul.mubr.bf16.gmra.mrb[0].mxu0 %v400
    %v2519 = vpop.f32.mrb[0].mxu0
    %v2520 = vadd.f32 0.0, %v2519
    %v2521 = vpop.f32.mrb[0].mxu0
    %v2522 = vadd.f32 0.0, %v2521
    %v2523 = vpop.f32.mrb[0].mxu0
    %v2524 = vadd.f32 0.0, %v2523
    %v2525 = vpop.f32.mrb[0].mxu0
    %v2526 = vadd.f32 0.0, %v2525
    %2527 = vmatprep.mubr.bf16.mxu0 %v403
    %2528 = vmatmul.mubr.bf16.gmra.mrb[0].mxu0 %v402
    %v2529 = vpop.f32.mrb[0].mxu0
    %v2530 = vadd.f32 0.0, %v2529
    %v2531 = vpop.f32.mrb[0].mxu0
    %v2532 = vadd.f32 0.0, %v2531
    %v2533 = vpop.f32.mrb[0].mxu0
    %v2534 = vadd.f32 0.0, %v2533
    %v2535 = vpop.f32.mrb[0].mxu0
    %v2536 = vadd.f32 0.0, %v2535
    %2537 = vmatprep.mubr.bf16.mxu0 %v405
    %2538 = vmatmul.mubr.bf16.gmra.mrb[0].mxu0 %v404
    %v2539 = vpop.f32.mrb[0].mxu0
    %v2540 = vadd.f32 0.0, %v2539
    %v2541 = vpop.f32.mrb[0].mxu0
    %v2542 = vadd.f32 0.0, %v2541
    %v2543 = vpop.f32.mrb[0].mxu0
    %v2544 = vadd.f32 0.0, %v2543
    %v2545 = vpop.f32.mrb[0].mxu0
    %v2546 = vadd.f32 0.0, %v2545
    %2547 = vmatprep.mubr.bf16.mxu0 %v407
    %2548 = vmatmul.mubr.bf16.gmra.mrb[0].mxu0 %v406
    %v2549 = vpop.f32.mrb[0].mxu0
    %v2550 = vadd.f32 0.0, %v2549
    %v2551 = vpop.f32.mrb[0].mxu0
    %v2552 = vadd.f32 0.0, %v2551
    %v2553 = vpop.f32.mrb[0].mxu0
    %v2554 = vadd.f32 0.0, %v2553
    %v2555 = vpop.f32.mrb[0].mxu0
    %v2556 = vadd.f32 0.0, %v2555
    %2557 = vdwg.mxu0
    %v2558 = vxor.u32 %v1435, 2147483648
    %v2559 = vxor.u32 %v1437, 2147483648
    %v2560 = vxor.u32 %v1628, 2147483648
    %v2561 = vxor.u32 %v1630, 2147483648
    %v2562 = vxor.u32 %v1821, 2147483648
    %v2563 = vxor.u32 %v1823, 2147483648
    %v2564 = vxor.u32 %v1439, 2147483648
    %v2565 = vxor.u32 %v1441, 2147483648
    %v2566 = vxor.u32 %v1632, 2147483648
    %v2567 = vxor.u32 %v1634, 2147483648
    %v2568 = vxor.u32 %v1825, 2147483648
    %v2569 = vxor.u32 %v1827, 2147483648
    %v2570 = vxor.u32 %v1445, 2147483648
    %v2571 = vxor.u32 %v1447, 2147483648
    %v2572 = vxor.u32 %v1638, 2147483648
    %v2573 = vxor.u32 %v1640, 2147483648
    %v2574 = vxor.u32 %v1831, 2147483648
    %v2575 = vxor.u32 %v1833, 2147483648
    %v2576 = vxor.u32 %v1449, 2147483648
    %v2577 = vxor.u32 %v1451, 2147483648
    %v2578 = vxor.u32 %v1642, 2147483648
    %v2579 = vxor.u32 %v1644, 2147483648
    %v2580 = vxor.u32 %v1835, 2147483648
    %v2581 = vxor.u32 %v1837, 2147483648
    %v2582 = vxor.u32 %v1455, 2147483648
    %v2583 = vxor.u32 %v1457, 2147483648
    %v2584 = vxor.u32 %v1648, 2147483648
    %v2585 = vxor.u32 %v1650, 2147483648
    %v2586 = vxor.u32 %v1841, 2147483648
    %v2587 = vxor.u32 %v1843, 2147483648
    %v2588 = vxor.u32 %v1459, 2147483648
    %v2589 = vxor.u32 %v1461, 2147483648
    %v2590 = vxor.u32 %v1652, 2147483648
    %v2591 = vxor.u32 %v1654, 2147483648
    %v2592 = vxor.u32 %v1845, 2147483648
    %v2593 = vxor.u32 %v1847, 2147483648
    %v2594 = vxor.u32 %v1465, 2147483648
    %v2595 = vxor.u32 %v1467, 2147483648
    %v2596 = vxor.u32 %v1658, 2147483648
    %v2597 = vxor.u32 %v1660, 2147483648
    %v2598 = vxor.u32 %v1851, 2147483648
    %v2599 = vxor.u32 %v1853, 2147483648
    %v2600 = vxor.u32 %v1469, 2147483648
    %v2601 = vxor.u32 %v1471, 2147483648
    %v2602 = vxor.u32 %v1662, 2147483648
    %v2603 = vxor.u32 %v1664, 2147483648
    %v2604 = vxor.u32 %v1855, 2147483648
    %v2605 = vxor.u32 %v1857, 2147483648
    %v2606 = vxor.u32 %v1475, 2147483648
    %v2607 = vxor.u32 %v1477, 2147483648
    %v2608 = vxor.u32 %v1668, 2147483648
    %v2609 = vxor.u32 %v1670, 2147483648
    %v2610 = vxor.u32 %v1861, 2147483648
    %v2611 = vxor.u32 %v1863, 2147483648
    %v2612 = vxor.u32 %v1479, 2147483648
    %v2613 = vxor.u32 %v1481, 2147483648
    %v2614 = vxor.u32 %v1672, 2147483648
    %v2615 = vxor.u32 %v1674, 2147483648
    %v2616 = vxor.u32 %v1865, 2147483648
    %v2617 = vxor.u32 %v1867, 2147483648
    %v2618 = vxor.u32 %v1485, 2147483648
    %v2619 = vxor.u32 %v1487, 2147483648
    %v2620 = vxor.u32 %v1678, 2147483648
    %v2621 = vxor.u32 %v1680, 2147483648
    %v2622 = vxor.u32 %v1871, 2147483648
    %v2623 = vxor.u32 %v1873, 2147483648
    %v2624 = vxor.u32 %v1489, 2147483648
    %v2625 = vxor.u32 %v1491, 2147483648
    %v2626 = vxor.u32 %v1682, 2147483648
    %v2627 = vxor.u32 %v1684, 2147483648
    %v2628 = vxor.u32 %v1875, 2147483648
    %v2629 = vxor.u32 %v1877, 2147483648
    %v2630 = vxor.u32 %v1495, 2147483648
    %v2631 = vxor.u32 %v1497, 2147483648
    %v2632 = vxor.u32 %v1688, 2147483648
    %v2633 = vxor.u32 %v1690, 2147483648
    %v2634 = vxor.u32 %v1881, 2147483648
    %v2635 = vxor.u32 %v1883, 2147483648
    %v2636 = vxor.u32 %v1499, 2147483648
    %v2637 = vxor.u32 %v1501, 2147483648
    %v2638 = vxor.u32 %v1692, 2147483648
    %v2639 = vxor.u32 %v1694, 2147483648
    %v2640 = vxor.u32 %v1885, 2147483648
    %v2641 = vxor.u32 %v1887, 2147483648
    %v2642 = vxor.u32 %v1505, 2147483648
    %v2643 = vxor.u32 %v1507, 2147483648
    %v2644 = vxor.u32 %v1698, 2147483648
    %v2645 = vxor.u32 %v1700, 2147483648
    %v2646 = vxor.u32 %v1891, 2147483648
    %v2647 = vxor.u32 %v1893, 2147483648
    %v2648 = vxor.u32 %v1509, 2147483648
    %v2649 = vxor.u32 %v1511, 2147483648
    %v2650 = vxor.u32 %v1702, 2147483648
    %v2651 = vxor.u32 %v1704, 2147483648
    %v2652 = vxor.u32 %v1895, 2147483648
    %v2653 = vxor.u32 %v1897, 2147483648
    %v2654 = vxor.u32 %v1515, 2147483648
    %v2655 = vxor.u32 %v1517, 2147483648
    %v2656 = vxor.u32 %v1708, 2147483648
    %v2657 = vxor.u32 %v1710, 2147483648
    %v2658 = vxor.u32 %v1901, 2147483648
    %v2659 = vxor.u32 %v1903, 2147483648
    %v2660 = vxor.u32 %v1519, 2147483648
    %v2661 = vxor.u32 %v1521, 2147483648
    %v2662 = vxor.u32 %v1712, 2147483648
    %v2663 = vxor.u32 %v1714, 2147483648
    %v2664 = vxor.u32 %v1905, 2147483648
    %v2665 = vxor.u32 %v1907, 2147483648
    %v2666 = vxor.u32 %v1525, 2147483648
    %v2667 = vxor.u32 %v1527, 2147483648
    %v2668 = vxor.u32 %v1718, 2147483648
    %v2669 = vxor.u32 %v1720, 2147483648
    %v2670 = vxor.u32 %v1911, 2147483648
    %v2671 = vxor.u32 %v1913, 2147483648
    %v2672 = vxor.u32 %v1529, 2147483648
    %v2673 = vxor.u32 %v1531, 2147483648
    %v2674 = vxor.u32 %v1722, 2147483648
    %v2675 = vxor.u32 %v1724, 2147483648
    %v2676 = vxor.u32 %v1915, 2147483648
    %v2677 = vxor.u32 %v1917, 2147483648
    %v2678 = vxor.u32 %v1535, 2147483648
    %v2679 = vxor.u32 %v1537, 2147483648
    %v2680 = vxor.u32 %v1728, 2147483648
    %v2681 = vxor.u32 %v1730, 2147483648
    %v2682 = vxor.u32 %v1921, 2147483648
    %v2683 = vxor.u32 %v1923, 2147483648
    %v2684 = vxor.u32 %v1539, 2147483648
    %v2685 = vxor.u32 %v1541, 2147483648
    %v2686 = vxor.u32 %v1732, 2147483648
    %v2687 = vxor.u32 %v1734, 2147483648
    %v2688 = vxor.u32 %v1925, 2147483648
    %v2689 = vxor.u32 %v1927, 2147483648
    %v2690 = vxor.u32 %v1545, 2147483648
    %v2691 = vxor.u32 %v1547, 2147483648
    %v2692 = vxor.u32 %v1738, 2147483648
    %v2693 = vxor.u32 %v1740, 2147483648
    %v2694 = vxor.u32 %v1931, 2147483648
    %v2695 = vxor.u32 %v1933, 2147483648
    %v2696 = vxor.u32 %v1549, 2147483648
    %v2697 = vxor.u32 %v1551, 2147483648
    %v2698 = vxor.u32 %v1742, 2147483648
    %v2699 = vxor.u32 %v1744, 2147483648
    %v2700 = vxor.u32 %v1935, 2147483648
    %v2701 = vxor.u32 %v1937, 2147483648
    %v2702 = vxor.u32 %v1555, 2147483648
    %v2703 = vxor.u32 %v1557, 2147483648
    %v2704 = vxor.u32 %v1748, 2147483648
    %v2705 = vxor.u32 %v1750, 2147483648
    %v2706 = vxor.u32 %v1941, 2147483648
    %v2707 = vxor.u32 %v1943, 2147483648
    %v2708 = vxor.u32 %v1559, 2147483648
    %v2709 = vxor.u32 %v1561, 2147483648
    %v2710 = vxor.u32 %v1752, 2147483648
    %v2711 = vxor.u32 %v1754, 2147483648
    %v2712 = vxor.u32 %v1945, 2147483648
    %v2713 = vxor.u32 %v1947, 2147483648
    %v2714 = vxor.u32 %v1565, 2147483648
    %v2715 = vxor.u32 %v1567, 2147483648
    %v2716 = vxor.u32 %v1758, 2147483648
    %v2717 = vxor.u32 %v1760, 2147483648
    %v2718 = vxor.u32 %v1951, 2147483648
    %v2719 = vxor.u32 %v1953, 2147483648
    %v2720 = vxor.u32 %v1569, 2147483648
    %v2721 = vxor.u32 %v1571, 2147483648
    %v2722 = vxor.u32 %v1762, 2147483648
    %v2723 = vxor.u32 %v1764, 2147483648
    %v2724 = vxor.u32 %v1955, 2147483648
    %v2725 = vxor.u32 %v1957, 2147483648
    %v2726 = vxor.u32 %v1575, 2147483648
    %v2727 = vxor.u32 %v1577, 2147483648
    %v2728 = vxor.u32 %v1768, 2147483648
    %v2729 = vxor.u32 %v1770, 2147483648
    %v2730 = vxor.u32 %v1961, 2147483648
    %v2731 = vxor.u32 %v1963, 2147483648
    %v2732 = vxor.u32 %v1579, 2147483648
    %v2733 = vxor.u32 %v1581, 2147483648
    %v2734 = vxor.u32 %v1772, 2147483648
    %v2735 = vxor.u32 %v1774, 2147483648
    %v2736 = vxor.u32 %v1965, 2147483648
    %v2737 = vxor.u32 %v1967, 2147483648
    %v2738 = vxor.u32 %v1585, 2147483648
    %v2739 = vxor.u32 %v1587, 2147483648
    %v2740 = vxor.u32 %v1778, 2147483648
    %v2741 = vxor.u32 %v1780, 2147483648
    %v2742 = vxor.u32 %v1971, 2147483648
    %v2743 = vxor.u32 %v1973, 2147483648
    %v2744 = vxor.u32 %v1589, 2147483648
    %v2745 = vxor.u32 %v1591, 2147483648
    %v2746 = vxor.u32 %v1782, 2147483648
    %v2747 = vxor.u32 %v1784, 2147483648
    %v2748 = vxor.u32 %v1975, 2147483648
    %v2749 = vxor.u32 %v1977, 2147483648
    %v2750 = vmul.f32 %v2558, 1.442695
    %v2751 = vpow.pop %v2750
    %v2752 = vmul.f32 %v2559, 1.442695
    %v2753 = vpow.pop %v2752
    %v2754 = vmul.f32 %v2560, 1.442695
    %v2755 = vpow.pop %v2754
    %v2756 = vmul.f32 %v2561, 1.442695
    %v2757 = vpow.pop %v2756
    %v2758 = vmul.f32 %v2562, 1.442695
    %v2759 = vpow.pop %v2758
    %v2760 = vmul.f32 %v2563, 1.442695
    %v2761 = vpow.pop %v2760
    %v2762 = vmul.f32 %v2564, 1.442695
    %v2763 = vpow.pop %v2762
    %v2764 = vmul.f32 %v2565, 1.442695
    %v2765 = vpow.pop %v2764
    %v2766 = vmul.f32 %v2566, 1.442695
    %v2767 = vpow.pop %v2766
    %v2768 = vmul.f32 %v2567, 1.442695
    %v2769 = vpow.pop %v2768
    %v2770 = vmul.f32 %v2568, 1.442695
    %v2771 = vpow.pop %v2770
    %v2772 = vmul.f32 %v2569, 1.442695
    %v2773 = vpow.pop %v2772
    %v2774 = vmul.f32 %v2570, 1.442695
    %v2775 = vpow.pop %v2774
    %v2776 = vmul.f32 %v2571, 1.442695
    %v2777 = vpow.pop %v2776
    %v2778 = vmul.f32 %v2572, 1.442695
    %v2779 = vpow.pop %v2778
    %v2780 = vmul.f32 %v2573, 1.442695
    %v2781 = vpow.pop %v2780
    %v2782 = vmul.f32 %v2574, 1.442695
    %v2783 = vpow.pop %v2782
    %v2784 = vmul.f32 %v2575, 1.442695
    %v2785 = vpow.pop %v2784
    %v2786 = vmul.f32 %v2576, 1.442695
    %v2787 = vpow.pop %v2786
    %v2788 = vmul.f32 %v2577, 1.442695
    %v2789 = vpow.pop %v2788
    %v2790 = vmul.f32 %v2578, 1.442695
    %v2791 = vpow.pop %v2790
    %v2792 = vmul.f32 %v2579, 1.442695
    %v2793 = vpow.pop %v2792
    %v2794 = vmul.f32 %v2580, 1.442695
    %v2795 = vpow.pop %v2794
    %v2796 = vmul.f32 %v2581, 1.442695
    %v2797 = vpow.pop %v2796
    %v2798 = vmul.f32 %v2582, 1.442695
    %v2799 = vpow.pop %v2798
    %v2800 = vmul.f32 %v2583, 1.442695
    %v2801 = vpow.pop %v2800
    %v2802 = vmul.f32 %v2584, 1.442695
    %v2803 = vpow.pop %v2802
    %v2804 = vmul.f32 %v2585, 1.442695
    %v2805 = vpow.pop %v2804
    %v2806 = vmul.f32 %v2586, 1.442695
    %v2807 = vpow.pop %v2806
    %v2808 = vmul.f32 %v2587, 1.442695
    %v2809 = vpow.pop %v2808
    %v2810 = vmul.f32 %v2588, 1.442695
    %v2811 = vpow.pop %v2810
    %v2812 = vmul.f32 %v2589, 1.442695
    %v2813 = vpow.pop %v2812
    %v2814 = vmul.f32 %v2590, 1.442695
    %v2815 = vpow.pop %v2814
    %v2816 = vmul.f32 %v2591, 1.442695
    %v2817 = vpow.pop %v2816
    %v2818 = vmul.f32 %v2592, 1.442695
    %v2819 = vpow.pop %v2818
    %v2820 = vmul.f32 %v2593, 1.442695
    %v2821 = vpow.pop %v2820
    %v2822 = vmul.f32 %v2594, 1.442695
    %v2823 = vpow.pop %v2822
    %v2824 = vmul.f32 %v2595, 1.442695
    %v2825 = vpow.pop %v2824
    %v2826 = vmul.f32 %v2596, 1.442695
    %v2827 = vpow.pop %v2826
    %v2828 = vmul.f32 %v2597, 1.442695
    %v2829 = vpow.pop %v2828
    %v2830 = vmul.f32 %v2598, 1.442695
    %v2831 = vpow.pop %v2830
    %v2832 = vmul.f32 %v2599, 1.442695
    %v2833 = vpow.pop %v2832
    %v2834 = vmul.f32 %v2600, 1.442695
    %v2835 = vpow.pop %v2834
    %v2836 = vmul.f32 %v2601, 1.442695
    %v2837 = vpow.pop %v2836
    %v2838 = vmul.f32 %v2602, 1.442695
    %v2839 = vpow.pop %v2838
    %v2840 = vmul.f32 %v2603, 1.442695
    %v2841 = vpow.pop %v2840
    %v2842 = vmul.f32 %v2604, 1.442695
    %v2843 = vpow.pop %v2842
    %v2844 = vmul.f32 %v2605, 1.442695
    %v2845 = vpow.pop %v2844
    %v2846 = vmul.f32 %v2606, 1.442695
    %v2847 = vpow.pop %v2846
    %v2848 = vmul.f32 %v2607, 1.442695
    %v2849 = vpow.pop %v2848
    %v2850 = vmul.f32 %v2608, 1.442695
    %v2851 = vpow.pop %v2850
    %v2852 = vmul.f32 %v2609, 1.442695
    %v2853 = vpow.pop %v2852
    %v2854 = vmul.f32 %v2610, 1.442695
    %v2855 = vpow.pop %v2854
    %v2856 = vmul.f32 %v2611, 1.442695
    %v2857 = vpow.pop %v2856
    %v2858 = vmul.f32 %v2612, 1.442695
    %v2859 = vpow.pop %v2858
    %v2860 = vmul.f32 %v2613, 1.442695
    %v2861 = vpow.pop %v2860
    %v2862 = vmul.f32 %v2614, 1.442695
    %v2863 = vpow.pop %v2862
    %v2864 = vmul.f32 %v2615, 1.442695
    %v2865 = vpow.pop %v2864
    %v2866 = vmul.f32 %v2616, 1.442695
    %v2867 = vpow.pop %v2866
    %v2868 = vmul.f32 %v2617, 1.442695
    %v2869 = vpow.pop %v2868
    %v2870 = vmul.f32 %v2618, 1.442695
    %v2871 = vpow.pop %v2870
    %v2872 = vmul.f32 %v2619, 1.442695
    %v2873 = vpow.pop %v2872
    %v2874 = vmul.f32 %v2620, 1.442695
    %v2875 = vpow.pop %v2874
    %v2876 = vmul.f32 %v2621, 1.442695
    %v2877 = vpow.pop %v2876
    %v2878 = vmul.f32 %v2622, 1.442695
    %v2879 = vpow.pop %v2878
    %v2880 = vmul.f32 %v2623, 1.442695
    %v2881 = vpow.pop %v2880
    %v2882 = vmul.f32 %v2624, 1.442695
    %v2883 = vpow.pop %v2882
    %v2884 = vmul.f32 %v2625, 1.442695
    %v2885 = vpow.pop %v2884
    %v2886 = vmul.f32 %v2626, 1.442695
    %v2887 = vpow.pop %v2886
    %v2888 = vmul.f32 %v2627, 1.442695
    %v2889 = vpow.pop %v2888
    %v2890 = vmul.f32 %v2628, 1.442695
    %v2891 = vpow.pop %v2890
    %v2892 = vmul.f32 %v2629, 1.442695
    %v2893 = vpow.pop %v2892
    %v2894 = vmul.f32 %v2630, 1.442695
    %v2895 = vpow.pop %v2894
    %v2896 = vmul.f32 %v2631, 1.442695
    %v2897 = vpow.pop %v2896
    %v2898 = vmul.f32 %v2632, 1.442695
    %v2899 = vpow.pop %v2898
    %v2900 = vmul.f32 %v2633, 1.442695
    %v2901 = vpow.pop %v2900
    %v2902 = vmul.f32 %v2634, 1.442695
    %v2903 = vpow.pop %v2902
    %v2904 = vmul.f32 %v2635, 1.442695
    %v2905 = vpow.pop %v2904
    %v2906 = vmul.f32 %v2636, 1.442695
    %v2907 = vpow.pop %v2906
    %v2908 = vmul.f32 %v2637, 1.442695
    %v2909 = vpow.pop %v2908
    %v2910 = vmul.f32 %v2638, 1.442695
    %v2911 = vpow.pop %v2910
    %v2912 = vmul.f32 %v2639, 1.442695
    %v2913 = vpow.pop %v2912
    %v2914 = vmul.f32 %v2640, 1.442695
    %v2915 = vpow.pop %v2914
    %v2916 = vmul.f32 %v2641, 1.442695
    %v2917 = vpow.pop %v2916
    %v2918 = vmul.f32 %v2642, 1.442695
    %v2919 = vpow.pop %v2918
    %v2920 = vmul.f32 %v2643, 1.442695
    %v2921 = vpow.pop %v2920
    %v2922 = vmul.f32 %v2644, 1.442695
    %v2923 = vpow.pop %v2922
    %v2924 = vmul.f32 %v2645, 1.442695
    %v2925 = vpow.pop %v2924
    %v2926 = vmul.f32 %v2646, 1.442695
    %v2927 = vpow.pop %v2926
    %v2928 = vmul.f32 %v2647, 1.442695
    %v2929 = vpow.pop %v2928
    %v2930 = vmul.f32 %v2648, 1.442695
    %v2931 = vpow.pop %v2930
    %v2932 = vmul.f32 %v2649, 1.442695
    %v2933 = vpow.pop %v2932
    %v2934 = vmul.f32 %v2650, 1.442695
    %v2935 = vpow.pop %v2934
    %v2936 = vmul.f32 %v2651, 1.442695
    %v2937 = vpow.pop %v2936
    %v2938 = vmul.f32 %v2652, 1.442695
    %v2939 = vpow.pop %v2938
    %v2940 = vmul.f32 %v2653, 1.442695
    %v2941 = vpow.pop %v2940
    %v2942 = vmul.f32 %v2654, 1.442695
    %v2943 = vpow.pop %v2942
    %v2944 = vmul.f32 %v2655, 1.442695
    %v2945 = vpow.pop %v2944
    %v2946 = vmul.f32 %v2656, 1.442695
    %v2947 = vpow.pop %v2946
    %v2948 = vmul.f32 %v2657, 1.442695
    %v2949 = vpow.pop %v2948
    %v2950 = vmul.f32 %v2658, 1.442695
    %v2951 = vpow.pop %v2950
    %v2952 = vmul.f32 %v2659, 1.442695
    %v2953 = vpow.pop %v2952
    %v2954 = vmul.f32 %v2660, 1.442695
    %v2955 = vpow.pop %v2954
    %v2956 = vmul.f32 %v2661, 1.442695
    %v2957 = vpow.pop %v2956
    %v2958 = vmul.f32 %v2662, 1.442695
    %v2959 = vpow.pop %v2958
    %v2960 = vmul.f32 %v2663, 1.442695
    %v2961 = vpow.pop %v2960
    %v2962 = vmul.f32 %v2664, 1.442695
    %v2963 = vpow.pop %v2962
    %v2964 = vmul.f32 %v2665, 1.442695
    %v2965 = vpow.pop %v2964
    %v2966 = vmul.f32 %v2666, 1.442695
    %v2967 = vpow.pop %v2966
    %v2968 = vmul.f32 %v2667, 1.442695
    %v2969 = vpow.pop %v2968
    %v2970 = vmul.f32 %v2668, 1.442695
    %v2971 = vpow.pop %v2970
    %v2972 = vmul.f32 %v2669, 1.442695
    %v2973 = vpow.pop %v2972
    %v2974 = vmul.f32 %v2670, 1.442695
    %v2975 = vpow.pop %v2974
    %v2976 = vmul.f32 %v2671, 1.442695
    %v2977 = vpow.pop %v2976
    %v2978 = vmul.f32 %v2672, 1.442695
    %v2979 = vpow.pop %v2978
    %v2980 = vmul.f32 %v2673, 1.442695
    %v2981 = vpow.pop %v2980
    %v2982 = vmul.f32 %v2674, 1.442695
    %v2983 = vpow.pop %v2982
    %v2984 = vmul.f32 %v2675, 1.442695
    %v2985 = vpow.pop %v2984
    %v2986 = vmul.f32 %v2676, 1.442695
    %v2987 = vpow.pop %v2986
    %v2988 = vmul.f32 %v2677, 1.442695
    %v2989 = vpow.pop %v2988
    %v2990 = vmul.f32 %v2678, 1.442695
    %v2991 = vpow.pop %v2990
    %v2992 = vmul.f32 %v2679, 1.442695
    %v2993 = vpow.pop %v2992
    %v2994 = vmul.f32 %v2680, 1.442695
    %v2995 = vpow.pop %v2994
    %v2996 = vmul.f32 %v2681, 1.442695
    %v2997 = vpow.pop %v2996
    %v2998 = vmul.f32 %v2682, 1.442695
    %v2999 = vpow.pop %v2998
    %v3000 = vmul.f32 %v2683, 1.442695
    %v3001 = vpow.pop %v3000
    %v3002 = vmul.f32 %v2684, 1.442695
    %v3003 = vpow.pop %v3002
    %v3004 = vmul.f32 %v2685, 1.442695
    %v3005 = vpow.pop %v3004
    %v3006 = vmul.f32 %v2686, 1.442695
    %v3007 = vpow.pop %v3006
    %v3008 = vmul.f32 %v2687, 1.442695
    %v3009 = vpow.pop %v3008
    %v3010 = vmul.f32 %v2688, 1.442695
    %v3011 = vpow.pop %v3010
    %v3012 = vmul.f32 %v2689, 1.442695
    %v3013 = vpow.pop %v3012
    %v3014 = vmul.f32 %v2690, 1.442695
    %v3015 = vpow.pop %v3014
    %v3016 = vmul.f32 %v2691, 1.442695
    %v3017 = vpow.pop %v3016
    %v3018 = vmul.f32 %v2692, 1.442695
    %v3019 = vpow.pop %v3018
    %v3020 = vmul.f32 %v2693, 1.442695
    %v3021 = vpow.pop %v3020
    %v3022 = vmul.f32 %v2694, 1.442695
    %v3023 = vpow.pop %v3022
    %v3024 = vmul.f32 %v2695, 1.442695
    %v3025 = vpow.pop %v3024
    %v3026 = vmul.f32 %v2696, 1.442695
    %v3027 = vpow.pop %v3026
    %v3028 = vmul.f32 %v2697, 1.442695
    %v3029 = vpow.pop %v3028
    %v3030 = vmul.f32 %v2698, 1.442695
    %v3031 = vpow.pop %v3030
    %v3032 = vmul.f32 %v2699, 1.442695
    %v3033 = vpow.pop %v3032
    %v3034 = vmul.f32 %v2700, 1.442695
    %v3035 = vpow.pop %v3034
    %v3036 = vmul.f32 %v2701, 1.442695
    %v3037 = vpow.pop %v3036
    %v3038 = vmul.f32 %v2702, 1.442695
    %v3039 = vpow.pop %v3038
    %v3040 = vmul.f32 %v2703, 1.442695
    %v3041 = vpow.pop %v3040
    %v3042 = vmul.f32 %v2704, 1.442695
    %v3043 = vpow.pop %v3042
    %v3044 = vmul.f32 %v2705, 1.442695
    %v3045 = vpow.pop %v3044
    %v3046 = vmul.f32 %v2706, 1.442695
    %v3047 = vpow.pop %v3046
    %v3048 = vmul.f32 %v2707, 1.442695
    %v3049 = vpow.pop %v3048
    %v3050 = vmul.f32 %v2708, 1.442695
    %v3051 = vpow.pop %v3050
    %v3052 = vmul.f32 %v2709, 1.442695
    %v3053 = vpow.pop %v3052
    %v3054 = vmul.f32 %v2710, 1.442695
    %v3055 = vpow.pop %v3054
    %v3056 = vmul.f32 %v2711, 1.442695
    %v3057 = vpow.pop %v3056
    %v3058 = vmul.f32 %v2712, 1.442695
    %v3059 = vpow.pop %v3058
    %v3060 = vmul.f32 %v2713, 1.442695
    %v3061 = vpow.pop %v3060
    %v3062 = vmul.f32 %v2714, 1.442695
    %v3063 = vpow.pop %v3062
    %v3064 = vmul.f32 %v2715, 1.442695
    %v3065 = vpow.pop %v3064
    %v3066 = vmul.f32 %v2716, 1.442695
    %v3067 = vpow.pop %v3066
    %v3068 = vmul.f32 %v2717, 1.442695
    %v3069 = vpow.pop %v3068
    %v3070 = vmul.f32 %v2718, 1.442695
    %v3071 = vpow.pop %v3070
    %v3072 = vmul.f32 %v2719, 1.442695
    %v3073 = vpow.pop %v3072
    %v3074 = vmul.f32 %v2720, 1.442695
    %v3075 = vpow.pop %v3074
    %v3076 = vmul.f32 %v2721, 1.442695
    %v3077 = vpow.pop %v3076
    %v3078 = vmul.f32 %v2722, 1.442695
    %v3079 = vpow.pop %v3078
    %v3080 = vmul.f32 %v2723, 1.442695
    %v3081 = vpow.pop %v3080
    %v3082 = vmul.f32 %v2724, 1.442695
    %v3083 = vpow.pop %v3082
    %v3084 = vmul.f32 %v2725, 1.442695
    %v3085 = vpow.pop %v3084
    %v3086 = vmul.f32 %v2726, 1.442695
    %v3087 = vpow.pop %v3086
    %v3088 = vmul.f32 %v2727, 1.442695
    %v3089 = vpow.pop %v3088
    %v3090 = vmul.f32 %v2728, 1.442695
    %v3091 = vpow.pop %v3090
    %v3092 = vmul.f32 %v2729, 1.442695
    %v3093 = vpow.pop %v3092
    %v3094 = vmul.f32 %v2730, 1.442695
    %v3095 = vpow.pop %v3094
    %v3096 = vmul.f32 %v2731, 1.442695
    %v3097 = vpow.pop %v3096
    %v3098 = vmul.f32 %v2732, 1.442695
    %v3099 = vpow.pop %v3098
    %v3100 = vmul.f32 %v2733, 1.442695
    %v3101 = vpow.pop %v3100
    %v3102 = vmul.f32 %v2734, 1.442695
    %v3103 = vpow.pop %v3102
    %v3104 = vmul.f32 %v2735, 1.442695
    %v3105 = vpow.pop %v3104
    %v3106 = vmul.f32 %v2736, 1.442695
    %v3107 = vpow.pop %v3106
    %v3108 = vmul.f32 %v2737, 1.442695
    %v3109 = vpow.pop %v3108
    %v3110 = vmul.f32 %v2738, 1.442695
    %v3111 = vpow.pop %v3110
    %v3112 = vmul.f32 %v2739, 1.442695
    %v3113 = vpow.pop %v3112
    %v3114 = vmul.f32 %v2740, 1.442695
    %v3115 = vpow.pop %v3114
    %v3116 = vmul.f32 %v2741, 1.442695
    %v3117 = vpow.pop %v3116
    %v3118 = vmul.f32 %v2742, 1.442695
    %v3119 = vpow.pop %v3118
    %v3120 = vmul.f32 %v2743, 1.442695
    %v3121 = vpow.pop %v3120
    %v3122 = vmul.f32 %v2744, 1.442695
    %v3123 = vpow.pop %v3122
    %v3124 = vmul.f32 %v2745, 1.442695
    %v3125 = vpow.pop %v3124
    %v3126 = vmul.f32 %v2746, 1.442695
    %v3127 = vpow.pop %v3126
    %v3128 = vmul.f32 %v2747, 1.442695
    %v3129 = vpow.pop %v3128
    %v3130 = vmul.f32 %v2748, 1.442695
    %v3131 = vpow.pop %v3130
    %v3132 = vmul.f32 %v2749, 1.442695
    %v3133 = vpow.pop %v3132
    %v3134 = vadd.f32 %v2751, 1.0
    %v3135 = vadd.f32 %v2753, 1.0
    %v3136 = vadd.f32 %v2755, 1.0
    %v3137 = vadd.f32 %v2757, 1.0
    %v3138 = vadd.f32 %v2759, 1.0
    %v3139 = vadd.f32 %v2761, 1.0
    %v3140 = vadd.f32 %v2763, 1.0
    %v3141 = vadd.f32 %v2765, 1.0
    %v3142 = vadd.f32 %v2767, 1.0
    %v3143 = vadd.f32 %v2769, 1.0
    %v3144 = vadd.f32 %v2771, 1.0
    %v3145 = vadd.f32 %v2773, 1.0
    %v3146 = vadd.f32 %v2775, 1.0
    %v3147 = vadd.f32 %v2777, 1.0
    %v3148 = vadd.f32 %v2779, 1.0
    %v3149 = vadd.f32 %v2781, 1.0
    %v3150 = vadd.f32 %v2783, 1.0
    %v3151 = vadd.f32 %v2785, 1.0
    %v3152 = vadd.f32 %v2787, 1.0
    %v3153 = vadd.f32 %v2789, 1.0
    %v3154 = vadd.f32 %v2791, 1.0
    %v3155 = vadd.f32 %v2793, 1.0
    %v3156 = vadd.f32 %v2795, 1.0
    %v3157 = vadd.f32 %v2797, 1.0
    %v3158 = vadd.f32 %v2799, 1.0
    %v3159 = vadd.f32 %v2801, 1.0
    %v3160 = vadd.f32 %v2803, 1.0
    %v3161 = vadd.f32 %v2805, 1.0
    %v3162 = vadd.f32 %v2807, 1.0
    %v3163 = vadd.f32 %v2809, 1.0
    %v3164 = vadd.f32 %v2811, 1.0
    %v3165 = vadd.f32 %v2813, 1.0
    %v3166 = vadd.f32 %v2815, 1.0
    %v3167 = vadd.f32 %v2817, 1.0
    %v3168 = vadd.f32 %v2819, 1.0
    %v3169 = vadd.f32 %v2821, 1.0
    %v3170 = vadd.f32 %v2823, 1.0
    %v3171 = vadd.f32 %v2825, 1.0
    %v3172 = vadd.f32 %v2827, 1.0
    %v3173 = vadd.f32 %v2829, 1.0
    %v3174 = vadd.f32 %v2831, 1.0
    %v3175 = vadd.f32 %v2833, 1.0
    %v3176 = vadd.f32 %v2835, 1.0
    %v3177 = vadd.f32 %v2837, 1.0
    %v3178 = vadd.f32 %v2839, 1.0
    %v3179 = vadd.f32 %v2841, 1.0
    %v3180 = vadd.f32 %v2843, 1.0
    %v3181 = vadd.f32 %v2845, 1.0
    %v3182 = vadd.f32 %v2847, 1.0
    %v3183 = vadd.f32 %v2849, 1.0
    %v3184 = vadd.f32 %v2851, 1.0
    %v3185 = vadd.f32 %v2853, 1.0
    %v3186 = vadd.f32 %v2855, 1.0
    %v3187 = vadd.f32 %v2857, 1.0
    %v3188 = vadd.f32 %v2859, 1.0
    %v3189 = vadd.f32 %v2861, 1.0
    %v3190 = vadd.f32 %v2863, 1.0
    %v3191 = vadd.f32 %v2865, 1.0
    %v3192 = vadd.f32 %v2867, 1.0
    %v3193 = vadd.f32 %v2869, 1.0
    %v3194 = vadd.f32 %v2871, 1.0
    %v3195 = vadd.f32 %v2873, 1.0
    %v3196 = vadd.f32 %v2875, 1.0
    %v3197 = vadd.f32 %v2877, 1.0
    %v3198 = vadd.f32 %v2879, 1.0
    %v3199 = vadd.f32 %v2881, 1.0
    %v3200 = vadd.f32 %v2883, 1.0
    %v3201 = vadd.f32 %v2885, 1.0
    %v3202 = vadd.f32 %v2887, 1.0
    %v3203 = vadd.f32 %v2889, 1.0
    %v3204 = vadd.f32 %v2891, 1.0
    %v3205 = vadd.f32 %v2893, 1.0
    %v3206 = vadd.f32 %v2895, 1.0
    %v3207 = vadd.f32 %v2897, 1.0
    %v3208 = vadd.f32 %v2899, 1.0
    %v3209 = vadd.f32 %v2901, 1.0
    %v3210 = vadd.f32 %v2903, 1.0
    %v3211 = vadd.f32 %v2905, 1.0
    %v3212 = vadd.f32 %v2907, 1.0
    %v3213 = vadd.f32 %v2909, 1.0
    %v3214 = vadd.f32 %v2911, 1.0
    %v3215 = vadd.f32 %v2913, 1.0
    %v3216 = vadd.f32 %v2915, 1.0
    %v3217 = vadd.f32 %v2917, 1.0
    %v3218 = vadd.f32 %v2919, 1.0
    %v3219 = vadd.f32 %v2921, 1.0
    %v3220 = vadd.f32 %v2923, 1.0
    %v3221 = vadd.f32 %v2925, 1.0
    %v3222 = vadd.f32 %v2927, 1.0
    %v3223 = vadd.f32 %v2929, 1.0
    %v3224 = vadd.f32 %v2931, 1.0
    %v3225 = vadd.f32 %v2933, 1.0
    %v3226 = vadd.f32 %v2935, 1.0
    %v3227 = vadd.f32 %v2937, 1.0
    %v3228 = vadd.f32 %v2939, 1.0
    %v3229 = vadd.f32 %v2941, 1.0
    %v3230 = vadd.f32 %v2943, 1.0
    %v3231 = vadd.f32 %v2945, 1.0
    %v3232 = vadd.f32 %v2947, 1.0
    %v3233 = vadd.f32 %v2949, 1.0
    %v3234 = vadd.f32 %v2951, 1.0
    %v3235 = vadd.f32 %v2953, 1.0
    %v3236 = vadd.f32 %v2955, 1.0
    %v3237 = vadd.f32 %v2957, 1.0
    %v3238 = vadd.f32 %v2959, 1.0
    %v3239 = vadd.f32 %v2961, 1.0
    %v3240 = vadd.f32 %v2963, 1.0
    %v3241 = vadd.f32 %v2965, 1.0
    %v3242 = vadd.f32 %v2967, 1.0
    %v3243 = vadd.f32 %v2969, 1.0
    %v3244 = vadd.f32 %v2971, 1.0
    %v3245 = vadd.f32 %v2973, 1.0
    %v3246 = vadd.f32 %v2975, 1.0
    %v3247 = vadd.f32 %v2977, 1.0
    %v3248 = vadd.f32 %v2979, 1.0
    %v3249 = vadd.f32 %v2981, 1.0
    %v3250 = vadd.f32 %v2983, 1.0
    %v3251 = vadd.f32 %v2985, 1.0
    %v3252 = vadd.f32 %v2987, 1.0
    %v3253 = vadd.f32 %v2989, 1.0
    %v3254 = vadd.f32 %v2991, 1.0
    %v3255 = vadd.f32 %v2993, 1.0
    %v3256 = vadd.f32 %v2995, 1.0
    %v3257 = vadd.f32 %v2997, 1.0
    %v3258 = vadd.f32 %v2999, 1.0
    %v3259 = vadd.f32 %v3001, 1.0
    %v3260 = vadd.f32 %v3003, 1.0
    %v3261 = vadd.f32 %v3005, 1.0
    %v3262 = vadd.f32 %v3007, 1.0
    %v3263 = vadd.f32 %v3009, 1.0
    %v3264 = vadd.f32 %v3011, 1.0
    %v3265 = vadd.f32 %v3013, 1.0
    %v3266 = vadd.f32 %v3015, 1.0
    %v3267 = vadd.f32 %v3017, 1.0
    %v3268 = vadd.f32 %v3019, 1.0
    %v3269 = vadd.f32 %v3021, 1.0
    %v3270 = vadd.f32 %v3023, 1.0
    %v3271 = vadd.f32 %v3025, 1.0
    %v3272 = vadd.f32 %v3027, 1.0
    %v3273 = vadd.f32 %v3029, 1.0
    %v3274 = vadd.f32 %v3031, 1.0
    %v3275 = vadd.f32 %v3033, 1.0
    %v3276 = vadd.f32 %v3035, 1.0
    %v3277 = vadd.f32 %v3037, 1.0
    %v3278 = vadd.f32 %v3039, 1.0
    %v3279 = vadd.f32 %v3041, 1.0
    %v3280 = vadd.f32 %v3043, 1.0
    %v3281 = vadd.f32 %v3045, 1.0
    %v3282 = vadd.f32 %v3047, 1.0
    %v3283 = vadd.f32 %v3049, 1.0
    %v3284 = vadd.f32 %v3051, 1.0
    %v3285 = vadd.f32 %v3053, 1.0
    %v3286 = vadd.f32 %v3055, 1.0
    %v3287 = vadd.f32 %v3057, 1.0
    %v3288 = vadd.f32 %v3059, 1.0
    %v3289 = vadd.f32 %v3061, 1.0
    %v3290 = vadd.f32 %v3063, 1.0
    %v3291 = vadd.f32 %v3065, 1.0
    %v3292 = vadd.f32 %v3067, 1.0
    %v3293 = vadd.f32 %v3069, 1.0
    %v3294 = vadd.f32 %v3071, 1.0
    %v3295 = vadd.f32 %v3073, 1.0
    %v3296 = vadd.f32 %v3075, 1.0
    %v3297 = vadd.f32 %v3077, 1.0
    %v3298 = vadd.f32 %v3079, 1.0
    %v3299 = vadd.f32 %v3081, 1.0
    %v3300 = vadd.f32 %v3083, 1.0
    %v3301 = vadd.f32 %v3085, 1.0
    %v3302 = vadd.f32 %v3087, 1.0
    %v3303 = vadd.f32 %v3089, 1.0
    %v3304 = vadd.f32 %v3091, 1.0
    %v3305 = vadd.f32 %v3093, 1.0
    %v3306 = vadd.f32 %v3095, 1.0
    %v3307 = vadd.f32 %v3097, 1.0
    %v3308 = vadd.f32 %v3099, 1.0
    %v3309 = vadd.f32 %v3101, 1.0
    %v3310 = vadd.f32 %v3103, 1.0
    %v3311 = vadd.f32 %v3105, 1.0
    %v3312 = vadd.f32 %v3107, 1.0
    %v3313 = vadd.f32 %v3109, 1.0
    %v3314 = vadd.f32 %v3111, 1.0
    %v3315 = vadd.f32 %v3113, 1.0
    %v3316 = vadd.f32 %v3115, 1.0
    %v3317 = vadd.f32 %v3117, 1.0
    %v3318 = vadd.f32 %v3119, 1.0
    %v3319 = vadd.f32 %v3121, 1.0
    %v3320 = vadd.f32 %v3123, 1.0
    %v3321 = vadd.f32 %v3125, 1.0
    %v3322 = vadd.f32 %v3127, 1.0
    %v3323 = vadd.f32 %v3129, 1.0
    %v3324 = vadd.f32 %v3131, 1.0
    %v3325 = vadd.f32 %v3133, 1.0
    %v3326 = vrcp.pop %v3134
    %v3327 = vmul.f32 1.0, %v3326
    %v3328 = vrcp.pop %v3135
    %v3329 = vmul.f32 1.0, %v3328
    %v3330 = vrcp.pop %v3136
    %v3331 = vmul.f32 1.0, %v3330
    %v3332 = vrcp.pop %v3137
    %v3333 = vmul.f32 1.0, %v3332
    %v3334 = vrcp.pop %v3138
    %v3335 = vmul.f32 1.0, %v3334
    %v3336 = vrcp.pop %v3139
    %v3337 = vmul.f32 1.0, %v3336
    %v3338 = vrcp.pop %v3140
    %v3339 = vmul.f32 1.0, %v3338
    %v3340 = vrcp.pop %v3141
    %v3341 = vmul.f32 1.0, %v3340
    %v3342 = vrcp.pop %v3142
    %v3343 = vmul.f32 1.0, %v3342
    %v3344 = vrcp.pop %v3143
    %v3345 = vmul.f32 1.0, %v3344
    %v3346 = vrcp.pop %v3144
    %v3347 = vmul.f32 1.0, %v3346
    %v3348 = vrcp.pop %v3145
    %v3349 = vmul.f32 1.0, %v3348
    %v3350 = vrcp.pop %v3146
    %v3351 = vmul.f32 1.0, %v3350
    %v3352 = vrcp.pop %v3147
    %v3353 = vmul.f32 1.0, %v3352
    %v3354 = vrcp.pop %v3148
    %v3355 = vmul.f32 1.0, %v3354
    %v3356 = vrcp.pop %v3149
    %v3357 = vmul.f32 1.0, %v3356
    %v3358 = vrcp.pop %v3150
    %v3359 = vmul.f32 1.0, %v3358
    %v3360 = vrcp.pop %v3151
    %v3361 = vmul.f32 1.0, %v3360
    %v3362 = vrcp.pop %v3152
    %v3363 = vmul.f32 1.0, %v3362
    %v3364 = vrcp.pop %v3153
    %v3365 = vmul.f32 1.0, %v3364
    %v3366 = vrcp.pop %v3154
    %v3367 = vmul.f32 1.0, %v3366
    %v3368 = vrcp.pop %v3155
    %v3369 = vmul.f32 1.0, %v3368
    %v3370 = vrcp.pop %v3156
    %v3371 = vmul.f32 1.0, %v3370
    %v3372 = vrcp.pop %v3157
    %v3373 = vmul.f32 1.0, %v3372
    %v3374 = vrcp.pop %v3158
    %v3375 = vmul.f32 1.0, %v3374
    %v3376 = vrcp.pop %v3159
    %v3377 = vmul.f32 1.0, %v3376
    %v3378 = vrcp.pop %v3160
    %v3379 = vmul.f32 1.0, %v3378
    %v3380 = vrcp.pop %v3161
    %v3381 = vmul.f32 1.0, %v3380
    %v3382 = vrcp.pop %v3162
    %v3383 = vmul.f32 1.0, %v3382
    %v3384 = vrcp.pop %v3163
    %v3385 = vmul.f32 1.0, %v3384
    %v3386 = vrcp.pop %v3164
    %v3387 = vmul.f32 1.0, %v3386
    %v3388 = vrcp.pop %v3165
    %v3389 = vmul.f32 1.0, %v3388
    %v3390 = vrcp.pop %v3166
    %v3391 = vmul.f32 1.0, %v3390
    %v3392 = vrcp.pop %v3167
    %v3393 = vmul.f32 1.0, %v3392
    %v3394 = vrcp.pop %v3168
    %v3395 = vmul.f32 1.0, %v3394
    %v3396 = vrcp.pop %v3169
    %v3397 = vmul.f32 1.0, %v3396
    %v3398 = vrcp.pop %v3170
    %v3399 = vmul.f32 1.0, %v3398
    %v3400 = vrcp.pop %v3171
    %v3401 = vmul.f32 1.0, %v3400
    %v3402 = vrcp.pop %v3172
    %v3403 = vmul.f32 1.0, %v3402
    %v3404 = vrcp.pop %v3173
    %v3405 = vmul.f32 1.0, %v3404
    %v3406 = vrcp.pop %v3174
    %v3407 = vmul.f32 1.0, %v3406
    %v3408 = vrcp.pop %v3175
    %v3409 = vmul.f32 1.0, %v3408
    %v3410 = vrcp.pop %v3176
    %v3411 = vmul.f32 1.0, %v3410
    %v3412 = vrcp.pop %v3177
    %v3413 = vmul.f32 1.0, %v3412
    %v3414 = vrcp.pop %v3178
    %v3415 = vmul.f32 1.0, %v3414
    %v3416 = vrcp.pop %v3179
    %v3417 = vmul.f32 1.0, %v3416
    %v3418 = vrcp.pop %v3180
    %v3419 = vmul.f32 1.0, %v3418
    %v3420 = vrcp.pop %v3181
    %v3421 = vmul.f32 1.0, %v3420
    %v3422 = vrcp.pop %v3182
    %v3423 = vmul.f32 1.0, %v3422
    %v3424 = vrcp.pop %v3183
    %v3425 = vmul.f32 1.0, %v3424
    %v3426 = vrcp.pop %v3184
    %v3427 = vmul.f32 1.0, %v3426
    %v3428 = vrcp.pop %v3185
    %v3429 = vmul.f32 1.0, %v3428
    %v3430 = vrcp.pop %v3186
    %v3431 = vmul.f32 1.0, %v3430
    %v3432 = vrcp.pop %v3187
    %v3433 = vmul.f32 1.0, %v3432
    %v3434 = vrcp.pop %v3188
    %v3435 = vmul.f32 1.0, %v3434
    %v3436 = vrcp.pop %v3189
    %v3437 = vmul.f32 1.0, %v3436
    %v3438 = vrcp.pop %v3190
    %v3439 = vmul.f32 1.0, %v3438
    %v3440 = vrcp.pop %v3191
    %v3441 = vmul.f32 1.0, %v3440
    %v3442 = vrcp.pop %v3192
    %v3443 = vmul.f32 1.0, %v3442
    %v3444 = vrcp.pop %v3193
    %v3445 = vmul.f32 1.0, %v3444
    %v3446 = vrcp.pop %v3194
    %v3447 = vmul.f32 1.0, %v3446
    %v3448 = vrcp.pop %v3195
    %v3449 = vmul.f32 1.0, %v3448
    %v3450 = vrcp.pop %v3196
    %v3451 = vmul.f32 1.0, %v3450
    %v3452 = vrcp.pop %v3197
    %v3453 = vmul.f32 1.0, %v3452
    %v3454 = vrcp.pop %v3198
    %v3455 = vmul.f32 1.0, %v3454
    %v3456 = vrcp.pop %v3199
    %v3457 = vmul.f32 1.0, %v3456
    %v3458 = vrcp.pop %v3200
    %v3459 = vmul.f32 1.0, %v3458
    %v3460 = vrcp.pop %v3201
    %v3461 = vmul.f32 1.0, %v3460
    %v3462 = vrcp.pop %v3202
    %v3463 = vmul.f32 1.0, %v3462
    %v3464 = vrcp.pop %v3203
    %v3465 = vmul.f32 1.0, %v3464
    %v3466 = vrcp.pop %v3204
    %v3467 = vmul.f32 1.0, %v3466
    %v3468 = vrcp.pop %v3205
    %v3469 = vmul.f32 1.0, %v3468
    %v3470 = vrcp.pop %v3206
    %v3471 = vmul.f32 1.0, %v3470
    %v3472 = vrcp.pop %v3207
    %v3473 = vmul.f32 1.0, %v3472
    %v3474 = vrcp.pop %v3208
    %v3475 = vmul.f32 1.0, %v3474
    %v3476 = vrcp.pop %v3209
    %v3477 = vmul.f32 1.0, %v3476
    %v3478 = vrcp.pop %v3210
    %v3479 = vmul.f32 1.0, %v3478
    %v3480 = vrcp.pop %v3211
    %v3481 = vmul.f32 1.0, %v3480
    %v3482 = vrcp.pop %v3212
    %v3483 = vmul.f32 1.0, %v3482
    %v3484 = vrcp.pop %v3213
    %v3485 = vmul.f32 1.0, %v3484
    %v3486 = vrcp.pop %v3214
    %v3487 = vmul.f32 1.0, %v3486
    %v3488 = vrcp.pop %v3215
    %v3489 = vmul.f32 1.0, %v3488
    %v3490 = vrcp.pop %v3216
    %v3491 = vmul.f32 1.0, %v3490
    %v3492 = vrcp.pop %v3217
    %v3493 = vmul.f32 1.0, %v3492
    %v3494 = vrcp.pop %v3218
    %v3495 = vmul.f32 1.0, %v3494
    %v3496 = vrcp.pop %v3219
    %v3497 = vmul.f32 1.0, %v3496
    %v3498 = vrcp.pop %v3220
    %v3499 = vmul.f32 1.0, %v3498
    %v3500 = vrcp.pop %v3221
    %v3501 = vmul.f32 1.0, %v3500
    %v3502 = vrcp.pop %v3222
    %v3503 = vmul.f32 1.0, %v3502
    %v3504 = vrcp.pop %v3223
    %v3505 = vmul.f32 1.0, %v3504
    %v3506 = vrcp.pop %v3224
    %v3507 = vmul.f32 1.0, %v3506
    %v3508 = vrcp.pop %v3225
    %v3509 = vmul.f32 1.0, %v3508
    %v3510 = vrcp.pop %v3226
    %v3511 = vmul.f32 1.0, %v3510
    %v3512 = vrcp.pop %v3227
    %v3513 = vmul.f32 1.0, %v3512
    %v3514 = vrcp.pop %v3228
    %v3515 = vmul.f32 1.0, %v3514
    %v3516 = vrcp.pop %v3229
    %v3517 = vmul.f32 1.0, %v3516
    %v3518 = vrcp.pop %v3230
    %v3519 = vmul.f32 1.0, %v3518
    %v3520 = vrcp.pop %v3231
    %v3521 = vmul.f32 1.0, %v3520
    %v3522 = vrcp.pop %v3232
    %v3523 = vmul.f32 1.0, %v3522
    %v3524 = vrcp.pop %v3233
    %v3525 = vmul.f32 1.0, %v3524
    %v3526 = vrcp.pop %v3234
    %v3527 = vmul.f32 1.0, %v3526
    %v3528 = vrcp.pop %v3235
    %v3529 = vmul.f32 1.0, %v3528
    %v3530 = vrcp.pop %v3236
    %v3531 = vmul.f32 1.0, %v3530
    %v3532 = vrcp.pop %v3237
    %v3533 = vmul.f32 1.0, %v3532
    %v3534 = vrcp.pop %v3238
    %v3535 = vmul.f32 1.0, %v3534
    %v3536 = vrcp.pop %v3239
    %v3537 = vmul.f32 1.0, %v3536
    %v3538 = vrcp.pop %v3240
    %v3539 = vmul.f32 1.0, %v3538
    %v3540 = vrcp.pop %v3241
    %v3541 = vmul.f32 1.0, %v3540
    %v3542 = vrcp.pop %v3242
    %v3543 = vmul.f32 1.0, %v3542
    %v3544 = vrcp.pop %v3243
    %v3545 = vmul.f32 1.0, %v3544
    %v3546 = vrcp.pop %v3244
    %v3547 = vmul.f32 1.0, %v3546
    %v3548 = vrcp.pop %v3245
    %v3549 = vmul.f32 1.0, %v3548
    %v3550 = vrcp.pop %v3246
    %v3551 = vmul.f32 1.0, %v3550
    %v3552 = vrcp.pop %v3247
    %v3553 = vmul.f32 1.0, %v3552
    %v3554 = vrcp.pop %v3248
    %v3555 = vmul.f32 1.0, %v3554
    %v3556 = vrcp.pop %v3249
    %v3557 = vmul.f32 1.0, %v3556
    %v3558 = vrcp.pop %v3250
    %v3559 = vmul.f32 1.0, %v3558
    %v3560 = vrcp.pop %v3251
    %v3561 = vmul.f32 1.0, %v3560
    %v3562 = vrcp.pop %v3252
    %v3563 = vmul.f32 1.0, %v3562
    %v3564 = vrcp.pop %v3253
    %v3565 = vmul.f32 1.0, %v3564
    %v3566 = vrcp.pop %v3254
    %v3567 = vmul.f32 1.0, %v3566
    %v3568 = vrcp.pop %v3255
    %v3569 = vmul.f32 1.0, %v3568
    %v3570 = vrcp.pop %v3256
    %v3571 = vmul.f32 1.0, %v3570
    %v3572 = vrcp.pop %v3257
    %v3573 = vmul.f32 1.0, %v3572
    %v3574 = vrcp.pop %v3258
    %v3575 = vmul.f32 1.0, %v3574
    %v3576 = vrcp.pop %v3259
    %v3577 = vmul.f32 1.0, %v3576
    %v3578 = vrcp.pop %v3260
    %v3579 = vmul.f32 1.0, %v3578
    %v3580 = vrcp.pop %v3261
    %v3581 = vmul.f32 1.0, %v3580
    %v3582 = vrcp.pop %v3262
    %v3583 = vmul.f32 1.0, %v3582
    %v3584 = vrcp.pop %v3263
    %v3585 = vmul.f32 1.0, %v3584
    %v3586 = vrcp.pop %v3264
    %v3587 = vmul.f32 1.0, %v3586
    %v3588 = vrcp.pop %v3265
    %v3589 = vmul.f32 1.0, %v3588
    %v3590 = vrcp.pop %v3266
    %v3591 = vmul.f32 1.0, %v3590
    %v3592 = vrcp.pop %v3267
    %v3593 = vmul.f32 1.0, %v3592
    %v3594 = vrcp.pop %v3268
    %v3595 = vmul.f32 1.0, %v3594
    %v3596 = vrcp.pop %v3269
    %v3597 = vmul.f32 1.0, %v3596
    %v3598 = vrcp.pop %v3270
    %v3599 = vmul.f32 1.0, %v3598
    %v3600 = vrcp.pop %v3271
    %v3601 = vmul.f32 1.0, %v3600
    %v3602 = vrcp.pop %v3272
    %v3603 = vmul.f32 1.0, %v3602
    %v3604 = vrcp.pop %v3273
    %v3605 = vmul.f32 1.0, %v3604
    %v3606 = vrcp.pop %v3274
    %v3607 = vmul.f32 1.0, %v3606
    %v3608 = vrcp.pop %v3275
    %v3609 = vmul.f32 1.0, %v3608
    %v3610 = vrcp.pop %v3276
    %v3611 = vmul.f32 1.0, %v3610
    %v3612 = vrcp.pop %v3277
    %v3613 = vmul.f32 1.0, %v3612
    %v3614 = vrcp.pop %v3278
    %v3615 = vmul.f32 1.0, %v3614
    %v3616 = vrcp.pop %v3279
    %v3617 = vmul.f32 1.0, %v3616
    %v3618 = vrcp.pop %v3280
    %v3619 = vmul.f32 1.0, %v3618
    %v3620 = vrcp.pop %v3281
    %v3621 = vmul.f32 1.0, %v3620
    %v3622 = vrcp.pop %v3282
    %v3623 = vmul.f32 1.0, %v3622
    %v3624 = vrcp.pop %v3283
    %v3625 = vmul.f32 1.0, %v3624
    %v3626 = vrcp.pop %v3284
    %v3627 = vmul.f32 1.0, %v3626
    %v3628 = vrcp.pop %v3285
    %v3629 = vmul.f32 1.0, %v3628
    %v3630 = vrcp.pop %v3286
    %v3631 = vmul.f32 1.0, %v3630
    %v3632 = vrcp.pop %v3287
    %v3633 = vmul.f32 1.0, %v3632
    %v3634 = vrcp.pop %v3288
    %v3635 = vmul.f32 1.0, %v3634
    %v3636 = vrcp.pop %v3289
    %v3637 = vmul.f32 1.0, %v3636
    %v3638 = vrcp.pop %v3290
    %v3639 = vmul.f32 1.0, %v3638
    %v3640 = vrcp.pop %v3291
    %v3641 = vmul.f32 1.0, %v3640
    %v3642 = vrcp.pop %v3292
    %v3643 = vmul.f32 1.0, %v3642
    %v3644 = vrcp.pop %v3293
    %v3645 = vmul.f32 1.0, %v3644
    %v3646 = vrcp.pop %v3294
    %v3647 = vmul.f32 1.0, %v3646
    %v3648 = vrcp.pop %v3295
    %v3649 = vmul.f32 1.0, %v3648
    %v3650 = vrcp.pop %v3296
    %v3651 = vmul.f32 1.0, %v3650
    %v3652 = vrcp.pop %v3297
    %v3653 = vmul.f32 1.0, %v3652
    %v3654 = vrcp.pop %v3298
    %v3655 = vmul.f32 1.0, %v3654
    %v3656 = vrcp.pop %v3299
    %v3657 = vmul.f32 1.0, %v3656
    %v3658 = vrcp.pop %v3300
    %v3659 = vmul.f32 1.0, %v3658
    %v3660 = vrcp.pop %v3301
    %v3661 = vmul.f32 1.0, %v3660
    %v3662 = vrcp.pop %v3302
    %v3663 = vmul.f32 1.0, %v3662
    %v3664 = vrcp.pop %v3303
    %v3665 = vmul.f32 1.0, %v3664
    %v3666 = vrcp.pop %v3304
    %v3667 = vmul.f32 1.0, %v3666
    %v3668 = vrcp.pop %v3305
    %v3669 = vmul.f32 1.0, %v3668
    %v3670 = vrcp.pop %v3306
    %v3671 = vmul.f32 1.0, %v3670
    %v3672 = vrcp.pop %v3307
    %v3673 = vmul.f32 1.0, %v3672
    %v3674 = vrcp.pop %v3308
    %v3675 = vmul.f32 1.0, %v3674
    %v3676 = vrcp.pop %v3309
    %v3677 = vmul.f32 1.0, %v3676
    %v3678 = vrcp.pop %v3310
    %v3679 = vmul.f32 1.0, %v3678
    %v3680 = vrcp.pop %v3311
    %v3681 = vmul.f32 1.0, %v3680
    %v3682 = vrcp.pop %v3312
    %v3683 = vmul.f32 1.0, %v3682
    %v3684 = vrcp.pop %v3313
    %v3685 = vmul.f32 1.0, %v3684
    %v3686 = vrcp.pop %v3314
    %v3687 = vmul.f32 1.0, %v3686
    %v3688 = vrcp.pop %v3315
    %v3689 = vmul.f32 1.0, %v3688
    %v3690 = vrcp.pop %v3316
    %v3691 = vmul.f32 1.0, %v3690
    %v3692 = vrcp.pop %v3317
    %v3693 = vmul.f32 1.0, %v3692
    %v3694 = vrcp.pop %v3318
    %v3695 = vmul.f32 1.0, %v3694
    %v3696 = vrcp.pop %v3319
    %v3697 = vmul.f32 1.0, %v3696
    %v3698 = vrcp.pop %v3320
    %v3699 = vmul.f32 1.0, %v3698
    %v3700 = vrcp.pop %v3321
    %v3701 = vmul.f32 1.0, %v3700
    %v3702 = vrcp.pop %v3322
    %v3703 = vmul.f32 1.0, %v3702
    %v3704 = vrcp.pop %v3323
    %v3705 = vmul.f32 1.0, %v3704
    %v3706 = vrcp.pop %v3324
    %v3707 = vmul.f32 1.0, %v3706
    %v3708 = vrcp.pop %v3325
    %v3709 = vmul.f32 1.0, %v3708
    %v3710 = vmul.f32 %v1435, %v3327
    %v3711 = vmul.f32 %v1437, %v3329
    %v3712 = vmul.f32 %v1628, %v3331
    %v3713 = vmul.f32 %v1630, %v3333
    %v3714 = vmul.f32 %v1821, %v3335
    %v3715 = vmul.f32 %v1823, %v3337
    %v3716 = vmul.f32 %v1439, %v3339
    %v3717 = vmul.f32 %v1441, %v3341
    %v3718 = vmul.f32 %v1632, %v3343
    %v3719 = vmul.f32 %v1634, %v3345
    %v3720 = vmul.f32 %v1825, %v3347
    %v3721 = vmul.f32 %v1827, %v3349
    %v3722 = vmul.f32 %v1445, %v3351
    %v3723 = vmul.f32 %v1447, %v3353
    %v3724 = vmul.f32 %v1638, %v3355
    %v3725 = vmul.f32 %v1640, %v3357
    %v3726 = vmul.f32 %v1831, %v3359
    %v3727 = vmul.f32 %v1833, %v3361
    %v3728 = vmul.f32 %v1449, %v3363
    %v3729 = vmul.f32 %v1451, %v3365
    %v3730 = vmul.f32 %v1642, %v3367
    %v3731 = vmul.f32 %v1644, %v3369
    %v3732 = vmul.f32 %v1835, %v3371
    %v3733 = vmul.f32 %v1837, %v3373
    %v3734 = vmul.f32 %v1455, %v3375
    %v3735 = vmul.f32 %v1457, %v3377
    %v3736 = vmul.f32 %v1648, %v3379
    %v3737 = vmul.f32 %v1650, %v3381
    %v3738 = vmul.f32 %v1841, %v3383
    %v3739 = vmul.f32 %v1843, %v3385
    %v3740 = vmul.f32 %v1459, %v3387
    %v3741 = vmul.f32 %v1461, %v3389
    %v3742 = vmul.f32 %v1652, %v3391
    %v3743 = vmul.f32 %v1654, %v3393
    %v3744 = vmul.f32 %v1845, %v3395
    %v3745 = vmul.f32 %v1847, %v3397
    %v3746 = vmul.f32 %v1465, %v3399
    %v3747 = vmul.f32 %v1467, %v3401
    %v3748 = vmul.f32 %v1658, %v3403
    %v3749 = vmul.f32 %v1660, %v3405
    %v3750 = vmul.f32 %v1851, %v3407
    %v3751 = vmul.f32 %v1853, %v3409
    %v3752 = vmul.f32 %v1469, %v3411
    %v3753 = vmul.f32 %v1471, %v3413
    %v3754 = vmul.f32 %v1662, %v3415
    %v3755 = vmul.f32 %v1664, %v3417
    %v3756 = vmul.f32 %v1855, %v3419
    %v3757 = vmul.f32 %v1857, %v3421
    %v3758 = vmul.f32 %v1475, %v3423
    %v3759 = vmul.f32 %v1477, %v3425
    %v3760 = vmul.f32 %v1668, %v3427
    %v3761 = vmul.f32 %v1670, %v3429
    %v3762 = vmul.f32 %v1861, %v3431
    %v3763 = vmul.f32 %v1863, %v3433
    %v3764 = vmul.f32 %v1479, %v3435
    %v3765 = vmul.f32 %v1481, %v3437
    %v3766 = vmul.f32 %v1672, %v3439
    %v3767 = vmul.f32 %v1674, %v3441
    %v3768 = vmul.f32 %v1865, %v3443
    %v3769 = vmul.f32 %v1867, %v3445
    %v3770 = vmul.f32 %v1485, %v3447
    %v3771 = vmul.f32 %v1487, %v3449
    %v3772 = vmul.f32 %v1678, %v3451
    %v3773 = vmul.f32 %v1680, %v3453
    %v3774 = vmul.f32 %v1871, %v3455
    %v3775 = vmul.f32 %v1873, %v3457
    %v3776 = vmul.f32 %v1489, %v3459
    %v3777 = vmul.f32 %v1491, %v3461
    %v3778 = vmul.f32 %v1682, %v3463
    %v3779 = vmul.f32 %v1684, %v3465
    %v3780 = vmul.f32 %v1875, %v3467
    %v3781 = vmul.f32 %v1877, %v3469
    %v3782 = vmul.f32 %v1495, %v3471
    %v3783 = vmul.f32 %v1497, %v3473
    %v3784 = vmul.f32 %v1688, %v3475
    %v3785 = vmul.f32 %v1690, %v3477
    %v3786 = vmul.f32 %v1881, %v3479
    %v3787 = vmul.f32 %v1883, %v3481
    %v3788 = vmul.f32 %v1499, %v3483
    %v3789 = vmul.f32 %v1501, %v3485
    %v3790 = vmul.f32 %v1692, %v3487
    %v3791 = vmul.f32 %v1694, %v3489
    %v3792 = vmul.f32 %v1885, %v3491
    %v3793 = vmul.f32 %v1887, %v3493
    %v3794 = vmul.f32 %v1505, %v3495
    %v3795 = vmul.f32 %v1507, %v3497
    %v3796 = vmul.f32 %v1698, %v3499
    %v3797 = vmul.f32 %v1700, %v3501
    %v3798 = vmul.f32 %v1891, %v3503
    %v3799 = vmul.f32 %v1893, %v3505
    %v3800 = vmul.f32 %v1509, %v3507
    %v3801 = vmul.f32 %v1511, %v3509
    %v3802 = vmul.f32 %v1702, %v3511
    %v3803 = vmul.f32 %v1704, %v3513
    %v3804 = vmul.f32 %v1895, %v3515
    %v3805 = vmul.f32 %v1897, %v3517
    %v3806 = vmul.f32 %v1515, %v3519
    %v3807 = vmul.f32 %v1517, %v3521
    %v3808 = vmul.f32 %v1708, %v3523
    %v3809 = vmul.f32 %v1710, %v3525
    %v3810 = vmul.f32 %v1901, %v3527
    %v3811 = vmul.f32 %v1903, %v3529
    %v3812 = vmul.f32 %v1519, %v3531
    %v3813 = vmul.f32 %v1521, %v3533
    %v3814 = vmul.f32 %v1712, %v3535
    %v3815 = vmul.f32 %v1714, %v3537
    %v3816 = vmul.f32 %v1905, %v3539
    %v3817 = vmul.f32 %v1907, %v3541
    %v3818 = vmul.f32 %v1525, %v3543
    %v3819 = vmul.f32 %v1527, %v3545
    %v3820 = vmul.f32 %v1718, %v3547
    %v3821 = vmul.f32 %v1720, %v3549
    %v3822 = vmul.f32 %v1911, %v3551
    %v3823 = vmul.f32 %v1913, %v3553
    %v3824 = vmul.f32 %v1529, %v3555
    %v3825 = vmul.f32 %v1531, %v3557
    %v3826 = vmul.f32 %v1722, %v3559
    %v3827 = vmul.f32 %v1724, %v3561
    %v3828 = vmul.f32 %v1915, %v3563
    %v3829 = vmul.f32 %v1917, %v3565
    %v3830 = vmul.f32 %v1535, %v3567
    %v3831 = vmul.f32 %v1537, %v3569
    %v3832 = vmul.f32 %v1728, %v3571
    %v3833 = vmul.f32 %v1730, %v3573
    %v3834 = vmul.f32 %v1921, %v3575
    %v3835 = vmul.f32 %v1923, %v3577
    %v3836 = vmul.f32 %v1539, %v3579
    %v3837 = vmul.f32 %v1541, %v3581
    %v3838 = vmul.f32 %v1732, %v3583
    %v3839 = vmul.f32 %v1734, %v3585
    %v3840 = vmul.f32 %v1925, %v3587
    %v3841 = vmul.f32 %v1927, %v3589
    %v3842 = vmul.f32 %v1545, %v3591
    %v3843 = vmul.f32 %v1547, %v3593
    %v3844 = vmul.f32 %v1738, %v3595
    %v3845 = vmul.f32 %v1740, %v3597
    %v3846 = vmul.f32 %v1931, %v3599
    %v3847 = vmul.f32 %v1933, %v3601
    %v3848 = vmul.f32 %v1549, %v3603
    %v3849 = vmul.f32 %v1551, %v3605
    %v3850 = vmul.f32 %v1742, %v3607
    %v3851 = vmul.f32 %v1744, %v3609
    %v3852 = vmul.f32 %v1935, %v3611
    %v3853 = vmul.f32 %v1937, %v3613
    %v3854 = vmul.f32 %v1555, %v3615
    %v3855 = vmul.f32 %v1557, %v3617
    %v3856 = vmul.f32 %v1748, %v3619
    %v3857 = vmul.f32 %v1750, %v3621
    %v3858 = vmul.f32 %v1941, %v3623
    %v3859 = vmul.f32 %v1943, %v3625
    %v3860 = vmul.f32 %v1559, %v3627
    %v3861 = vmul.f32 %v1561, %v3629
    %v3862 = vmul.f32 %v1752, %v3631
    %v3863 = vmul.f32 %v1754, %v3633
    %v3864 = vmul.f32 %v1945, %v3635
    %v3865 = vmul.f32 %v1947, %v3637
    %v3866 = vmul.f32 %v1565, %v3639
    %v3867 = vmul.f32 %v1567, %v3641
    %v3868 = vmul.f32 %v1758, %v3643
    %v3869 = vmul.f32 %v1760, %v3645
    %v3870 = vmul.f32 %v1951, %v3647
    %v3871 = vmul.f32 %v1953, %v3649
    %v3872 = vmul.f32 %v1569, %v3651
    %v3873 = vmul.f32 %v1571, %v3653
    %v3874 = vmul.f32 %v1762, %v3655
    %v3875 = vmul.f32 %v1764, %v3657
    %v3876 = vmul.f32 %v1955, %v3659
    %v3877 = vmul.f32 %v1957, %v3661
    %v3878 = vmul.f32 %v1575, %v3663
    %v3879 = vmul.f32 %v1577, %v3665
    %v3880 = vmul.f32 %v1768, %v3667
    %v3881 = vmul.f32 %v1770, %v3669
    %v3882 = vmul.f32 %v1961, %v3671
    %v3883 = vmul.f32 %v1963, %v3673
    %v3884 = vmul.f32 %v1579, %v3675
    %v3885 = vmul.f32 %v1581, %v3677
    %v3886 = vmul.f32 %v1772, %v3679
    %v3887 = vmul.f32 %v1774, %v3681
    %v3888 = vmul.f32 %v1965, %v3683
    %v3889 = vmul.f32 %v1967, %v3685
    %v3890 = vmul.f32 %v1585, %v3687
    %v3891 = vmul.f32 %v1587, %v3689
    %v3892 = vmul.f32 %v1778, %v3691
    %v3893 = vmul.f32 %v1780, %v3693
    %v3894 = vmul.f32 %v1971, %v3695
    %v3895 = vmul.f32 %v1973, %v3697
    %v3896 = vmul.f32 %v1589, %v3699
    %v3897 = vmul.f32 %v1591, %v3701
    %v3898 = vmul.f32 %v1782, %v3703
    %v3899 = vmul.f32 %v1784, %v3705
    %v3900 = vmul.f32 %v1975, %v3707
    %v3901 = vmul.f32 %v1977, %v3709
    %v3902 = vmul.f32 %v3710, %v2014
    %v3903 = vmul.f32 %v3711, %v2016
    %v3904 = vmul.f32 %v3712, %v2207
    %v3905 = vmul.f32 %v3713, %v2209
    %v3906 = vmul.f32 %v3714, %v2400
    %v3907 = vmul.f32 %v3715, %v2402
    %v3908 = vmul.f32 %v3716, %v2018
    %v3909 = vmul.f32 %v3717, %v2020
    %v3910 = vmul.f32 %v3718, %v2211
    %v3911 = vmul.f32 %v3719, %v2213
    %v3912 = vmul.f32 %v3720, %v2404
    %v3913 = vmul.f32 %v3721, %v2406
    %v3914 = vmul.f32 %v3722, %v2024
    %v3915 = vmul.f32 %v3723, %v2026
    %v3916 = vmul.f32 %v3724, %v2217
    %v3917 = vmul.f32 %v3725, %v2219
    %v3918 = vmul.f32 %v3726, %v2410
    %v3919 = vmul.f32 %v3727, %v2412
    %v3920 = vmul.f32 %v3728, %v2028
    %v3921 = vmul.f32 %v3729, %v2030
    %v3922 = vmul.f32 %v3730, %v2221
    %v3923 = vmul.f32 %v3731, %v2223
    %v3924 = vmul.f32 %v3732, %v2414
    %v3925 = vmul.f32 %v3733, %v2416
    %v3926 = vmul.f32 %v3734, %v2034
    %v3927 = vmul.f32 %v3735, %v2036
    %v3928 = vmul.f32 %v3736, %v2227
    %v3929 = vmul.f32 %v3737, %v2229
    %v3930 = vmul.f32 %v3738, %v2420
    %v3931 = vmul.f32 %v3739, %v2422
    %v3932 = vmul.f32 %v3740, %v2038
    %v3933 = vmul.f32 %v3741, %v2040
    %v3934 = vmul.f32 %v3742, %v2231
    %v3935 = vmul.f32 %v3743, %v2233
    %v3936 = vmul.f32 %v3744, %v2424
    %v3937 = vmul.f32 %v3745, %v2426
    %v3938 = vmul.f32 %v3746, %v2044
    %v3939 = vmul.f32 %v3747, %v2046
    %v3940 = vmul.f32 %v3748, %v2237
    %v3941 = vmul.f32 %v3749, %v2239
    %v3942 = vmul.f32 %v3750, %v2430
    %v3943 = vmul.f32 %v3751, %v2432
    %v3944 = vmul.f32 %v3752, %v2048
    %v3945 = vmul.f32 %v3753, %v2050
    %v3946 = vmul.f32 %v3754, %v2241
    %v3947 = vmul.f32 %v3755, %v2243
    %v3948 = vmul.f32 %v3756, %v2434
    %v3949 = vmul.f32 %v3757, %v2436
    %v3950 = vmul.f32 %v3758, %v2054
    %v3951 = vmul.f32 %v3759, %v2056
    %v3952 = vmul.f32 %v3760, %v2247
    %v3953 = vmul.f32 %v3761, %v2249
    %v3954 = vmul.f32 %v3762, %v2440
    %v3955 = vmul.f32 %v3763, %v2442
    %v3956 = vmul.f32 %v3764, %v2058
    %v3957 = vmul.f32 %v3765, %v2060
    %v3958 = vmul.f32 %v3766, %v2251
    %v3959 = vmul.f32 %v3767, %v2253
    %v3960 = vmul.f32 %v3768, %v2444
    %v3961 = vmul.f32 %v3769, %v2446
    %v3962 = vmul.f32 %v3770, %v2064
    %v3963 = vmul.f32 %v3771, %v2066
    %v3964 = vmul.f32 %v3772, %v2257
    %v3965 = vmul.f32 %v3773, %v2259
    %v3966 = vmul.f32 %v3774, %v2450
    %v3967 = vmul.f32 %v3775, %v2452
    %v3968 = vmul.f32 %v3776, %v2068
    %v3969 = vmul.f32 %v3777, %v2070
    %v3970 = vmul.f32 %v3778, %v2261
    %v3971 = vmul.f32 %v3779, %v2263
    %v3972 = vmul.f32 %v3780, %v2454
    %v3973 = vmul.f32 %v3781, %v2456
    %v3974 = vmul.f32 %v3782, %v2074
    %v3975 = vmul.f32 %v3783, %v2076
    %v3976 = vmul.f32 %v3784, %v2267
    %v3977 = vmul.f32 %v3785, %v2269
    %v3978 = vmul.f32 %v3786, %v2460
    %v3979 = vmul.f32 %v3787, %v2462
    %v3980 = vmul.f32 %v3788, %v2078
    %v3981 = vmul.f32 %v3789, %v2080
    %v3982 = vmul.f32 %v3790, %v2271
    %v3983 = vmul.f32 %v3791, %v2273
    %v3984 = vmul.f32 %v3792, %v2464
    %v3985 = vmul.f32 %v3793, %v2466
    %v3986 = vmul.f32 %v3794, %v2084
    %v3987 = vmul.f32 %v3795, %v2086
    %v3988 = vmul.f32 %v3796, %v2277
    %v3989 = vmul.f32 %v3797, %v2279
    %v3990 = vmul.f32 %v3798, %v2470
    %v3991 = vmul.f32 %v3799, %v2472
    %v3992 = vmul.f32 %v3800, %v2088
    %v3993 = vmul.f32 %v3801, %v2090
    %v3994 = vmul.f32 %v3802, %v2281
    %v3995 = vmul.f32 %v3803, %v2283
    %v3996 = vmul.f32 %v3804, %v2474
    %v3997 = vmul.f32 %v3805, %v2476
    %v3998 = vmul.f32 %v3806, %v2094
    %v3999 = vmul.f32 %v3807, %v2096
    %v4000 = vmul.f32 %v3808, %v2287
    %v4001 = vmul.f32 %v3809, %v2289
    %v4002 = vmul.f32 %v3810, %v2480
    %v4003 = vmul.f32 %v3811, %v2482
    %v4004 = vmul.f32 %v3812, %v2098
    %v4005 = vmul.f32 %v3813, %v2100
    %v4006 = vmul.f32 %v3814, %v2291
    %v4007 = vmul.f32 %v3815, %v2293
    %v4008 = vmul.f32 %v3816, %v2484
    %v4009 = vmul.f32 %v3817, %v2486
    %v4010 = vmul.f32 %v3818, %v2104
    %v4011 = vmul.f32 %v3819, %v2106
    %v4012 = vmul.f32 %v3820, %v2297
    %v4013 = vmul.f32 %v3821, %v2299
    %v4014 = vmul.f32 %v3822, %v2490
    %v4015 = vmul.f32 %v3823, %v2492
    %v4016 = vmul.f32 %v3824, %v2108
    %v4017 = vmul.f32 %v3825, %v2110
    %v4018 = vmul.f32 %v3826, %v2301
    %v4019 = vmul.f32 %v3827, %v2303
    %v4020 = vmul.f32 %v3828, %v2494
    %v4021 = vmul.f32 %v3829, %v2496
    %v4022 = vmul.f32 %v3830, %v2114
    %v4023 = vmul.f32 %v3831, %v2116
    %v4024 = vmul.f32 %v3832, %v2307
    %v4025 = vmul.f32 %v3833, %v2309
    %v4026 = vmul.f32 %v3834, %v2500
    %v4027 = vmul.f32 %v3835, %v2502
    %v4028 = vmul.f32 %v3836, %v2118
    %v4029 = vmul.f32 %v3837, %v2120
    %v4030 = vmul.f32 %v3838, %v2311
    %v4031 = vmul.f32 %v3839, %v2313
    %v4032 = vmul.f32 %v3840, %v2504
    %v4033 = vmul.f32 %v3841, %v2506
    %v4034 = vmul.f32 %v3842, %v2124
    %v4035 = vmul.f32 %v3843, %v2126
    %v4036 = vmul.f32 %v3844, %v2317
    %v4037 = vmul.f32 %v3845, %v2319
    %v4038 = vmul.f32 %v3846, %v2510
    %v4039 = vmul.f32 %v3847, %v2512
    %v4040 = vmul.f32 %v3848, %v2128
    %v4041 = vmul.f32 %v3849, %v2130
    %v4042 = vmul.f32 %v3850, %v2321
    %v4043 = vmul.f32 %v3851, %v2323
    %v4044 = vmul.f32 %v3852, %v2514
    %v4045 = vmul.f32 %v3853, %v2516
    %v4046 = vmul.f32 %v3854, %v2134
    %v4047 = vmul.f32 %v3855, %v2136
    %v4048 = vmul.f32 %v3856, %v2327
    %v4049 = vmul.f32 %v3857, %v2329
    %v4050 = vmul.f32 %v3858, %v2520
    %v4051 = vmul.f32 %v3859, %v2522
    %v4052 = vmul.f32 %v3860, %v2138
    %v4053 = vmul.f32 %v3861, %v2140
    %v4054 = vmul.f32 %v3862, %v2331
    %v4055 = vmul.f32 %v3863, %v2333
    %v4056 = vmul.f32 %v3864, %v2524
    %v4057 = vmul.f32 %v3865, %v2526
    %v4058 = vmul.f32 %v3866, %v2144
    %v4059 = vmul.f32 %v3867, %v2146
    %v4060 = vmul.f32 %v3868, %v2337
    %v4061 = vmul.f32 %v3869, %v2339
    %v4062 = vmul.f32 %v3870, %v2530
    %v4063 = vmul.f32 %v3871, %v2532
    %v4064 = vmul.f32 %v3872, %v2148
    %v4065 = vmul.f32 %v3873, %v2150
    %v4066 = vmul.f32 %v3874, %v2341
    %v4067 = vmul.f32 %v3875, %v2343
    %v4068 = vmul.f32 %v3876, %v2534
    %v4069 = vmul.f32 %v3877, %v2536
    %v4070 = vmul.f32 %v3878, %v2154
    %v4071 = vmul.f32 %v3879, %v2156
    %v4072 = vmul.f32 %v3880, %v2347
    %v4073 = vmul.f32 %v3881, %v2349
    %v4074 = vmul.f32 %v3882, %v2540
    %v4075 = vmul.f32 %v3883, %v2542
    %v4076 = vmul.f32 %v3884, %v2158
    %v4077 = vmul.f32 %v3885, %v2160
    %v4078 = vmul.f32 %v3886, %v2351
    %v4079 = vmul.f32 %v3887, %v2353
    %v4080 = vmul.f32 %v3888, %v2544
    %v4081 = vmul.f32 %v3889, %v2546
    %v4082 = vmul.f32 %v3890, %v2164
    %v4083 = vmul.f32 %v3891, %v2166
    %v4084 = vmul.f32 %v3892, %v2357
    %v4085 = vmul.f32 %v3893, %v2359
    %v4086 = vmul.f32 %v3894, %v2550
    %v4087 = vmul.f32 %v3895, %v2552
    %v4088 = vmul.f32 %v3896, %v2168
    %v4089 = vmul.f32 %v3897, %v2170
    %v4090 = vmul.f32 %v3898, %v2361
    %v4091 = vmul.f32 %v3899, %v2363
    %v4092 = vmul.f32 %v3900, %v2554
    %v4093 = vmul.f32 %v3901, %v2556
    %v4094 = vpack.c.bf16 %v3908, %v3902
    %v4095 = vpack.c.bf16 %v3909, %v3903
    %v4096 = vpack.c.bf16 %v3910, %v3904
    %v4097 = vpack.c.bf16 %v3911, %v3905
    %v4098 = vpack.c.bf16 %v3912, %v3906
    %v4099 = vpack.c.bf16 %v3913, %v3907
    %v4100 = vpack.c.bf16 %v3920, %v3914
    %v4101 = vpack.c.bf16 %v3921, %v3915
    %v4102 = vpack.c.bf16 %v3922, %v3916
    %v4103 = vpack.c.bf16 %v3923, %v3917
    %v4104 = vpack.c.bf16 %v3924, %v3918
    %v4105 = vpack.c.bf16 %v3925, %v3919
    %v4106 = vpack.c.bf16 %v3932, %v3926
    %v4107 = vpack.c.bf16 %v3933, %v3927
    %v4108 = vpack.c.bf16 %v3934, %v3928
    %v4109 = vpack.c.bf16 %v3935, %v3929
    %v4110 = vpack.c.bf16 %v3936, %v3930
    %v4111 = vpack.c.bf16 %v3937, %v3931
    %v4112 = vpack.c.bf16 %v3944, %v3938
    %v4113 = vpack.c.bf16 %v3945, %v3939
    %v4114 = vpack.c.bf16 %v3946, %v3940
    %v4115 = vpack.c.bf16 %v3947, %v3941
    %v4116 = vpack.c.bf16 %v3948, %v3942
    %v4117 = vpack.c.bf16 %v3949, %v3943
    %v4118 = vpack.c.bf16 %v3956, %v3950
    %v4119 = vpack.c.bf16 %v3957, %v3951
    %v4120 = vpack.c.bf16 %v3958, %v3952
    %v4121 = vpack.c.bf16 %v3959, %v3953
    %v4122 = vpack.c.bf16 %v3960, %v3954
    %v4123 = vpack.c.bf16 %v3961, %v3955
    %v4124 = vpack.c.bf16 %v3968, %v3962
    %v4125 = vpack.c.bf16 %v3969, %v3963
    %v4126 = vpack.c.bf16 %v3970, %v3964
    %v4127 = vpack.c.bf16 %v3971, %v3965
    %v4128 = vpack.c.bf16 %v3972, %v3966
    %v4129 = vpack.c.bf16 %v3973, %v3967
    %v4130 = vpack.c.bf16 %v3980, %v3974
    %v4131 = vpack.c.bf16 %v3981, %v3975
    %v4132 = vpack.c.bf16 %v3982, %v3976
    %v4133 = vpack.c.bf16 %v3983, %v3977
    %v4134 = vpack.c.bf16 %v3984, %v3978
    %v4135 = vpack.c.bf16 %v3985, %v3979
    %v4136 = vpack.c.bf16 %v3992, %v3986
    %v4137 = vpack.c.bf16 %v3993, %v3987
    %v4138 = vpack.c.bf16 %v3994, %v3988
    %v4139 = vpack.c.bf16 %v3995, %v3989
    %v4140 = vpack.c.bf16 %v3996, %v3990
    %v4141 = vpack.c.bf16 %v3997, %v3991
    %v4142 = vpack.c.bf16 %v4004, %v3998
    %v4143 = vpack.c.bf16 %v4005, %v3999
    %v4144 = vpack.c.bf16 %v4006, %v4000
    %v4145 = vpack.c.bf16 %v4007, %v4001
    %v4146 = vpack.c.bf16 %v4008, %v4002
    %v4147 = vpack.c.bf16 %v4009, %v4003
    %v4148 = vpack.c.bf16 %v4016, %v4010
    %v4149 = vpack.c.bf16 %v4017, %v4011
    %v4150 = vpack.c.bf16 %v4018, %v4012
    %v4151 = vpack.c.bf16 %v4019, %v4013
    %v4152 = vpack.c.bf16 %v4020, %v4014
    %v4153 = vpack.c.bf16 %v4021, %v4015
    %v4154 = vpack.c.bf16 %v4028, %v4022
    %v4155 = vpack.c.bf16 %v4029, %v4023
    %v4156 = vpack.c.bf16 %v4030, %v4024
    %v4157 = vpack.c.bf16 %v4031, %v4025
    %v4158 = vpack.c.bf16 %v4032, %v4026
    %v4159 = vpack.c.bf16 %v4033, %v4027
    %v4160 = vpack.c.bf16 %v4040, %v4034
    %v4161 = vpack.c.bf16 %v4041, %v4035
    %v4162 = vpack.c.bf16 %v4042, %v4036
    %v4163 = vpack.c.bf16 %v4043, %v4037
    %v4164 = vpack.c.bf16 %v4044, %v4038
    %v4165 = vpack.c.bf16 %v4045, %v4039
    %v4166 = vpack.c.bf16 %v4052, %v4046
    %v4167 = vpack.c.bf16 %v4053, %v4047
    %v4168 = vpack.c.bf16 %v4054, %v4048
    %v4169 = vpack.c.bf16 %v4055, %v4049
    %v4170 = vpack.c.bf16 %v4056, %v4050
    %v4171 = vpack.c.bf16 %v4057, %v4051
    %v4172 = vpack.c.bf16 %v4064, %v4058
    %v4173 = vpack.c.bf16 %v4065, %v4059
    %v4174 = vpack.c.bf16 %v4066, %v4060
    %v4175 = vpack.c.bf16 %v4067, %v4061
    %v4176 = vpack.c.bf16 %v4068, %v4062
    %v4177 = vpack.c.bf16 %v4069, %v4063
    %v4178 = vpack.c.bf16 %v4076, %v4070
    %v4179 = vpack.c.bf16 %v4077, %v4071
    %v4180 = vpack.c.bf16 %v4078, %v4072
    %v4181 = vpack.c.bf16 %v4079, %v4073
    %v4182 = vpack.c.bf16 %v4080, %v4074
    %v4183 = vpack.c.bf16 %v4081, %v4075
    %v4184 = vpack.c.bf16 %v4088, %v4082
    %v4185 = vpack.c.bf16 %v4089, %v4083
    %v4186 = vpack.c.bf16 %v4090, %v4084
    %v4187 = vpack.c.bf16 %v4091, %v4085
    %v4188 = vpack.c.bf16 %v4092, %v4086
    %v4189 = vpack.c.bf16 %v4093, %v4087
    %v4190 = vld [vmem:[#allocation7] sm:$0xff]
    %v4191 = vld [vmem:[#allocation7 + $0x8] sm:$0xff]
    %v4192 = vld [vmem:[#allocation7 + $0x10] sm:$0xff]
    %v4193 = vld [vmem:[#allocation7 + $0x18] sm:$0xff]
    %v4194 = vld [vmem:[#allocation7 + $0x20] sm:$0xff]
    %v4195 = vld [vmem:[#allocation7 + $0x28] sm:$0xff]
    %v4196 = vld [vmem:[#allocation7 + $0x30] sm:$0xff]
    %v4197 = vld [vmem:[#allocation7 + $0x38] sm:$0xff]
    %v4198 = vld [vmem:[#allocation7 + $0x40] sm:$0xff]
    %v4199 = vld [vmem:[#allocation7 + $0x48] sm:$0xff]
    %v4200 = vld [vmem:[#allocation7 + $0x50] sm:$0xff]
    %v4201 = vld [vmem:[#allocation7 + $0x58] sm:$0xff]
    %v4202 = vld [vmem:[#allocation7 + $0x60] sm:$0xff]
    %v4203 = vld [vmem:[#allocation7 + $0x68] sm:$0xff]
    %v4204 = vld [vmem:[#allocation7 + $0x70] sm:$0xff]
    %v4205 = vld [vmem:[#allocation7 + $0x78] sm:$0xff]
    %v4206 = vld [vmem:[#allocation7 + $0x80] sm:$0xff]
    %v4207 = vld [vmem:[#allocation7 + $0x88] sm:$0xff]
    %v4208 = vld [vmem:[#allocation7 + $0x90] sm:$0xff]
    %v4209 = vld [vmem:[#allocation7 + $0x98] sm:$0xff]
    %v4210 = vld [vmem:[#allocation7 + $0xa0] sm:$0xff]
    %v4211 = vld [vmem:[#allocation7 + $0xa8] sm:$0xff]
    %v4212 = vld [vmem:[#allocation7 + $0xb0] sm:$0xff]
    %v4213 = vld [vmem:[#allocation7 + $0xb8] sm:$0xff]
    %v4214 = vld [vmem:[#allocation7 + $0xc0] sm:$0xff]
    %v4215 = vld [vmem:[#allocation7 + $0xc8] sm:$0xff]
    %v4216 = vld [vmem:[#allocation7 + $0xd0] sm:$0xff]
    %v4217 = vld [vmem:[#allocation7 + $0xd8] sm:$0xff]
    %v4218 = vld [vmem:[#allocation7 + $0xe0] sm:$0xff]
    %v4219 = vld [vmem:[#allocation7 + $0xe8] sm:$0xff]
    %v4220 = vld [vmem:[#allocation7 + $0xf0] sm:$0xff]
    %v4221 = vld [vmem:[#allocation7 + $0xf8] sm:$0xff]
    %v4222 = vld [vmem:[#allocation7 + $0x100] sm:$0xff]
    %v4223 = vld [vmem:[#allocation7 + $0x108] sm:$0xff]
    %v4224 = vld [vmem:[#allocation7 + $0x110] sm:$0xff]
    %v4225 = vld [vmem:[#allocation7 + $0x118] sm:$0xff]
    %v4226 = vld [vmem:[#allocation7 + $0x120] sm:$0xff]
    %v4227 = vld [vmem:[#allocation7 + $0x128] sm:$0xff]
    %v4228 = vld [vmem:[#allocation7 + $0x130] sm:$0xff]
    %v4229 = vld [vmem:[#allocation7 + $0x138] sm:$0xff]
    %v4230 = vld [vmem:[#allocation7 + $0x140] sm:$0xff]
    %v4231 = vld [vmem:[#allocation7 + $0x148] sm:$0xff]
    %v4232 = vld [vmem:[#allocation7 + $0x150] sm:$0xff]
    %v4233 = vld [vmem:[#allocation7 + $0x158] sm:$0xff]
    %v4234 = vld [vmem:[#allocation7 + $0x160] sm:$0xff]
    %v4235 = vld [vmem:[#allocation7 + $0x168] sm:$0xff]
    %v4236 = vld [vmem:[#allocation7 + $0x170] sm:$0xff]
    %v4237 = vld [vmem:[#allocation7 + $0x178] sm:$0xff]
    %v4238 = vld [vmem:[#allocation7 + $0x180] sm:$0xff]
    %v4239 = vld [vmem:[#allocation7 + $0x188] sm:$0xff]
    %v4240 = vld [vmem:[#allocation7 + $0x190] sm:$0xff]
    %v4241 = vld [vmem:[#allocation7 + $0x198] sm:$0xff]
    %v4242 = vld [vmem:[#allocation7 + $0x1a0] sm:$0xff]
    %v4243 = vld [vmem:[#allocation7 + $0x1a8] sm:$0xff]
    %v4244 = vld [vmem:[#allocation7 + $0x1b0] sm:$0xff]
    %v4245 = vld [vmem:[#allocation7 + $0x1b8] sm:$0xff]
    %v4246 = vld [vmem:[#allocation7 + $0x1c0] sm:$0xff]
    %v4247 = vld [vmem:[#allocation7 + $0x1c8] sm:$0xff]
    %v4248 = vld [vmem:[#allocation7 + $0x1d0] sm:$0xff]
    %v4249 = vld [vmem:[#allocation7 + $0x1d8] sm:$0xff]
    %v4250 = vld [vmem:[#allocation7 + $0x1e0] sm:$0xff]
    %v4251 = vld [vmem:[#allocation7 + $0x1e8] sm:$0xff]
    %v4252 = vld [vmem:[#allocation7 + $0x1f0] sm:$0xff]
    %v4253 = vld [vmem:[#allocation7 + $0x1f8] sm:$0xff]
    %v4254 = vld [vmem:[#allocation7 + $0x200] sm:$0xff]
    %v4255 = vld [vmem:[#allocation7 + $0x208] sm:$0xff]
    %v4256 = vld [vmem:[#allocation7 + $0x210] sm:$0xff]
    %v4257 = vld [vmem:[#allocation7 + $0x218] sm:$0xff]
    %v4258 = vld [vmem:[#allocation7 + $0x220] sm:$0xff]
    %v4259 = vld [vmem:[#allocation7 + $0x228] sm:$0xff]
    %v4260 = vld [vmem:[#allocation7 + $0x230] sm:$0xff]
    %v4261 = vld [vmem:[#allocation7 + $0x238] sm:$0xff]
    %v4262 = vld [vmem:[#allocation7 + $0x240] sm:$0xff]
    %v4263 = vld [vmem:[#allocation7 + $0x248] sm:$0xff]
    %v4264 = vld [vmem:[#allocation7 + $0x250] sm:$0xff]
    %v4265 = vld [vmem:[#allocation7 + $0x258] sm:$0xff]
    %v4266 = vld [vmem:[#allocation7 + $0x260] sm:$0xff]
    %v4267 = vld [vmem:[#allocation7 + $0x268] sm:$0xff]
    %v4268 = vld [vmem:[#allocation7 + $0x270] sm:$0xff]
    %v4269 = vld [vmem:[#allocation7 + $0x278] sm:$0xff]
    %v4270 = vld [vmem:[#allocation7 + $0x280] sm:$0xff]
    %v4271 = vld [vmem:[#allocation7 + $0x288] sm:$0xff]
    %v4272 = vld [vmem:[#allocation7 + $0x290] sm:$0xff]
    %v4273 = vld [vmem:[#allocation7 + $0x298] sm:$0xff]
    %v4274 = vld [vmem:[#allocation7 + $0x2a0] sm:$0xff]
    %v4275 = vld [vmem:[#allocation7 + $0x2a8] sm:$0xff]
    %v4276 = vld [vmem:[#allocation7 + $0x2b0] sm:$0xff]
    %v4277 = vld [vmem:[#allocation7 + $0x2b8] sm:$0xff]
    %v4278 = vld [vmem:[#allocation7 + $0x2c0] sm:$0xff]
    %v4279 = vld [vmem:[#allocation7 + $0x2c8] sm:$0xff]
    %v4280 = vld [vmem:[#allocation7 + $0x2d0] sm:$0xff]
    %v4281 = vld [vmem:[#allocation7 + $0x2d8] sm:$0xff]
    %v4282 = vld [vmem:[#allocation7 + $0x2e0] sm:$0xff]
    %v4283 = vld [vmem:[#allocation7 + $0x2e8] sm:$0xff]
    %v4284 = vld [vmem:[#allocation7 + $0x2f0] sm:$0xff]
    %v4285 = vld [vmem:[#allocation7 + $0x2f8] sm:$0xff]
    %v4382 = vunpack.c.l.b16 %v4190
    %v4383 = vunpack.c.h.b16 %v4190
    %v4384 = vunpack.c.l.b16 %v4191
    %v4385 = vunpack.c.h.b16 %v4191
    %v4386 = vunpack.c.l.b16 %v4192
    %v4387 = vunpack.c.h.b16 %v4192
    %v4388 = vunpack.c.l.b16 %v4193
    %v4389 = vunpack.c.h.b16 %v4193
    %v4390 = vunpack.c.l.b16 %v4194
    %v4391 = vunpack.c.h.b16 %v4194
    %v4392 = vunpack.c.l.b16 %v4195
    %v4393 = vunpack.c.h.b16 %v4195
    %v4394 = vunpack.c.l.b16 %v4196
    %v4395 = vunpack.c.h.b16 %v4196
    %v4396 = vunpack.c.l.b16 %v4197
    %v4397 = vunpack.c.h.b16 %v4197
    %v4398 = vunpack.c.l.b16 %v4198
    %v4399 = vunpack.c.h.b16 %v4198
    %v4400 = vunpack.c.l.b16 %v4199
    %v4401 = vunpack.c.h.b16 %v4199
    %v4402 = vunpack.c.l.b16 %v4200
    %v4403 = vunpack.c.h.b16 %v4200
    %v4404 = vunpack.c.l.b16 %v4201
    %v4405 = vunpack.c.h.b16 %v4201
    %v4406 = vunpack.c.l.b16 %v4202
    %v4407 = vunpack.c.h.b16 %v4202
    %v4408 = vunpack.c.l.b16 %v4203
    %v4409 = vunpack.c.h.b16 %v4203
    %v4410 = vunpack.c.l.b16 %v4204
    %v4411 = vunpack.c.h.b16 %v4204
    %v4412 = vunpack.c.l.b16 %v4205
    %v4413 = vunpack.c.h.b16 %v4205
    %v4414 = vunpack.c.l.b16 %v4206
    %v4415 = vunpack.c.h.b16 %v4206
    %v4416 = vunpack.c.l.b16 %v4207
    %v4417 = vunpack.c.h.b16 %v4207
    %v4418 = vunpack.c.l.b16 %v4208
    %v4419 = vunpack.c.h.b16 %v4208
    %v4420 = vunpack.c.l.b16 %v4209
    %v4421 = vunpack.c.h.b16 %v4209
    %v4422 = vunpack.c.l.b16 %v4210
    %v4423 = vunpack.c.h.b16 %v4210
    %v4424 = vunpack.c.l.b16 %v4211
    %v4425 = vunpack.c.h.b16 %v4211
    %v4426 = vunpack.c.l.b16 %v4212
    %v4427 = vunpack.c.h.b16 %v4212
    %v4428 = vunpack.c.l.b16 %v4213
    %v4429 = vunpack.c.h.b16 %v4213
    %v4430 = vunpack.c.l.b16 %v4214
    %v4431 = vunpack.c.h.b16 %v4214
    %v4432 = vunpack.c.l.b16 %v4215
    %v4433 = vunpack.c.h.b16 %v4215
    %v4434 = vunpack.c.l.b16 %v4216
    %v4435 = vunpack.c.h.b16 %v4216
    %v4436 = vunpack.c.l.b16 %v4217
    %v4437 = vunpack.c.h.b16 %v4217
    %v4438 = vunpack.c.l.b16 %v4218
    %v4439 = vunpack.c.h.b16 %v4218
    %v4440 = vunpack.c.l.b16 %v4219
    %v4441 = vunpack.c.h.b16 %v4219
    %v4442 = vunpack.c.l.b16 %v4220
    %v4443 = vunpack.c.h.b16 %v4220
    %v4444 = vunpack.c.l.b16 %v4221
    %v4445 = vunpack.c.h.b16 %v4221
    %v4446 = vunpack.c.l.b16 %v4222
    %v4447 = vunpack.c.h.b16 %v4222
    %v4448 = vunpack.c.l.b16 %v4223
    %v4449 = vunpack.c.h.b16 %v4223
    %v4450 = vunpack.c.l.b16 %v4224
    %v4451 = vunpack.c.h.b16 %v4224
    %v4452 = vunpack.c.l.b16 %v4225
    %v4453 = vunpack.c.h.b16 %v4225
    %v4454 = vunpack.c.l.b16 %v4226
    %v4455 = vunpack.c.h.b16 %v4226
    %v4456 = vunpack.c.l.b16 %v4227
    %v4457 = vunpack.c.h.b16 %v4227
    %v4458 = vunpack.c.l.b16 %v4228
    %v4459 = vunpack.c.h.b16 %v4228
    %v4460 = vunpack.c.l.b16 %v4229
    %v4461 = vunpack.c.h.b16 %v4229
    %v4462 = vunpack.c.l.b16 %v4230
    %v4463 = vunpack.c.h.b16 %v4230
    %v4464 = vunpack.c.l.b16 %v4231
    %v4465 = vunpack.c.h.b16 %v4231
    %v4466 = vunpack.c.l.b16 %v4232
    %v4467 = vunpack.c.h.b16 %v4232
    %v4468 = vunpack.c.l.b16 %v4233
    %v4469 = vunpack.c.h.b16 %v4233
    %v4470 = vunpack.c.l.b16 %v4234
    %v4471 = vunpack.c.h.b16 %v4234
    %v4472 = vunpack.c.l.b16 %v4235
    %v4473 = vunpack.c.h.b16 %v4235
    %v4474 = vunpack.c.l.b16 %v4236
    %v4475 = vunpack.c.h.b16 %v4236
    %v4476 = vunpack.c.l.b16 %v4237
    %v4477 = vunpack.c.h.b16 %v4237
    %v4478 = vunpack.c.l.b16 %v4238
    %v4479 = vunpack.c.h.b16 %v4238
    %v4480 = vunpack.c.l.b16 %v4239
    %v4481 = vunpack.c.h.b16 %v4239
    %v4482 = vunpack.c.l.b16 %v4240
    %v4483 = vunpack.c.h.b16 %v4240
    %v4484 = vunpack.c.l.b16 %v4241
    %v4485 = vunpack.c.h.b16 %v4241
    %v4486 = vunpack.c.l.b16 %v4242
    %v4487 = vunpack.c.h.b16 %v4242
    %v4488 = vunpack.c.l.b16 %v4243
    %v4489 = vunpack.c.h.b16 %v4243
    %v4490 = vunpack.c.l.b16 %v4244
    %v4491 = vunpack.c.h.b16 %v4244
    %v4492 = vunpack.c.l.b16 %v4245
    %v4493 = vunpack.c.h.b16 %v4245
    %v4494 = vunpack.c.l.b16 %v4246
    %v4495 = vunpack.c.h.b16 %v4246
    %v4496 = vunpack.c.l.b16 %v4247
    %v4497 = vunpack.c.h.b16 %v4247
    %v4498 = vunpack.c.l.b16 %v4248
    %v4499 = vunpack.c.h.b16 %v4248
    %v4500 = vunpack.c.l.b16 %v4249
    %v4501 = vunpack.c.h.b16 %v4249
    %v4502 = vunpack.c.l.b16 %v4250
    %v4503 = vunpack.c.h.b16 %v4250
    %v4504 = vunpack.c.l.b16 %v4251
    %v4505 = vunpack.c.h.b16 %v4251
    %v4506 = vunpack.c.l.b16 %v4252
    %v4507 = vunpack.c.h.b16 %v4252
    %v4508 = vunpack.c.l.b16 %v4253
    %v4509 = vunpack.c.h.b16 %v4253
    %v4510 = vunpack.c.l.b16 %v4254
    %v4511 = vunpack.c.h.b16 %v4254
    %v4512 = vunpack.c.l.b16 %v4255
    %v4513 = vunpack.c.h.b16 %v4255
    %v4514 = vunpack.c.l.b16 %v4256
    %v4515 = vunpack.c.h.b16 %v4256
    %v4516 = vunpack.c.l.b16 %v4257
    %v4517 = vunpack.c.h.b16 %v4257
    %v4518 = vunpack.c.l.b16 %v4258
    %v4519 = vunpack.c.h.b16 %v4258
    %v4520 = vunpack.c.l.b16 %v4259
    %v4521 = vunpack.c.h.b16 %v4259
    %v4522 = vunpack.c.l.b16 %v4260
    %v4523 = vunpack.c.h.b16 %v4260
    %v4524 = vunpack.c.l.b16 %v4261
    %v4525 = vunpack.c.h.b16 %v4261
    %v4526 = vunpack.c.l.b16 %v4262
    %v4527 = vunpack.c.h.b16 %v4262
    %v4528 = vunpack.c.l.b16 %v4263
    %v4529 = vunpack.c.h.b16 %v4263
    %v4530 = vunpack.c.l.b16 %v4264
    %v4531 = vunpack.c.h.b16 %v4264
    %v4532 = vunpack.c.l.b16 %v4265
    %v4533 = vunpack.c.h.b16 %v4265
    %v4534 = vunpack.c.l.b16 %v4266
    %v4535 = vunpack.c.h.b16 %v4266
    %v4536 = vunpack.c.l.b16 %v4267
    %v4537 = vunpack.c.h.b16 %v4267
    %v4538 = vunpack.c.l.b16 %v4268
    %v4539 = vunpack.c.h.b16 %v4268
    %v4540 = vunpack.c.l.b16 %v4269
    %v4541 = vunpack.c.h.b16 %v4269
    %v4542 = vunpack.c.l.b16 %v4270
    %v4543 = vunpack.c.h.b16 %v4270
    %v4544 = vunpack.c.l.b16 %v4271
    %v4545 = vunpack.c.h.b16 %v4271
    %v4546 = vunpack.c.l.b16 %v4272
    %v4547 = vunpack.c.h.b16 %v4272
    %v4548 = vunpack.c.l.b16 %v4273
    %v4549 = vunpack.c.h.b16 %v4273
    %v4550 = vunpack.c.l.b16 %v4274
    %v4551 = vunpack.c.h.b16 %v4274
    %v4552 = vunpack.c.l.b16 %v4275
    %v4553 = vunpack.c.h.b16 %v4275
    %v4554 = vunpack.c.l.b16 %v4276
    %v4555 = vunpack.c.h.b16 %v4276
    %v4556 = vunpack.c.l.b16 %v4277
    %v4557 = vunpack.c.h.b16 %v4277
    %v4558 = vunpack.c.l.b16 %v4278
    %v4559 = vunpack.c.h.b16 %v4278
    %v4560 = vunpack.c.l.b16 %v4279
    %v4561 = vunpack.c.h.b16 %v4279
    %v4562 = vunpack.c.l.b16 %v4280
    %v4563 = vunpack.c.h.b16 %v4280
    %v4564 = vunpack.c.l.b16 %v4281
    %v4565 = vunpack.c.h.b16 %v4281
    %v4566 = vunpack.c.l.b16 %v4282
    %v4567 = vunpack.c.h.b16 %v4282
    %v4568 = vunpack.c.l.b16 %v4283
    %v4569 = vunpack.c.h.b16 %v4283
    %v4570 = vunpack.c.l.b16 %v4284
    %v4571 = vunpack.c.h.b16 %v4284
    %v4572 = vunpack.c.l.b16 %v4285
    %v4573 = vunpack.c.h.b16 %v4285
    %v4574 = vpack.c.b16 %v4384, %v4382
    %v4575 = vpack.c.b16 %v4385, %v4383
    %v4576 = vpack.c.b16 %v4388, %v4386
    %v4577 = vpack.c.b16 %v4389, %v4387
    %v4578 = vpack.c.b16 %v4392, %v4390
    %v4579 = vpack.c.b16 %v4393, %v4391
    %v4580 = vpack.c.b16 %v4396, %v4394
    %v4581 = vpack.c.b16 %v4397, %v4395
    %v4582 = vpack.c.b16 %v4400, %v4398
    %v4583 = vpack.c.b16 %v4401, %v4399
    %v4584 = vpack.c.b16 %v4404, %v4402
    %v4585 = vpack.c.b16 %v4405, %v4403
    %v4586 = vpack.c.b16 %v4408, %v4406
    %v4587 = vpack.c.b16 %v4409, %v4407
    %v4588 = vpack.c.b16 %v4412, %v4410
    %v4589 = vpack.c.b16 %v4413, %v4411
    %v4590 = vpack.c.b16 %v4416, %v4414
    %v4591 = vpack.c.b16 %v4417, %v4415
    %v4592 = vpack.c.b16 %v4420, %v4418
    %v4593 = vpack.c.b16 %v4421, %v4419
    %v4594 = vpack.c.b16 %v4424, %v4422
    %v4595 = vpack.c.b16 %v4425, %v4423
    %v4596 = vpack.c.b16 %v4428, %v4426
    %v4597 = vpack.c.b16 %v4429, %v4427
    %v4598 = vpack.c.b16 %v4432, %v4430
    %v4599 = vpack.c.b16 %v4433, %v4431
    %v4600 = vpack.c.b16 %v4436, %v4434
    %v4601 = vpack.c.b16 %v4437, %v4435
    %v4602 = vpack.c.b16 %v4440, %v4438
    %v4603 = vpack.c.b16 %v4441, %v4439
    %v4604 = vpack.c.b16 %v4444, %v4442
    %v4605 = vpack.c.b16 %v4445, %v4443
    %v4606 = vpack.c.b16 %v4448, %v4446
    %v4607 = vpack.c.b16 %v4449, %v4447
    %v4608 = vpack.c.b16 %v4452, %v4450
    %v4609 = vpack.c.b16 %v4453, %v4451
    %v4610 = vpack.c.b16 %v4456, %v4454
    %v4611 = vpack.c.b16 %v4457, %v4455
    %v4612 = vpack.c.b16 %v4460, %v4458
    %v4613 = vpack.c.b16 %v4461, %v4459
    %v4614 = vpack.c.b16 %v4464, %v4462
    %v4615 = vpack.c.b16 %v4465, %v4463
    %v4616 = vpack.c.b16 %v4468, %v4466
    %v4617 = vpack.c.b16 %v4469, %v4467
    %v4618 = vpack.c.b16 %v4472, %v4470
    %v4619 = vpack.c.b16 %v4473, %v4471
    %v4620 = vpack.c.b16 %v4476, %v4474
    %v4621 = vpack.c.b16 %v4477, %v4475
    %v4622 = vpack.c.b16 %v4480, %v4478
    %v4623 = vpack.c.b16 %v4481, %v4479
    %v4624 = vpack.c.b16 %v4484, %v4482
    %v4625 = vpack.c.b16 %v4485, %v4483
    %v4626 = vpack.c.b16 %v4488, %v4486
    %v4627 = vpack.c.b16 %v4489, %v4487
    %v4628 = vpack.c.b16 %v4492, %v4490
    %v4629 = vpack.c.b16 %v4493, %v4491
    %v4630 = vpack.c.b16 %v4496, %v4494
    %v4631 = vpack.c.b16 %v4497, %v4495
    %v4632 = vpack.c.b16 %v4500, %v4498
    %v4633 = vpack.c.b16 %v4501, %v4499
    %v4634 = vpack.c.b16 %v4504, %v4502
    %v4635 = vpack.c.b16 %v4505, %v4503
    %v4636 = vpack.c.b16 %v4508, %v4506
    %v4637 = vpack.c.b16 %v4509, %v4507
    %v4638 = vpack.c.b16 %v4512, %v4510
    %v4639 = vpack.c.b16 %v4513, %v4511
    %v4640 = vpack.c.b16 %v4516, %v4514
    %v4641 = vpack.c.b16 %v4517, %v4515
    %v4642 = vpack.c.b16 %v4520, %v4518
    %v4643 = vpack.c.b16 %v4521, %v4519
    %v4644 = vpack.c.b16 %v4524, %v4522
    %v4645 = vpack.c.b16 %v4525, %v4523
    %v4646 = vpack.c.b16 %v4528, %v4526
    %v4647 = vpack.c.b16 %v4529, %v4527
    %v4648 = vpack.c.b16 %v4532, %v4530
    %v4649 = vpack.c.b16 %v4533, %v4531
    %v4650 = vpack.c.b16 %v4536, %v4534
    %v4651 = vpack.c.b16 %v4537, %v4535
    %v4652 = vpack.c.b16 %v4540, %v4538
    %v4653 = vpack.c.b16 %v4541, %v4539
    %v4654 = vpack.c.b16 %v4544, %v4542
    %v4655 = vpack.c.b16 %v4545, %v4543
    %v4656 = vpack.c.b16 %v4548, %v4546
    %v4657 = vpack.c.b16 %v4549, %v4547
    %v4658 = vpack.c.b16 %v4552, %v4550
    %v4659 = vpack.c.b16 %v4553, %v4551
    %v4660 = vpack.c.b16 %v4556, %v4554
    %v4661 = vpack.c.b16 %v4557, %v4555
    %v4662 = vpack.c.b16 %v4560, %v4558
    %v4663 = vpack.c.b16 %v4561, %v4559
    %v4664 = vpack.c.b16 %v4564, %v4562
    %v4665 = vpack.c.b16 %v4565, %v4563
    %v4666 = vpack.c.b16 %v4568, %v4566
    %v4667 = vpack.c.b16 %v4569, %v4567
    %v4668 = vpack.c.b16 %v4572, %v4570
    %v4669 = vpack.c.b16 %v4573, %v4571
    %4766 = vmatprep.subr.bf16.mxu0 %v4575
    %4767 = vmatpush1.bf16.msra.mxu0 %v4574
    %4768 = vmatprep.subr.bf16.mxu0 %v4577
    %4769 = vmatpush1.bf16.msra.mxu0 %v4576
    %4770 = vmatprep.subr.bf16.mxu0 %v4579
    %4771 = vmatpush1.bf16.msra.mxu0 %v4578
    %4772 = vmatprep.subr.bf16.mxu0 %v4581
    %4773 = vmatpush1.bf16.msra.mxu0 %v4580
    %4774 = vmatprep.subr.bf16.mxu0 %v4583
    %4775 = vmatpush1.bf16.msra.mxu0 %v4582
    %4776 = vmatprep.subr.bf16.mxu0 %v4585
    %4777 = vmatpush1.bf16.msra.mxu0 %v4584
    %4778 = vmatprep.subr.bf16.mxu0 %v4587
    %4779 = vmatpush1.bf16.msra.mxu0 %v4586
    %4780 = vmatprep.subr.bf16.mxu0 %v4589
    %4781 = vmatpush1.bf16.msra.mxu0 %v4588
    %4782 = vmatprep.subr.bf16.mxu0 %v4591
    %4783 = vmatpush1.bf16.msra.mxu0 %v4590
    %4784 = vmatprep.subr.bf16.mxu0 %v4593
    %4785 = vmatpush1.bf16.msra.mxu0 %v4592
    %4786 = vmatprep.subr.bf16.mxu0 %v4595
    %4787 = vmatpush1.bf16.msra.mxu0 %v4594
    %4788 = vmatprep.subr.bf16.mxu0 %v4597
    %4789 = vmatpush1.bf16.msra.mxu0 %v4596
    %4790 = vmatprep.subr.bf16.mxu0 %v4599
    %4791 = vmatpush1.bf16.msra.mxu0 %v4598
    %4792 = vmatprep.subr.bf16.mxu0 %v4601
    %4793 = vmatpush1.bf16.msra.mxu0 %v4600
    %4794 = vmatprep.subr.bf16.mxu0 %v4603
    %4795 = vmatpush1.bf16.msra.mxu0 %v4602
    %4796 = vmatprep.subr.bf16.mxu0 %v4605
    %4797 = vmatpush1.bf16.msra.mxu0 %v4604
    %4798 = vmatprep.mubr.bf16.mxu0 %v4095
    %4799 = vmatmul.mubr.bf16.gmra.mrb[0].mxu0 %v4094
    %v4800 = vpop.f32.mrb[0].mxu0
    %v4801 = vadd.f32 0.0, %v4800
    %v4802 = vpop.f32.mrb[0].mxu0
    %v4803 = vadd.f32 0.0, %v4802
    %v4804 = vpop.f32.mrb[0].mxu0
    %v4805 = vadd.f32 0.0, %v4804
    %v4806 = vpop.f32.mrb[0].mxu0
    %v4807 = vadd.f32 0.0, %v4806
    %4808 = vmatprep.mubr.bf16.mxu0 %v4101
    %4809 = vmatmul.mubr.bf16.gmra.mrb[0].mxu0 %v4100
    %v4810 = vpop.f32.mrb[0].mxu0
    %v4811 = vadd.f32 0.0, %v4810
    %v4812 = vpop.f32.mrb[0].mxu0
    %v4813 = vadd.f32 0.0, %v4812
    %v4814 = vpop.f32.mrb[0].mxu0
    %v4815 = vadd.f32 0.0, %v4814
    %v4816 = vpop.f32.mrb[0].mxu0
    %v4817 = vadd.f32 0.0, %v4816
    %4818 = vmatprep.mubr.bf16.mxu0 %v4107
    %4819 = vmatmul.mubr.bf16.gmra.mrb[0].mxu0 %v4106
    %v4820 = vpop.f32.mrb[0].mxu0
    %v4821 = vadd.f32 0.0, %v4820
    %v4822 = vpop.f32.mrb[0].mxu0
    %v4823 = vadd.f32 0.0, %v4822
    %v4824 = vpop.f32.mrb[0].mxu0
    %v4825 = vadd.f32 0.0, %v4824
    %v4826 = vpop.f32.mrb[0].mxu0
    %v4827 = vadd.f32 0.0, %v4826
    %4828 = vmatprep.mubr.bf16.mxu0 %v4113
    %4829 = vmatmul.mubr.bf16.gmra.mrb[0].mxu0 %v4112
    %v4830 = vpop.f32.mrb[0].mxu0
    %v4831 = vadd.f32 0.0, %v4830
    %v4832 = vpop.f32.mrb[0].mxu0
    %v4833 = vadd.f32 0.0, %v4832
    %v4834 = vpop.f32.mrb[0].mxu0
    %v4835 = vadd.f32 0.0, %v4834
    %v4836 = vpop.f32.mrb[0].mxu0
    %v4837 = vadd.f32 0.0, %v4836
    %4838 = vmatprep.mubr.bf16.mxu0 %v4119
    %4839 = vmatmul.mubr.bf16.gmra.mrb[0].mxu0 %v4118
    %v4840 = vpop.f32.mrb[0].mxu0
    %v4841 = vadd.f32 0.0, %v4840
    %v4842 = vpop.f32.mrb[0].mxu0
    %v4843 = vadd.f32 0.0, %v4842
    %v4844 = vpop.f32.mrb[0].mxu0
    %v4845 = vadd.f32 0.0, %v4844
    %v4846 = vpop.f32.mrb[0].mxu0
    %v4847 = vadd.f32 0.0, %v4846
    %4848 = vmatprep.mubr.bf16.mxu0 %v4125
    %4849 = vmatmul.mubr.bf16.gmra.mrb[0].mxu0 %v4124
    %v4850 = vpop.f32.mrb[0].mxu0
    %v4851 = vadd.f32 0.0, %v4850
    %v4852 = vpop.f32.mrb[0].mxu0
    %v4853 = vadd.f32 0.0, %v4852
    %v4854 = vpop.f32.mrb[0].mxu0
    %v4855 = vadd.f32 0.0, %v4854
    %v4856 = vpop.f32.mrb[0].mxu0
    %v4857 = vadd.f32 0.0, %v4856
    %4858 = vmatprep.mubr.bf16.mxu0 %v4131
    %4859 = vmatmul.mubr.bf16.gmra.mrb[0].mxu0 %v4130
    %v4860 = vpop.f32.mrb[0].mxu0
    %v4861 = vadd.f32 0.0, %v4860
    %v4862 = vpop.f32.mrb[0].mxu0
    %v4863 = vadd.f32 0.0, %v4862
    %v4864 = vpop.f32.mrb[0].mxu0
    %v4865 = vadd.f32 0.0, %v4864
    %v4866 = vpop.f32.mrb[0].mxu0
    %v4867 = vadd.f32 0.0, %v4866
    %4868 = vmatprep.mubr.bf16.mxu0 %v4137
    %4869 = vmatmul.mubr.bf16.gmra.mrb[0].mxu0 %v4136
    %v4870 = vpop.f32.mrb[0].mxu0
    %v4871 = vadd.f32 0.0, %v4870
    %v4872 = vpop.f32.mrb[0].mxu0
    %v4873 = vadd.f32 0.0, %v4872
    %v4874 = vpop.f32.mrb[0].mxu0
    %v4875 = vadd.f32 0.0, %v4874
    %v4876 = vpop.f32.mrb[0].mxu0
    %v4877 = vadd.f32 0.0, %v4876
    %4878 = vmatprep.mubr.bf16.mxu0 %v4143
    %4879 = vmatmul.mubr.bf16.gmra.mrb[0].mxu0 %v4142
    %v4880 = vpop.f32.mrb[0].mxu0
    %v4881 = vadd.f32 0.0, %v4880
    %v4882 = vpop.f32.mrb[0].mxu0
    %v4883 = vadd.f32 0.0, %v4882
    %v4884 = vpop.f32.mrb[0].mxu0
    %v4885 = vadd.f32 0.0, %v4884
    %v4886 = vpop.f32.mrb[0].mxu0
    %v4887 = vadd.f32 0.0, %v4886
    %4888 = vmatprep.mubr.bf16.mxu0 %v4149
    %4889 = vmatmul.mubr.bf16.gmra.mrb[0].mxu0 %v4148
    %v4890 = vpop.f32.mrb[0].mxu0
    %v4891 = vadd.f32 0.0, %v4890
    %v4892 = vpop.f32.mrb[0].mxu0
    %v4893 = vadd.f32 0.0, %v4892
    %v4894 = vpop.f32.mrb[0].mxu0
    %v4895 = vadd.f32 0.0, %v4894
    %v4896 = vpop.f32.mrb[0].mxu0
    %v4897 = vadd.f32 0.0, %v4896
    %4898 = vmatprep.mubr.bf16.mxu0 %v4155
    %4899 = vmatmul.mubr.bf16.gmra.mrb[0].mxu0 %v4154
    %v4900 = vpop.f32.mrb[0].mxu0
    %v4901 = vadd.f32 0.0, %v4900
    %v4902 = vpop.f32.mrb[0].mxu0
    %v4903 = vadd.f32 0.0, %v4902
    %v4904 = vpop.f32.mrb[0].mxu0
    %v4905 = vadd.f32 0.0, %v4904
    %v4906 = vpop.f32.mrb[0].mxu0
    %v4907 = vadd.f32 0.0, %v4906
    %4908 = vmatprep.mubr.bf16.mxu0 %v4161
    %4909 = vmatmul.mubr.bf16.gmra.mrb[0].mxu0 %v4160
    %v4910 = vpop.f32.mrb[0].mxu0
    %v4911 = vadd.f32 0.0, %v4910
    %v4912 = vpop.f32.mrb[0].mxu0
    %v4913 = vadd.f32 0.0, %v4912
    %v4914 = vpop.f32.mrb[0].mxu0
    %v4915 = vadd.f32 0.0, %v4914
    %v4916 = vpop.f32.mrb[0].mxu0
    %v4917 = vadd.f32 0.0, %v4916
    %4918 = vmatprep.mubr.bf16.mxu0 %v4167
    %4919 = vmatmul.mubr.bf16.gmra.mrb[0].mxu0 %v4166
    %v4920 = vpop.f32.mrb[0].mxu0
    %v4921 = vadd.f32 0.0, %v4920
    %v4922 = vpop.f32.mrb[0].mxu0
    %v4923 = vadd.f32 0.0, %v4922
    %v4924 = vpop.f32.mrb[0].mxu0
    %v4925 = vadd.f32 0.0, %v4924
    %v4926 = vpop.f32.mrb[0].mxu0
    %v4927 = vadd.f32 0.0, %v4926
    %4928 = vmatprep.mubr.bf16.mxu0 %v4173
    %4929 = vmatmul.mubr.bf16.gmra.mrb[0].mxu0 %v4172
    %v4930 = vpop.f32.mrb[0].mxu0
    %v4931 = vadd.f32 0.0, %v4930
    %v4932 = vpop.f32.mrb[0].mxu0
    %v4933 = vadd.f32 0.0, %v4932
    %v4934 = vpop.f32.mrb[0].mxu0
    %v4935 = vadd.f32 0.0, %v4934
    %v4936 = vpop.f32.mrb[0].mxu0
    %v4937 = vadd.f32 0.0, %v4936
    %4938 = vmatprep.mubr.bf16.mxu0 %v4179
    %4939 = vmatmul.mubr.bf16.gmra.mrb[0].mxu0 %v4178
    %v4940 = vpop.f32.mrb[0].mxu0
    %v4941 = vadd.f32 0.0, %v4940
    %v4942 = vpop.f32.mrb[0].mxu0
    %v4943 = vadd.f32 0.0, %v4942
    %v4944 = vpop.f32.mrb[0].mxu0
    %v4945 = vadd.f32 0.0, %v4944
    %v4946 = vpop.f32.mrb[0].mxu0
    %v4947 = vadd.f32 0.0, %v4946
    %4948 = vmatprep.mubr.bf16.mxu0 %v4185
    %4949 = vmatmul.mubr.bf16.gmra.mrb[0].mxu0 %v4184
    %v4950 = vpop.f32.mrb[0].mxu0
    %v4951 = vadd.f32 0.0, %v4950
    %v4952 = vpop.f32.mrb[0].mxu0
    %v4953 = vadd.f32 0.0, %v4952
    %v4954 = vpop.f32.mrb[0].mxu0
    %v4955 = vadd.f32 0.0, %v4954
    %v4956 = vpop.f32.mrb[0].mxu0
    %v4957 = vadd.f32 0.0, %v4956
    %4958 = vdwg.mxu0
    %4959 = vmatprep.subr.bf16.mxu0 %v4607
    %4960 = vmatpush1.bf16.msra.mxu0 %v4606
    %4961 = vmatprep.subr.bf16.mxu0 %v4609
    %4962 = vmatpush1.bf16.msra.mxu0 %v4608
    %4963 = vmatprep.subr.bf16.mxu0 %v4611
    %4964 = vmatpush1.bf16.msra.mxu0 %v4610
    %4965 = vmatprep.subr.bf16.mxu0 %v4613
    %4966 = vmatpush1.bf16.msra.mxu0 %v4612
    %4967 = vmatprep.subr.bf16.mxu0 %v4615
    %4968 = vmatpush1.bf16.msra.mxu0 %v4614
    %4969 = vmatprep.subr.bf16.mxu0 %v4617
    %4970 = vmatpush1.bf16.msra.mxu0 %v4616
    %4971 = vmatprep.subr.bf16.mxu0 %v4619
    %4972 = vmatpush1.bf16.msra.mxu0 %v4618
    %4973 = vmatprep.subr.bf16.mxu0 %v4621
    %4974 = vmatpush1.bf16.msra.mxu0 %v4620
    %4975 = vmatprep.subr.bf16.mxu0 %v4623
    %4976 = vmatpush1.bf16.msra.mxu0 %v4622
    %4977 = vmatprep.subr.bf16.mxu0 %v4625
    %4978 = vmatpush1.bf16.msra.mxu0 %v4624
    %4979 = vmatprep.subr.bf16.mxu0 %v4627
    %4980 = vmatpush1.bf16.msra.mxu0 %v4626
    %4981 = vmatprep.subr.bf16.mxu0 %v4629
    %4982 = vmatpush1.bf16.msra.mxu0 %v4628
    %4983 = vmatprep.subr.bf16.mxu0 %v4631
    %4984 = vmatpush1.bf16.msra.mxu0 %v4630
    %4985 = vmatprep.subr.bf16.mxu0 %v4633
    %4986 = vmatpush1.bf16.msra.mxu0 %v4632
    %4987 = vmatprep.subr.bf16.mxu0 %v4635
    %4988 = vmatpush1.bf16.msra.mxu0 %v4634
    %4989 = vmatprep.subr.bf16.mxu0 %v4637
    %4990 = vmatpush1.bf16.msra.mxu0 %v4636
    %4991 = vmatprep.mubr.bf16.mxu0 %v4097
    %4992 = vmatmul.mubr.bf16.gmra.mrb[0].mxu0 %v4096
    %v4993 = vpop.f32.mrb[0].mxu0
    %v4994 = vadd.f32 %v4801, %v4993
    %v4995 = vpop.f32.mrb[0].mxu0
    %v4996 = vadd.f32 %v4803, %v4995
    %v4997 = vpop.f32.mrb[0].mxu0
    %v4998 = vadd.f32 %v4805, %v4997
    %v4999 = vpop.f32.mrb[0].mxu0
    %v5000 = vadd.f32 %v4807, %v4999
    %5001 = vmatprep.mubr.bf16.mxu0 %v4103
    %5002 = vmatmul.mubr.bf16.gmra.mrb[0].mxu0 %v4102
    %v5003 = vpop.f32.mrb[0].mxu0
    %v5004 = vadd.f32 %v4811, %v5003
    %v5005 = vpop.f32.mrb[0].mxu0
    %v5006 = vadd.f32 %v4813, %v5005
    %v5007 = vpop.f32.mrb[0].mxu0
    %v5008 = vadd.f32 %v4815, %v5007
    %v5009 = vpop.f32.mrb[0].mxu0
    %v5010 = vadd.f32 %v4817, %v5009
    %5011 = vmatprep.mubr.bf16.mxu0 %v4109
    %5012 = vmatmul.mubr.bf16.gmra.mrb[0].mxu0 %v4108
    %v5013 = vpop.f32.mrb[0].mxu0
    %v5014 = vadd.f32 %v4821, %v5013
    %v5015 = vpop.f32.mrb[0].mxu0
    %v5016 = vadd.f32 %v4823, %v5015
    %v5017 = vpop.f32.mrb[0].mxu0
    %v5018 = vadd.f32 %v4825, %v5017
    %v5019 = vpop.f32.mrb[0].mxu0
    %v5020 = vadd.f32 %v4827, %v5019
    %5021 = vmatprep.mubr.bf16.mxu0 %v4115
    %5022 = vmatmul.mubr.bf16.gmra.mrb[0].mxu0 %v4114
    %v5023 = vpop.f32.mrb[0].mxu0
    %v5024 = vadd.f32 %v4831, %v5023
    %v5025 = vpop.f32.mrb[0].mxu0
    %v5026 = vadd.f32 %v4833, %v5025
    %v5027 = vpop.f32.mrb[0].mxu0
    %v5028 = vadd.f32 %v4835, %v5027
    %v5029 = vpop.f32.mrb[0].mxu0
    %v5030 = vadd.f32 %v4837, %v5029
    %5031 = vmatprep.mubr.bf16.mxu0 %v4121
    %5032 = vmatmul.mubr.bf16.gmra.mrb[0].mxu0 %v4120
    %v5033 = vpop.f32.mrb[0].mxu0
    %v5034 = vadd.f32 %v4841, %v5033
    %v5035 = vpop.f32.mrb[0].mxu0
    %v5036 = vadd.f32 %v4843, %v5035
    %v5037 = vpop.f32.mrb[0].mxu0
    %v5038 = vadd.f32 %v4845, %v5037
    %v5039 = vpop.f32.mrb[0].mxu0
    %v5040 = vadd.f32 %v4847, %v5039
    %5041 = vmatprep.mubr.bf16.mxu0 %v4127
    %5042 = vmatmul.mubr.bf16.gmra.mrb[0].mxu0 %v4126
    %v5043 = vpop.f32.mrb[0].mxu0
    %v5044 = vadd.f32 %v4851, %v5043
    %v5045 = vpop.f32.mrb[0].mxu0
    %v5046 = vadd.f32 %v4853, %v5045
    %v5047 = vpop.f32.mrb[0].mxu0
    %v5048 = vadd.f32 %v4855, %v5047
    %v5049 = vpop.f32.mrb[0].mxu0
    %v5050 = vadd.f32 %v4857, %v5049
    %5051 = vmatprep.mubr.bf16.mxu0 %v4133
    %5052 = vmatmul.mubr.bf16.gmra.mrb[0].mxu0 %v4132
    %v5053 = vpop.f32.mrb[0].mxu0
    %v5054 = vadd.f32 %v4861, %v5053
    %v5055 = vpop.f32.mrb[0].mxu0
    %v5056 = vadd.f32 %v4863, %v5055
    %v5057 = vpop.f32.mrb[0].mxu0
    %v5058 = vadd.f32 %v4865, %v5057
    %v5059 = vpop.f32.mrb[0].mxu0
    %v5060 = vadd.f32 %v4867, %v5059
    %5061 = vmatprep.mubr.bf16.mxu0 %v4139
    %5062 = vmatmul.mubr.bf16.gmra.mrb[0].mxu0 %v4138
    %v5063 = vpop.f32.mrb[0].mxu0
    %v5064 = vadd.f32 %v4871, %v5063
    %v5065 = vpop.f32.mrb[0].mxu0
    %v5066 = vadd.f32 %v4873, %v5065
    %v5067 = vpop.f32.mrb[0].mxu0
    %v5068 = vadd.f32 %v4875, %v5067
    %v5069 = vpop.f32.mrb[0].mxu0
    %v5070 = vadd.f32 %v4877, %v5069
    %5071 = vmatprep.mubr.bf16.mxu0 %v4145
    %5072 = vmatmul.mubr.bf16.gmra.mrb[0].mxu0 %v4144
    %v5073 = vpop.f32.mrb[0].mxu0
    %v5074 = vadd.f32 %v4881, %v5073
    %v5075 = vpop.f32.mrb[0].mxu0
    %v5076 = vadd.f32 %v4883, %v5075
    %v5077 = vpop.f32.mrb[0].mxu0
    %v5078 = vadd.f32 %v4885, %v5077
    %v5079 = vpop.f32.mrb[0].mxu0
    %v5080 = vadd.f32 %v4887, %v5079
    %5081 = vmatprep.mubr.bf16.mxu0 %v4151
    %5082 = vmatmul.mubr.bf16.gmra.mrb[0].mxu0 %v4150
    %v5083 = vpop.f32.mrb[0].mxu0
    %v5084 = vadd.f32 %v4891, %v5083
    %v5085 = vpop.f32.mrb[0].mxu0
    %v5086 = vadd.f32 %v4893, %v5085
    %v5087 = vpop.f32.mrb[0].mxu0
    %v5088 = vadd.f32 %v4895, %v5087
    %v5089 = vpop.f32.mrb[0].mxu0
    %v5090 = vadd.f32 %v4897, %v5089
    %5091 = vmatprep.mubr.bf16.mxu0 %v4157
    %5092 = vmatmul.mubr.bf16.gmra.mrb[0].mxu0 %v4156
    %v5093 = vpop.f32.mrb[0].mxu0
    %v5094 = vadd.f32 %v4901, %v5093
    %v5095 = vpop.f32.mrb[0].mxu0
    %v5096 = vadd.f32 %v4903, %v5095
    %v5097 = vpop.f32.mrb[0].mxu0
    %v5098 = vadd.f32 %v4905, %v5097
    %v5099 = vpop.f32.mrb[0].mxu0
    %v5100 = vadd.f32 %v4907, %v5099
    %5101 = vmatprep.mubr.bf16.mxu0 %v4163
    %5102 = vmatmul.mubr.bf16.gmra.mrb[0].mxu0 %v4162
    %v5103 = vpop.f32.mrb[0].mxu0
    %v5104 = vadd.f32 %v4911, %v5103
    %v5105 = vpop.f32.mrb[0].mxu0
    %v5106 = vadd.f32 %v4913, %v5105
    %v5107 = vpop.f32.mrb[0].mxu0
    %v5108 = vadd.f32 %v4915, %v5107
    %v5109 = vpop.f32.mrb[0].mxu0
    %v5110 = vadd.f32 %v4917, %v5109
    %5111 = vmatprep.mubr.bf16.mxu0 %v4169
    %5112 = vmatmul.mubr.bf16.gmra.mrb[0].mxu0 %v4168
    %v5113 = vpop.f32.mrb[0].mxu0
    %v5114 = vadd.f32 %v4921, %v5113
    %v5115 = vpop.f32.mrb[0].mxu0
    %v5116 = vadd.f32 %v4923, %v5115
    %v5117 = vpop.f32.mrb[0].mxu0
    %v5118 = vadd.f32 %v4925, %v5117
    %v5119 = vpop.f32.mrb[0].mxu0
    %v5120 = vadd.f32 %v4927, %v5119
    %5121 = vmatprep.mubr.bf16.mxu0 %v4175
    %5122 = vmatmul.mubr.bf16.gmra.mrb[0].mxu0 %v4174
    %v5123 = vpop.f32.mrb[0].mxu0
    %v5124 = vadd.f32 %v4931, %v5123
    %v5125 = vpop.f32.mrb[0].mxu0
    %v5126 = vadd.f32 %v4933, %v5125
    %v5127 = vpop.f32.mrb[0].mxu0
    %v5128 = vadd.f32 %v4935, %v5127
    %v5129 = vpop.f32.mrb[0].mxu0
    %v5130 = vadd.f32 %v4937, %v5129
    %5131 = vmatprep.mubr.bf16.mxu0 %v4181
    %5132 = vmatmul.mubr.bf16.gmra.mrb[0].mxu0 %v4180
    %v5133 = vpop.f32.mrb[0].mxu0
    %v5134 = vadd.f32 %v4941, %v5133
    %v5135 = vpop.f32.mrb[0].mxu0
    %v5136 = vadd.f32 %v4943, %v5135
    %v5137 = vpop.f32.mrb[0].mxu0
    %v5138 = vadd.f32 %v4945, %v5137
    %v5139 = vpop.f32.mrb[0].mxu0
    %v5140 = vadd.f32 %v4947, %v5139
    %5141 = vmatprep.mubr.bf16.mxu0 %v4187
    %5142 = vmatmul.mubr.bf16.gmra.mrb[0].mxu0 %v4186
    %v5143 = vpop.f32.mrb[0].mxu0
    %v5144 = vadd.f32 %v4951, %v5143
    %v5145 = vpop.f32.mrb[0].mxu0
    %v5146 = vadd.f32 %v4953, %v5145
    %v5147 = vpop.f32.mrb[0].mxu0
    %v5148 = vadd.f32 %v4955, %v5147
    %v5149 = vpop.f32.mrb[0].mxu0
    %v5150 = vadd.f32 %v4957, %v5149
    %5151 = vdwg.mxu0
    %5152 = vmatprep.subr.bf16.mxu0 %v4639
    %5153 = vmatpush1.bf16.msra.mxu0 %v4638
    %5154 = vmatprep.subr.bf16.mxu0 %v4641
    %5155 = vmatpush1.bf16.msra.mxu0 %v4640
    %5156 = vmatprep.subr.bf16.mxu0 %v4643
    %5157 = vmatpush1.bf16.msra.mxu0 %v4642
    %5158 = vmatprep.subr.bf16.mxu0 %v4645
    %5159 = vmatpush1.bf16.msra.mxu0 %v4644
    %5160 = vmatprep.subr.bf16.mxu0 %v4647
    %5161 = vmatpush1.bf16.msra.mxu0 %v4646
    %5162 = vmatprep.subr.bf16.mxu0 %v4649
    %5163 = vmatpush1.bf16.msra.mxu0 %v4648
    %5164 = vmatprep.subr.bf16.mxu0 %v4651
    %5165 = vmatpush1.bf16.msra.mxu0 %v4650
    %5166 = vmatprep.subr.bf16.mxu0 %v4653
    %5167 = vmatpush1.bf16.msra.mxu0 %v4652
    %5168 = vmatprep.subr.bf16.mxu0 %v4655
    %5169 = vmatpush1.bf16.msra.mxu0 %v4654
    %5170 = vmatprep.subr.bf16.mxu0 %v4657
    %5171 = vmatpush1.bf16.msra.mxu0 %v4656
    %5172 = vmatprep.subr.bf16.mxu0 %v4659
    %5173 = vmatpush1.bf16.msra.mxu0 %v4658
    %5174 = vmatprep.subr.bf16.mxu0 %v4661
    %5175 = vmatpush1.bf16.msra.mxu0 %v4660
    %5176 = vmatprep.subr.bf16.mxu0 %v4663
    %5177 = vmatpush1.bf16.msra.mxu0 %v4662
    %5178 = vmatprep.subr.bf16.mxu0 %v4665
    %5179 = vmatpush1.bf16.msra.mxu0 %v4664
    %5180 = vmatprep.subr.bf16.mxu0 %v4667
    %5181 = vmatpush1.bf16.msra.mxu0 %v4666
    %5182 = vmatprep.subr.bf16.mxu0 %v4669
    %5183 = vmatpush1.bf16.msra.mxu0 %v4668
    %5184 = vmatprep.mubr.bf16.mxu0 %v4099
    %5185 = vmatmul.mubr.bf16.gmra.mrb[0].mxu0 %v4098
    %v5186 = vpop.f32.mrb[0].mxu0
    %v5187 = vadd.f32 %v4994, %v5186
    %v5188 = vpop.f32.mrb[0].mxu0
    %v5189 = vadd.f32 %v4996, %v5188
    %v5190 = vpop.f32.mrb[0].mxu0
    %v5191 = vadd.f32 %v4998, %v5190
    %v5192 = vpop.f32.mrb[0].mxu0
    %v5193 = vadd.f32 %v5000, %v5192
    %5194 = vmatprep.mubr.bf16.mxu0 %v4105
    %5195 = vmatmul.mubr.bf16.gmra.mrb[0].mxu0 %v4104
    %v5196 = vpop.f32.mrb[0].mxu0
    %v5197 = vadd.f32 %v5004, %v5196
    %v5198 = vpop.f32.mrb[0].mxu0
    %v5199 = vadd.f32 %v5006, %v5198
    %v5200 = vpop.f32.mrb[0].mxu0
    %v5201 = vadd.f32 %v5008, %v5200
    %v5202 = vpop.f32.mrb[0].mxu0
    %v5203 = vadd.f32 %v5010, %v5202
    %5204 = vmatprep.mubr.bf16.mxu0 %v4111
    %5205 = vmatmul.mubr.bf16.gmra.mrb[0].mxu0 %v4110
    %v5206 = vpop.f32.mrb[0].mxu0
    %v5207 = vadd.f32 %v5014, %v5206
    %v5208 = vpop.f32.mrb[0].mxu0
    %v5209 = vadd.f32 %v5016, %v5208
    %v5210 = vpop.f32.mrb[0].mxu0
    %v5211 = vadd.f32 %v5018, %v5210
    %v5212 = vpop.f32.mrb[0].mxu0
    %v5213 = vadd.f32 %v5020, %v5212
    %5214 = vmatprep.mubr.bf16.mxu0 %v4117
    %5215 = vmatmul.mubr.bf16.gmra.mrb[0].mxu0 %v4116
    %v5216 = vpop.f32.mrb[0].mxu0
    %v5217 = vadd.f32 %v5024, %v5216
    %v5218 = vpop.f32.mrb[0].mxu0
    %v5219 = vadd.f32 %v5026, %v5218
    %v5220 = vpop.f32.mrb[0].mxu0
    %v5221 = vadd.f32 %v5028, %v5220
    %v5222 = vpop.f32.mrb[0].mxu0
    %v5223 = vadd.f32 %v5030, %v5222
    %5224 = vmatprep.mubr.bf16.mxu0 %v4123
    %5225 = vmatmul.mubr.bf16.gmra.mrb[0].mxu0 %v4122
    %v5226 = vpop.f32.mrb[0].mxu0
    %v5227 = vadd.f32 %v5034, %v5226
    %v5228 = vpop.f32.mrb[0].mxu0
    %v5229 = vadd.f32 %v5036, %v5228
    %v5230 = vpop.f32.mrb[0].mxu0
    %v5231 = vadd.f32 %v5038, %v5230
    %v5232 = vpop.f32.mrb[0].mxu0
    %v5233 = vadd.f32 %v5040, %v5232
    %5234 = vmatprep.mubr.bf16.mxu0 %v4129
    %5235 = vmatmul.mubr.bf16.gmra.mrb[0].mxu0 %v4128
    %v5236 = vpop.f32.mrb[0].mxu0
    %v5237 = vadd.f32 %v5044, %v5236
    %v5238 = vpop.f32.mrb[0].mxu0
    %v5239 = vadd.f32 %v5046, %v5238
    %v5240 = vpop.f32.mrb[0].mxu0
    %v5241 = vadd.f32 %v5048, %v5240
    %v5242 = vpop.f32.mrb[0].mxu0
    %v5243 = vadd.f32 %v5050, %v5242
    %5244 = vmatprep.mubr.bf16.mxu0 %v4135
    %5245 = vmatmul.mubr.bf16.gmra.mrb[0].mxu0 %v4134
    %v5246 = vpop.f32.mrb[0].mxu0
    %v5247 = vadd.f32 %v5054, %v5246
    %v5248 = vpop.f32.mrb[0].mxu0
    %v5249 = vadd.f32 %v5056, %v5248
    %v5250 = vpop.f32.mrb[0].mxu0
    %v5251 = vadd.f32 %v5058, %v5250
    %v5252 = vpop.f32.mrb[0].mxu0
    %v5253 = vadd.f32 %v5060, %v5252
    %5254 = vmatprep.mubr.bf16.mxu0 %v4141
    %5255 = vmatmul.mubr.bf16.gmra.mrb[0].mxu0 %v4140
    %v5256 = vpop.f32.mrb[0].mxu0
    %v5257 = vadd.f32 %v5064, %v5256
    %v5258 = vpop.f32.mrb[0].mxu0
    %v5259 = vadd.f32 %v5066, %v5258
    %v5260 = vpop.f32.mrb[0].mxu0
    %v5261 = vadd.f32 %v5068, %v5260
    %v5262 = vpop.f32.mrb[0].mxu0
    %v5263 = vadd.f32 %v5070, %v5262
    %5264 = vmatprep.mubr.bf16.mxu0 %v4147
    %5265 = vmatmul.mubr.bf16.gmra.mrb[0].mxu0 %v4146
    %v5266 = vpop.f32.mrb[0].mxu0
    %v5267 = vadd.f32 %v5074, %v5266
    %v5268 = vpop.f32.mrb[0].mxu0
    %v5269 = vadd.f32 %v5076, %v5268
    %v5270 = vpop.f32.mrb[0].mxu0
    %v5271 = vadd.f32 %v5078, %v5270
    %v5272 = vpop.f32.mrb[0].mxu0
    %v5273 = vadd.f32 %v5080, %v5272
    %5274 = vmatprep.mubr.bf16.mxu0 %v4153
    %5275 = vmatmul.mubr.bf16.gmra.mrb[0].mxu0 %v4152
    %v5276 = vpop.f32.mrb[0].mxu0
    %v5277 = vadd.f32 %v5084, %v5276
    %v5278 = vpop.f32.mrb[0].mxu0
    %v5279 = vadd.f32 %v5086, %v5278
    %v5280 = vpop.f32.mrb[0].mxu0
    %v5281 = vadd.f32 %v5088, %v5280
    %v5282 = vpop.f32.mrb[0].mxu0
    %v5283 = vadd.f32 %v5090, %v5282
    %5284 = vmatprep.mubr.bf16.mxu0 %v4159
    %5285 = vmatmul.mubr.bf16.gmra.mrb[0].mxu0 %v4158
    %v5286 = vpop.f32.mrb[0].mxu0
    %v5287 = vadd.f32 %v5094, %v5286
    %v5288 = vpop.f32.mrb[0].mxu0
    %v5289 = vadd.f32 %v5096, %v5288
    %v5290 = vpop.f32.mrb[0].mxu0
    %v5291 = vadd.f32 %v5098, %v5290
    %v5292 = vpop.f32.mrb[0].mxu0
    %v5293 = vadd.f32 %v5100, %v5292
    %5294 = vmatprep.mubr.bf16.mxu0 %v4165
    %5295 = vmatmul.mubr.bf16.gmra.mrb[0].mxu0 %v4164
    %v5296 = vpop.f32.mrb[0].mxu0
    %v5297 = vadd.f32 %v5104, %v5296
    %v5298 = vpop.f32.mrb[0].mxu0
    %v5299 = vadd.f32 %v5106, %v5298
    %v5300 = vpop.f32.mrb[0].mxu0
    %v5301 = vadd.f32 %v5108, %v5300
    %v5302 = vpop.f32.mrb[0].mxu0
    %v5303 = vadd.f32 %v5110, %v5302
    %5304 = vmatprep.mubr.bf16.mxu0 %v4171
    %5305 = vmatmul.mubr.bf16.gmra.mrb[0].mxu0 %v4170
    %v5306 = vpop.f32.mrb[0].mxu0
    %v5307 = vadd.f32 %v5114, %v5306
    %v5308 = vpop.f32.mrb[0].mxu0
    %v5309 = vadd.f32 %v5116, %v5308
    %v5310 = vpop.f32.mrb[0].mxu0
    %v5311 = vadd.f32 %v5118, %v5310
    %v5312 = vpop.f32.mrb[0].mxu0
    %v5313 = vadd.f32 %v5120, %v5312
    %5314 = vmatprep.mubr.bf16.mxu0 %v4177
    %5315 = vmatmul.mubr.bf16.gmra.mrb[0].mxu0 %v4176
    %v5316 = vpop.f32.mrb[0].mxu0
    %v5317 = vadd.f32 %v5124, %v5316
    %v5318 = vpop.f32.mrb[0].mxu0
    %v5319 = vadd.f32 %v5126, %v5318
    %v5320 = vpop.f32.mrb[0].mxu0
    %v5321 = vadd.f32 %v5128, %v5320
    %v5322 = vpop.f32.mrb[0].mxu0
    %v5323 = vadd.f32 %v5130, %v5322
    %5324 = vmatprep.mubr.bf16.mxu0 %v4183
    %5325 = vmatmul.mubr.bf16.gmra.mrb[0].mxu0 %v4182
    %v5326 = vpop.f32.mrb[0].mxu0
    %v5327 = vadd.f32 %v5134, %v5326
    %v5328 = vpop.f32.mrb[0].mxu0
    %v5329 = vadd.f32 %v5136, %v5328
    %v5330 = vpop.f32.mrb[0].mxu0
    %v5331 = vadd.f32 %v5138, %v5330
    %v5332 = vpop.f32.mrb[0].mxu0
    %v5333 = vadd.f32 %v5140, %v5332
    %5334 = vmatprep.mubr.bf16.mxu0 %v4189
    %5335 = vmatmul.mubr.bf16.gmra.mrb[0].mxu0 %v4188
    %v5336 = vpop.f32.mrb[0].mxu0
    %v5337 = vadd.f32 %v5144, %v5336
    %v5338 = vpop.f32.mrb[0].mxu0
    %v5339 = vadd.f32 %v5146, %v5338
    %v5340 = vpop.f32.mrb[0].mxu0
    %v5341 = vadd.f32 %v5148, %v5340
    %v5342 = vpop.f32.mrb[0].mxu0
    %v5343 = vadd.f32 %v5150, %v5342
    %5344 = vdwg.mxu0
    %5345 = vst [vmem:[#allocation8] sm:$0xff] %v5187
    %5346 = vst [vmem:[#allocation8 + $0x8] sm:$0xff] %v5189
    %5347 = vst [vmem:[#allocation8 + $0x10] sm:$0xff] %v5191
    %5348 = vst [vmem:[#allocation8 + $0x18] sm:$0xff] %v5193
    %5349 = vst [vmem:[#allocation8 + $0x20] sm:$0xff] %v5197
    %5350 = vst [vmem:[#allocation8 + $0x28] sm:$0xff] %v5199
    %5351 = vst [vmem:[#allocation8 + $0x30] sm:$0xff] %v5201
    %5352 = vst [vmem:[#allocation8 + $0x38] sm:$0xff] %v5203
    %5353 = vst [vmem:[#allocation8 + $0x40] sm:$0xff] %v5207
    %5354 = vst [vmem:[#allocation8 + $0x48] sm:$0xff] %v5209
    %5355 = vst [vmem:[#allocation8 + $0x50] sm:$0xff] %v5211
    %5356 = vst [vmem:[#allocation8 + $0x58] sm:$0xff] %v5213
    %5357 = vst [vmem:[#allocation8 + $0x60] sm:$0xff] %v5217
    %5358 = vst [vmem:[#allocation8 + $0x68] sm:$0xff] %v5219
    %5359 = vst [vmem:[#allocation8 + $0x70] sm:$0xff] %v5221
    %5360 = vst [vmem:[#allocation8 + $0x78] sm:$0xff] %v5223
    %5361 = vst [vmem:[#allocation8 + $0x80] sm:$0xff] %v5227
    %5362 = vst [vmem:[#allocation8 + $0x88] sm:$0xff] %v5229
    %5363 = vst [vmem:[#allocation8 + $0x90] sm:$0xff] %v5231
    %5364 = vst [vmem:[#allocation8 + $0x98] sm:$0xff] %v5233
    %5365 = vst [vmem:[#allocation8 + $0xa0] sm:$0xff] %v5237
    %5366 = vst [vmem:[#allocation8 + $0xa8] sm:$0xff] %v5239
    %5367 = vst [vmem:[#allocation8 + $0xb0] sm:$0xff] %v5241
    %5368 = vst [vmem:[#allocation8 + $0xb8] sm:$0xff] %v5243
    %5369 = vst [vmem:[#allocation8 + $0xc0] sm:$0xff] %v5247
    %5370 = vst [vmem:[#allocation8 + $0xc8] sm:$0xff] %v5249
    %5371 = vst [vmem:[#allocation8 + $0xd0] sm:$0xff] %v5251
    %5372 = vst [vmem:[#allocation8 + $0xd8] sm:$0xff] %v5253
    %5373 = vst [vmem:[#allocation8 + $0xe0] sm:$0xff] %v5257
    %5374 = vst [vmem:[#allocation8 + $0xe8] sm:$0xff] %v5259
    %5375 = vst [vmem:[#allocation8 + $0xf0] sm:$0xff] %v5261
    %5376 = vst [vmem:[#allocation8 + $0xf8] sm:$0xff] %v5263
    %5377 = vst [vmem:[#allocation8 + $0x100] sm:$0xff] %v5267
    %5378 = vst [vmem:[#allocation8 + $0x108] sm:$0xff] %v5269
    %5379 = vst [vmem:[#allocation8 + $0x110] sm:$0xff] %v5271
    %5380 = vst [vmem:[#allocation8 + $0x118] sm:$0xff] %v5273
    %5381 = vst [vmem:[#allocation8 + $0x120] sm:$0xff] %v5277
    %5382 = vst [vmem:[#allocation8 + $0x128] sm:$0xff] %v5279
    %5383 = vst [vmem:[#allocation8 + $0x130] sm:$0xff] %v5281
    %5384 = vst [vmem:[#allocation8 + $0x138] sm:$0xff] %v5283
    %5385 = vst [vmem:[#allocation8 + $0x140] sm:$0xff] %v5287
    %5386 = vst [vmem:[#allocation8 + $0x148] sm:$0xff] %v5289
    %5387 = vst [vmem:[#allocation8 + $0x150] sm:$0xff] %v5291
    %5388 = vst [vmem:[#allocation8 + $0x158] sm:$0xff] %v5293
    %5389 = vst [vmem:[#allocation8 + $0x160] sm:$0xff] %v5297
    %5390 = vst [vmem:[#allocation8 + $0x168] sm:$0xff] %v5299
    %5391 = vst [vmem:[#allocation8 + $0x170] sm:$0xff] %v5301
    %5392 = vst [vmem:[#allocation8 + $0x178] sm:$0xff] %v5303
    %5393 = vst [vmem:[#allocation8 + $0x180] sm:$0xff] %v5307
    %5394 = vst [vmem:[#allocation8 + $0x188] sm:$0xff] %v5309
    %5395 = vst [vmem:[#allocation8 + $0x190] sm:$0xff] %v5311
    %5396 = vst [vmem:[#allocation8 + $0x198] sm:$0xff] %v5313
    %5397 = vst [vmem:[#allocation8 + $0x1a0] sm:$0xff] %v5317
    %5398 = vst [vmem:[#allocation8 + $0x1a8] sm:$0xff] %v5319
    %5399 = vst [vmem:[#allocation8 + $0x1b0] sm:$0xff] %v5321
    %5400 = vst [vmem:[#allocation8 + $0x1b8] sm:$0xff] %v5323
    %5401 = vst [vmem:[#allocation8 + $0x1c0] sm:$0xff] %v5327
    %5402 = vst [vmem:[#allocation8 + $0x1c8] sm:$0xff] %v5329
    %5403 = vst [vmem:[#allocation8 + $0x1d0] sm:$0xff] %v5331
    %5404 = vst [vmem:[#allocation8 + $0x1d8] sm:$0xff] %v5333
    %5405 = vst [vmem:[#allocation8 + $0x1e0] sm:$0xff] %v5337
    %5406 = vst [vmem:[#allocation8 + $0x1e8] sm:$0xff] %v5339
    %5407 = vst [vmem:[#allocation8 + $0x1f0] sm:$0xff] %v5341
    %5408 = vst [vmem:[#allocation8 + $0x1f8] sm:$0xff] %v5343
    // Predicated region
    $region26: #{tpu_custom_call.1} parent=1 // pred_check
      _
    $region27: #{tpu_custom_call.1} parent=1 // pred_check_branch
      %5410 = sbr.rel (0) target = $region29
    $region28: #{tpu_custom_call.1} parent=1 // pred_region
      %s5412 = ssub.s32 8192, 8192
      %5413 = vsyncadd [#allocation4], %s5412
      %s5414 = sshll.u32 [#allocation8], 4
      %s5415 = int_to_ptr.vmem [resolvable:$true] %s5414
      %5420 = dma.vmem_to_hbm [thread:$0]  %s5415, 8192, %s3, [#allocation4], 256, 256, 16
    $region29: #{tpu_custom_call.1} parent=1 // pred_fallthru
      _
    // Predicated region
    $region30: #{tpu_custom_call.1} parent=1 // pred_check
      _
    $region31: #{tpu_custom_call.1} parent=1 // pred_check_branch
      %5422 = sbr.rel (0) target = $region33
    $region32: #{tpu_custom_call.1} parent=1 // pred_region
      %5423 = dma.done [#allocation4], 8192
    $region33: #{tpu_custom_call.1} parent=1 // pred_fallthru
      _
    %5424 = vsyncpa [#allocation3], 1
    %5425 = vsyncpa [#allocation6], 1
    %5426 = vsyncpa [#allocation4], 1

</llo_original>
